<compile_context>
chip_gen: v6e
topology: v6e:2x2x1
jax: 0.10.0
libtpu: 0.0.40
codegen_flags: <defaults>
</compile_context>

<pallas_src>
import jax
import jax.numpy as jnp
from jax.experimental import pallas as pl
from jax.experimental.pallas import tpu as pltpu


def _round_up(x, m):
    return ((x + m - 1) // m) * m


def _make_kernel(n, tr, num_tiles):
    ragged = (num_tiles * tr) != n

    def kernel(flow_ref, out_ref, row_store, col_acc):
        i = pl.program_id(0)

        @pl.when(i == 0)
        def _init():
            col_acc[...] = jnp.zeros_like(col_acc)

        f = flow_ref[...].astype(jnp.float32)                    # (tr, n)

        if ragged:
            # Last tile overhangs the matrix: zero the undefined rows so both
            # sums stay exact (jnp.where avoids NaN/Inf propagation from
            # uninitialized buffer contents).
            row_ids = jax.lax.broadcasted_iota(jnp.int32, (tr, 1), 0) + i * tr
            f = jnp.where(row_ids < n, f, 0.0)

        # Lane-dense column partial sums: sublane reduce + pure VPU accumulate.
        col_acc[...] += jnp.sum(f, axis=0, keepdims=True)        # (1, n)
        # One lane-dense row of per-row sums per grid step.
        row_store[i, :] = jnp.sum(f, axis=1)                     # (tr,)

        @pl.when(i == pl.num_programs(0) - 1)
        def _finalize():
            # Vectorized epilogue: single reshape + lane-dense abs-diff reduce.
            rows = row_store[...].reshape(1, num_tiles * tr)     # (1, W)
            diff = rows[:, :n] - col_acc[...]                    # (1, n)
            out_ref[0] = jnp.sum(jnp.abs(diff))                  # scalar in SMEM

    return kernel


def mass_conservation_loss(flow, *, max_tile_mib=12.0):
    """flow: [N, N] array. Returns a scalar float32 loss."""
    assert flow.ndim == 2, "Mass_conservation_loss expects a 2-D flow matrix"
    n, m = flow.shape
    assert n == m, "Mass_conservation_loss expects a square flow matrix"

    itemsize = jnp.dtype(flow.dtype).itemsize
    sublane_min = max(8, 32 // itemsize)          # f32: 8, bf16: 16, int8/fp8: 32
    max_tile_bytes = int(max_tile_mib * 1024 * 1024)

    if n < 128:
        # Single block equal to the full array dims (always a legal tile shape).
        tr = n
    else:
        rows_budget = max(1, max_tile_bytes // (n * itemsize))
        tr = (rows_budget // 128) * 128           # lane-aligned, legal for all dtypes
        if tr == 0:
            # Very wide rows: fall back to the dtype sublane minimum.
            tr = max(sublane_min, (rows_budget // sublane_min) * sublane_min)
        tr = min(tr, _round_up(n, 128))
    num_tiles = (n + tr - 1) // tr

    tile_bytes = tr * _round_up(n, 128) * itemsize
    index_map = lambda i: (i, 0)
    spec_kwargs = {}
    if num_tiles >= 3 and tile_bytes <= (1 << 20):
        # Small tiles: per-step overhead / DMA issue latency becomes visible;
        # ask for a 3-deep input pipeline.
        spec_kwargs["pipeline_mode"] = pl.Buffered(3)
    try:
        in_spec = pl.BlockSpec((tr, n), index_map, **spec_kwargs)
    except TypeError:  # BlockSpec without pipeline_mode support
        in_spec = pl.BlockSpec((tr, n), index_map)

    kernel = _make_kernel(n, tr, num_tiles)

    out = pl.pallas_call(
        kernel,
        out_shape=jax.ShapeDtypeStruct((1,), jnp.float32),
        grid_spec=pltpu.PrefetchScalarGridSpec(
            num_scalar_prefetch=0,
            grid=(num_tiles,),
            in_specs=[in_spec],
            out_specs=pl.BlockSpec(memory_space=pltpu.MemorySpace.SMEM),
            scratch_shapes=[
                pltpu.VMEM((num_tiles, tr), jnp.float32),   # per-row sums
                pltpu.VMEM((1, n), jnp.float32),            # column-sum accumulator
            ],
        ),
        compiler_params=pltpu.CompilerParams(
            # Accumulators are carried across the (only) grid axis -> reduction axis.
            dimension_semantics=("arbitrary",),
            # Explicit scoped-VMEM limit: raises v5e's 16 MiB default for the
            # larger streaming tiles while staying inside v7x's 64 MiB physical.
            vmem_limit_bytes=40 * 1024 * 1024,
        ),
        cost_estimate=pl.CostEstimate(
            flops=2 * n * n + 3 * n,
            transcendentals=0,
            bytes_accessed=n * n * itemsize + 4,
        ),
    )(flow)
    return out[0]


def _reference(flow):
    f = flow.astype(jnp.float32)
    result = jnp.sum(f, axis=1) - jnp.sum(f, axis=0)
    return jnp.sum(jnp.abs(result))


if __name__ == "__main__":
    key = jax.random.PRNGKey(0)

    def check(flow, **kw):
        loss = mass_conservation_loss(flow, **kw)
        jax.block_until_ready(loss)
        ref = _reference(flow)
        assert jnp.allclose(loss, ref, rtol=1e-4, atol=1e-2), (flow.shape, kw, loss, ref)

    # Single large streaming tile (default VMEM budget).
    check(jax.random.normal(key, (512, 512), dtype=jnp.float32))
    # Forced multi-tile: exercises carried accumulators, the vectorized
    # finalize reshape and the deep (Buffered) input pipeline.
    check(jax.random.normal(jax.random.fold_in(key, 1), (512, 512), dtype=jnp.float32),
          max_tile_mib=0.25)
    # Non-divisible N: ragged, in-kernel-masked last tile (no wrapper pad copy).
    check(jax.random.normal(jax.random.fold_in(key, 2), (600, 600), dtype=jnp.float32),
          max_tile_mib=0.5)
    # Small matrices (single full-array block, like the original module's use).
    check(jax.random.normal(jax.random.fold_in(key, 3), (100, 100), dtype=jnp.float32))
    check(jax.random.normal(jax.random.fold_in(key, 4), (16, 16), dtype=jnp.float32))
    # bf16 input streamed natively (half HBM traffic), accumulated in f32.
    check(jax.random.normal(jax.random.fold_in(key, 5), (256, 256)).astype(jnp.bfloat16))

    print("KERNEL_OK")
</pallas_src>

<mosaic_0001>
module attributes {stable_mosaic.version = 11 : i64} {
  func.func @kernel(%arg0: i32, %arg1: memref<512x512xf32, #tpu.memory_space<vmem>>, %arg2: memref<1xf32, #tpu.memory_space<smem>>, %arg3: memref<1x512xf32, #tpu.memory_space<vmem>>, %arg4: memref<1x512xf32, #tpu.memory_space<vmem>>) attributes {dimension_semantics = [#tpu.dimension_semantics<arbitrary>], iteration_bounds = array<i64: 1>, scalar_prefetch = 0 : i64, scratch_operands = 2 : i64, tpu.core_type = #tpu.core_type<tc>, window_params = [{transform_indices = @transform_0, window_bounds = array<i64: 512, 512>}, {transform_indices = @transform_1, window_bounds = array<i64: 1>}]} {
    %c0_i32 = arith.constant 0 : i32
    %0 = arith.cmpi eq, %arg0, %c0_i32 : i32
    %1 = arith.extui %0 : i1 to i32
    %c0_i32_0 = arith.constant 0 : i32
    %2 = arith.cmpi ne, %1, %c0_i32_0 : i32
    scf.if %2 {
      %cst_10 = arith.constant 0.000000e+00 : f32
      %17 = vector.broadcast %cst_10 : f32 to vector<1x512xf32>
      %c0_11 = arith.constant 0 : index
      %c0_12 = arith.constant 0 : index
      %18 = vector.load %arg4[%c0_11, %c0_12] : memref<1x512xf32, #tpu.memory_space<vmem>>, vector<1x512xf32>
      tpu.vector_store %arg4[%c0_11, %c0_12], %17 {strides = array<i32>} : memref<1x512xf32, #tpu.memory_space<vmem>>, vector<1x512xf32>,
    } else {
    }
    %c0 = arith.constant 0 : index
    %c0_1 = arith.constant 0 : index
    %3 = vector.load %arg1[%c0, %c0_1] : memref<512x512xf32, #tpu.memory_space<vmem>>, vector<512x512xf32>
    %c0_2 = arith.constant 0 : index
    %c0_3 = arith.constant 0 : index
    %4 = vector.load %arg4[%c0_2, %c0_3] : memref<1x512xf32, #tpu.memory_space<vmem>>, vector<1x512xf32>
    %cst = arith.constant dense<0.000000e+00> : vector<512xf32>
    %5 = vector.multi_reduction <add>, %3, %cst [0] : vector<512x512xf32> to vector<512xf32>
    %6 = vector.shape_cast %5 : vector<512xf32> to vector<1x512xf32>
    %7 = arith.addf %4, %6 : vector<1x512xf32>
    %c0_4 = arith.constant 0 : index
    %c0_5 = arith.constant 0 : index
    %8 = vector.load %arg4[%c0_4, %c0_5] : memref<1x512xf32, #tpu.memory_space<vmem>>, vector<1x512xf32>
    tpu.vector_store %arg4[%c0_4, %c0_5], %7 {strides = array<i32>} : memref<1x512xf32, #tpu.memory_space<vmem>>, vector<1x512xf32>,
    %cst_6 = arith.constant dense<0.000000e+00> : vector<512xf32>
    %9 = vector.multi_reduction <add>, %3, %cst_6 [1] : vector<512x512xf32> to vector<512xf32>
    %10 = arith.index_cast %arg0 : i32 to index
    %c0_7 = arith.constant 0 : index
    %11 = vector.load %arg3[%10, %c0_7] : memref<1x512xf32, #tpu.memory_space<vmem>>, vector<1x512xf32>
    %12 = vector.shape_cast %11 : vector<1x512xf32> to vector<512xf32>
    %13 = vector.shape_cast %9 : vector<512xf32> to vector<1x512xf32>
    tpu.vector_store %arg3[%10, %c0_7], %13 {strides = array<i32>} : memref<1x512xf32, #tpu.memory_space<vmem>>, vector<1x512xf32>,
    %c0_i32_8 = arith.constant 0 : i32
    %14 = arith.cmpi eq, %arg0, %c0_i32_8 : i32
    %15 = arith.extui %14 : i1 to i32
    %c0_i32_9 = arith.constant 0 : i32
    %16 = arith.cmpi ne, %15, %c0_i32_9 : i32
    scf.if %16 {
      %c0_10 = arith.constant 0 : index
      %c0_11 = arith.constant 0 : index
      %17 = vector.load %arg3[%c0_10, %c0_11] : memref<1x512xf32, #tpu.memory_space<vmem>>, vector<1x512xf32>
      %c0_12 = arith.constant 0 : index
      %c0_13 = arith.constant 0 : index
      %18 = vector.load %arg4[%c0_12, %c0_13] : memref<1x512xf32, #tpu.memory_space<vmem>>, vector<1x512xf32>
      %19 = arith.subf %17, %18 : vector<1x512xf32>
      %20 = math.absf %19 : vector<1x512xf32>
      %21 = vector.shape_cast %20 : vector<1x512xf32> to vector<1x1x512xf32>
      %cst_14 = arith.constant dense<0.000000e+00> : vector<1xf32>
      %22 = vector.multi_reduction <add>, %21, %cst_14 [1, 2] : vector<1x1x512xf32> to vector<1xf32>
      %23 = vector.shape_cast %22 : vector<1xf32> to vector<1x1x1xf32>
      %24 = vector.extract %23[0, 0, 0] : f32 from vector<1x1x1xf32>
      %c0_15 = arith.constant 0 : index
      %25 = memref.load %arg2[%c0_15] : memref<1xf32, #tpu.memory_space<smem>>
      memref.store %24, %arg2[%c0_15] : memref<1xf32, #tpu.memory_space<smem>>
    } else {
    }
    return
  }
  func.func @transform_0(%arg0: i32) -> (i32, i32) {
    %c0_i32 = arith.constant 0 : i32
    %c0_i32_0 = arith.constant 0 : i32
    return %arg0, %c0_i32 : i32, i32
  }
  func.func @transform_1(%arg0: i32) -> i32 {
    %c0_i32 = arith.constant 0 : i32
    %c0_i32_0 = arith.constant 0 : i32
    return %c0_i32 : i32
  }
}

</mosaic_0001>

<llo_original>
// kernel: tpu_custom_call.1
$region0: #{tpu_custom_call.1}
  #allocation0 [shape = 'u32[]', space=smem, size = 0x4, offset = 0x4, fixed_abs, tag = 'smem constant byte address 0x4 - core index']
  #allocation1 [shape = 'u32[144,128]{1,0:T(1,128)}', space=vmem, size = 0x12000, scoped, tag = 'internal scratch']
  #allocation2 [shape = 'f32[1,512]{1,0:T(1,128)}', space=vmem, size = 0x800, scoped, tag = 'scratch operand']
  #allocation3 [shape = 'f32[1,512]{1,0:T(1,128)}', space=vmem, size = 0x800, scoped, tag = 'scratch operand']
  %s0 = inlined_call_operand.hbm [shape: f32[512,512], index: 0, kind: input, shape index: {}]
  %s1 = inlined_call_operand.hbm [shape: f32[1], index: 1, kind: output, shape index: {}]
  %s2 = sld [smem:[#allocation0]]
  $region26: #{tpu_custom_call.1} parent=0
    _
  %s4 = ssub.s32 1, %s2
  %s5 = scalar_select 0, %s4, %s2
  $region1: #{tpu_custom_call.1} parent=0
    #allocation4 [shape = 'u8[1048576]{0}', space=vmem, size = 0x100000, scoped, tag = 'input window, operand 0, single buffered']
    #allocation5 [shape = 's32[1]{0}', space=sflag, size = 0x4, scoped, tag = 'scoped memory for tpu_custom_call.1']
    #allocation6 [shape = 's32[1]{0}', space=sflag, size = 0x4, scoped, tag = 'scoped memory for tpu_custom_call.1']
    #allocation7 [shape = 'u8[512]{0}', space=smem, size = 0x200, scoped, tag = 'output window, operand 0, single buffered']
    %6 = vsyncpa [#allocation5], 0
    %7 = vsyncpa [#allocation6], 0
    // Predicated region
    $region2: #{tpu_custom_call.1} parent=1 // pred_check
      _
    $region3: #{tpu_custom_call.1} parent=1 // pred_check_branch
      %9 = sbr.rel (0) target = $region5
    $region4: #{tpu_custom_call.1} parent=1 // pred_region
      %s11 = ssub.s32 32768, 32768
      %12 = vsyncadd [#allocation5], %s11
      %s13 = sshll.u32 [#allocation4], 4
      %s14 = int_to_ptr.vmem [resolvable:$true] %s13
      %19 = dma.hbm_to_vmem [thread:$0]  %s0, 32768, %s14, [#allocation5], 512, 512, 32
    $region5: #{tpu_custom_call.1} parent=1 // pred_fallthru
      _
    // Predicated region
    $region6: #{tpu_custom_call.1} parent=1 // pred_check
      _
    $region7: #{tpu_custom_call.1} parent=1 // pred_check_branch
      %21 = sbr.rel (0) target = $region9
    $region8: #{tpu_custom_call.1} parent=1 // pred_region
      %22 = dma.done [#allocation5], 32768
    $region9: #{tpu_custom_call.1} parent=1 // pred_fallthru
      _
    %p23 = scmp.eq.s32.totalorder 0, 0
    // Predicated region
    $region10: #{tpu_custom_call.1} parent=1 // pred_check
      %p24 = pneg %p23
    $region11: #{tpu_custom_call.1} parent=1 // pred_check_branch
      %26 = sbr.rel (%p24) target = $region13
    $region12: #{tpu_custom_call.1} parent=1 // pred_region
      %v27 = vlaneseq
      %vm28 = vcmp.ge.s32.totalorder %v27, 0
      %vm29 = vcmp.lt.s32.totalorder %v27, 512
      %vm30 = vmand %vm28, %vm29
      %31 = vst.msk [vmem:[#allocation3] sm:$0xf] %vm30, 0.0
    $region13: #{tpu_custom_call.1} parent=1 // pred_fallthru
      _
    %v32 = vld [vmem:[#allocation4] sm:$0xff]
    %v33 = vld [vmem:[#allocation4 + $0x8] sm:$0xff]
    %v34 = vld [vmem:[#allocation4 + $0x10] sm:$0xff]
    %v35 = vld [vmem:[#allocation4 + $0x18] sm:$0xff]
    %v36 = vld [vmem:[#allocation4 + $0x20] sm:$0xff]
    %v37 = vld [vmem:[#allocation4 + $0x28] sm:$0xff]
    %v38 = vld [vmem:[#allocation4 + $0x30] sm:$0xff]
    %v39 = vld [vmem:[#allocation4 + $0x38] sm:$0xff]
    %v40 = vld [vmem:[#allocation4 + $0x40] sm:$0xff]
    %v41 = vld [vmem:[#allocation4 + $0x48] sm:$0xff]
    %v42 = vld [vmem:[#allocation4 + $0x50] sm:$0xff]
    %v43 = vld [vmem:[#allocation4 + $0x58] sm:$0xff]
    %v44 = vld [vmem:[#allocation4 + $0x60] sm:$0xff]
    %v45 = vld [vmem:[#allocation4 + $0x68] sm:$0xff]
    %v46 = vld [vmem:[#allocation4 + $0x70] sm:$0xff]
    %v47 = vld [vmem:[#allocation4 + $0x78] sm:$0xff]
    %v48 = vld [vmem:[#allocation4 + $0x80] sm:$0xff]
    %v49 = vld [vmem:[#allocation4 + $0x88] sm:$0xff]
    %v50 = vld [vmem:[#allocation4 + $0x90] sm:$0xff]
    %v51 = vld [vmem:[#allocation4 + $0x98] sm:$0xff]
    %v52 = vld [vmem:[#allocation4 + $0xa0] sm:$0xff]
    %v53 = vld [vmem:[#allocation4 + $0xa8] sm:$0xff]
    %v54 = vld [vmem:[#allocation4 + $0xb0] sm:$0xff]
    %v55 = vld [vmem:[#allocation4 + $0xb8] sm:$0xff]
    %v56 = vld [vmem:[#allocation4 + $0xc0] sm:$0xff]
    %v57 = vld [vmem:[#allocation4 + $0xc8] sm:$0xff]
    %v58 = vld [vmem:[#allocation4 + $0xd0] sm:$0xff]
    %v59 = vld [vmem:[#allocation4 + $0xd8] sm:$0xff]
    %v60 = vld [vmem:[#allocation4 + $0xe0] sm:$0xff]
    %v61 = vld [vmem:[#allocation4 + $0xe8] sm:$0xff]
    %v62 = vld [vmem:[#allocation4 + $0xf0] sm:$0xff]
    %v63 = vld [vmem:[#allocation4 + $0xf8] sm:$0xff]
    %v64 = vld [vmem:[#allocation4 + $0x100] sm:$0xff]
    %v65 = vld [vmem:[#allocation4 + $0x108] sm:$0xff]
    %v66 = vld [vmem:[#allocation4 + $0x110] sm:$0xff]
    %v67 = vld [vmem:[#allocation4 + $0x118] sm:$0xff]
    %v68 = vld [vmem:[#allocation4 + $0x120] sm:$0xff]
    %v69 = vld [vmem:[#allocation4 + $0x128] sm:$0xff]
    %v70 = vld [vmem:[#allocation4 + $0x130] sm:$0xff]
    %v71 = vld [vmem:[#allocation4 + $0x138] sm:$0xff]
    %v72 = vld [vmem:[#allocation4 + $0x140] sm:$0xff]
    %v73 = vld [vmem:[#allocation4 + $0x148] sm:$0xff]
    %v74 = vld [vmem:[#allocation4 + $0x150] sm:$0xff]
    %v75 = vld [vmem:[#allocation4 + $0x158] sm:$0xff]
    %v76 = vld [vmem:[#allocation4 + $0x160] sm:$0xff]
    %v77 = vld [vmem:[#allocation4 + $0x168] sm:$0xff]
    %v78 = vld [vmem:[#allocation4 + $0x170] sm:$0xff]
    %v79 = vld [vmem:[#allocation4 + $0x178] sm:$0xff]
    %v80 = vld [vmem:[#allocation4 + $0x180] sm:$0xff]
    %v81 = vld [vmem:[#allocation4 + $0x188] sm:$0xff]
    %v82 = vld [vmem:[#allocation4 + $0x190] sm:$0xff]
    %v83 = vld [vmem:[#allocation4 + $0x198] sm:$0xff]
    %v84 = vld [vmem:[#allocation4 + $0x1a0] sm:$0xff]
    %v85 = vld [vmem:[#allocation4 + $0x1a8] sm:$0xff]
    %v86 = vld [vmem:[#allocation4 + $0x1b0] sm:$0xff]
    %v87 = vld [vmem:[#allocation4 + $0x1b8] sm:$0xff]
    %v88 = vld [vmem:[#allocation4 + $0x1c0] sm:$0xff]
    %v89 = vld [vmem:[#allocation4 + $0x1c8] sm:$0xff]
    %v90 = vld [vmem:[#allocation4 + $0x1d0] sm:$0xff]
    %v91 = vld [vmem:[#allocation4 + $0x1d8] sm:$0xff]
    %v92 = vld [vmem:[#allocation4 + $0x1e0] sm:$0xff]
    %v93 = vld [vmem:[#allocation4 + $0x1e8] sm:$0xff]
    %v94 = vld [vmem:[#allocation4 + $0x1f0] sm:$0xff]
    %v95 = vld [vmem:[#allocation4 + $0x1f8] sm:$0xff]
    %v96 = vld [vmem:[#allocation4 + $0x200] sm:$0xff]
    %v97 = vld [vmem:[#allocation4 + $0x208] sm:$0xff]
    %v98 = vld [vmem:[#allocation4 + $0x210] sm:$0xff]
    %v99 = vld [vmem:[#allocation4 + $0x218] sm:$0xff]
    %v100 = vld [vmem:[#allocation4 + $0x220] sm:$0xff]
    %v101 = vld [vmem:[#allocation4 + $0x228] sm:$0xff]
    %v102 = vld [vmem:[#allocation4 + $0x230] sm:$0xff]
    %v103 = vld [vmem:[#allocation4 + $0x238] sm:$0xff]
    %v104 = vld [vmem:[#allocation4 + $0x240] sm:$0xff]
    %v105 = vld [vmem:[#allocation4 + $0x248] sm:$0xff]
    %v106 = vld [vmem:[#allocation4 + $0x250] sm:$0xff]
    %v107 = vld [vmem:[#allocation4 + $0x258] sm:$0xff]
    %v108 = vld [vmem:[#allocation4 + $0x260] sm:$0xff]
    %v109 = vld [vmem:[#allocation4 + $0x268] sm:$0xff]
    %v110 = vld [vmem:[#allocation4 + $0x270] sm:$0xff]
    %v111 = vld [vmem:[#allocation4 + $0x278] sm:$0xff]
    %v112 = vld [vmem:[#allocation4 + $0x280] sm:$0xff]
    %v113 = vld [vmem:[#allocation4 + $0x288] sm:$0xff]
    %v114 = vld [vmem:[#allocation4 + $0x290] sm:$0xff]
    %v115 = vld [vmem:[#allocation4 + $0x298] sm:$0xff]
    %v116 = vld [vmem:[#allocation4 + $0x2a0] sm:$0xff]
    %v117 = vld [vmem:[#allocation4 + $0x2a8] sm:$0xff]
    %v118 = vld [vmem:[#allocation4 + $0x2b0] sm:$0xff]
    %v119 = vld [vmem:[#allocation4 + $0x2b8] sm:$0xff]
    %v120 = vld [vmem:[#allocation4 + $0x2c0] sm:$0xff]
    %v121 = vld [vmem:[#allocation4 + $0x2c8] sm:$0xff]
    %v122 = vld [vmem:[#allocation4 + $0x2d0] sm:$0xff]
    %v123 = vld [vmem:[#allocation4 + $0x2d8] sm:$0xff]
    %v124 = vld [vmem:[#allocation4 + $0x2e0] sm:$0xff]
    %v125 = vld [vmem:[#allocation4 + $0x2e8] sm:$0xff]
    %v126 = vld [vmem:[#allocation4 + $0x2f0] sm:$0xff]
    %v127 = vld [vmem:[#allocation4 + $0x2f8] sm:$0xff]
    %v128 = vld [vmem:[#allocation4 + $0x300] sm:$0xff]
    %v129 = vld [vmem:[#allocation4 + $0x308] sm:$0xff]
    %v130 = vld [vmem:[#allocation4 + $0x310] sm:$0xff]
    %v131 = vld [vmem:[#allocation4 + $0x318] sm:$0xff]
    %v132 = vld [vmem:[#allocation4 + $0x320] sm:$0xff]
    %v133 = vld [vmem:[#allocation4 + $0x328] sm:$0xff]
    %v134 = vld [vmem:[#allocation4 + $0x330] sm:$0xff]
    %v135 = vld [vmem:[#allocation4 + $0x338] sm:$0xff]
    %v136 = vld [vmem:[#allocation4 + $0x340] sm:$0xff]
    %v137 = vld [vmem:[#allocation4 + $0x348] sm:$0xff]
    %v138 = vld [vmem:[#allocation4 + $0x350] sm:$0xff]
    %v139 = vld [vmem:[#allocation4 + $0x358] sm:$0xff]
    %v140 = vld [vmem:[#allocation4 + $0x360] sm:$0xff]
    %v141 = vld [vmem:[#allocation4 + $0x368] sm:$0xff]
    %v142 = vld [vmem:[#allocation4 + $0x370] sm:$0xff]
    %v143 = vld [vmem:[#allocation4 + $0x378] sm:$0xff]
    %v144 = vld [vmem:[#allocation4 + $0x380] sm:$0xff]
    %v145 = vld [vmem:[#allocation4 + $0x388] sm:$0xff]
    %v146 = vld [vmem:[#allocation4 + $0x390] sm:$0xff]
    %v147 = vld [vmem:[#allocation4 + $0x398] sm:$0xff]
    %v148 = vld [vmem:[#allocation4 + $0x3a0] sm:$0xff]
    %v149 = vld [vmem:[#allocation4 + $0x3a8] sm:$0xff]
    %v150 = vld [vmem:[#allocation4 + $0x3b0] sm:$0xff]
    %v151 = vld [vmem:[#allocation4 + $0x3b8] sm:$0xff]
    %v152 = vld [vmem:[#allocation4 + $0x3c0] sm:$0xff]
    %v153 = vld [vmem:[#allocation4 + $0x3c8] sm:$0xff]
    %v154 = vld [vmem:[#allocation4 + $0x3d0] sm:$0xff]
    %v155 = vld [vmem:[#allocation4 + $0x3d8] sm:$0xff]
    %v156 = vld [vmem:[#allocation4 + $0x3e0] sm:$0xff]
    %v157 = vld [vmem:[#allocation4 + $0x3e8] sm:$0xff]
    %v158 = vld [vmem:[#allocation4 + $0x3f0] sm:$0xff]
    %v159 = vld [vmem:[#allocation4 + $0x3f8] sm:$0xff]
    %v160 = vld [vmem:[#allocation4 + $0x400] sm:$0xff]
    %v161 = vld [vmem:[#allocation4 + $0x408] sm:$0xff]
    %v162 = vld [vmem:[#allocation4 + $0x410] sm:$0xff]
    %v163 = vld [vmem:[#allocation4 + $0x418] sm:$0xff]
    %v164 = vld [vmem:[#allocation4 + $0x420] sm:$0xff]
    %v165 = vld [vmem:[#allocation4 + $0x428] sm:$0xff]
    %v166 = vld [vmem:[#allocation4 + $0x430] sm:$0xff]
    %v167 = vld [vmem:[#allocation4 + $0x438] sm:$0xff]
    %v168 = vld [vmem:[#allocation4 + $0x440] sm:$0xff]
    %v169 = vld [vmem:[#allocation4 + $0x448] sm:$0xff]
    %v170 = vld [vmem:[#allocation4 + $0x450] sm:$0xff]
    %v171 = vld [vmem:[#allocation4 + $0x458] sm:$0xff]
    %v172 = vld [vmem:[#allocation4 + $0x460] sm:$0xff]
    %v173 = vld [vmem:[#allocation4 + $0x468] sm:$0xff]
    %v174 = vld [vmem:[#allocation4 + $0x470] sm:$0xff]
    %v175 = vld [vmem:[#allocation4 + $0x478] sm:$0xff]
    %v176 = vld [vmem:[#allocation4 + $0x480] sm:$0xff]
    %v177 = vld [vmem:[#allocation4 + $0x488] sm:$0xff]
    %v178 = vld [vmem:[#allocation4 + $0x490] sm:$0xff]
    %v179 = vld [vmem:[#allocation4 + $0x498] sm:$0xff]
    %v180 = vld [vmem:[#allocation4 + $0x4a0] sm:$0xff]
    %v181 = vld [vmem:[#allocation4 + $0x4a8] sm:$0xff]
    %v182 = vld [vmem:[#allocation4 + $0x4b0] sm:$0xff]
    %v183 = vld [vmem:[#allocation4 + $0x4b8] sm:$0xff]
    %v184 = vld [vmem:[#allocation4 + $0x4c0] sm:$0xff]
    %v185 = vld [vmem:[#allocation4 + $0x4c8] sm:$0xff]
    %v186 = vld [vmem:[#allocation4 + $0x4d0] sm:$0xff]
    %v187 = vld [vmem:[#allocation4 + $0x4d8] sm:$0xff]
    %v188 = vld [vmem:[#allocation4 + $0x4e0] sm:$0xff]
    %v189 = vld [vmem:[#allocation4 + $0x4e8] sm:$0xff]
    %v190 = vld [vmem:[#allocation4 + $0x4f0] sm:$0xff]
    %v191 = vld [vmem:[#allocation4 + $0x4f8] sm:$0xff]
    %v192 = vld [vmem:[#allocation4 + $0x500] sm:$0xff]
    %v193 = vld [vmem:[#allocation4 + $0x508] sm:$0xff]
    %v194 = vld [vmem:[#allocation4 + $0x510] sm:$0xff]
    %v195 = vld [vmem:[#allocation4 + $0x518] sm:$0xff]
    %v196 = vld [vmem:[#allocation4 + $0x520] sm:$0xff]
    %v197 = vld [vmem:[#allocation4 + $0x528] sm:$0xff]
    %v198 = vld [vmem:[#allocation4 + $0x530] sm:$0xff]
    %v199 = vld [vmem:[#allocation4 + $0x538] sm:$0xff]
    %v200 = vld [vmem:[#allocation4 + $0x540] sm:$0xff]
    %v201 = vld [vmem:[#allocation4 + $0x548] sm:$0xff]
    %v202 = vld [vmem:[#allocation4 + $0x550] sm:$0xff]
    %v203 = vld [vmem:[#allocation4 + $0x558] sm:$0xff]
    %v204 = vld [vmem:[#allocation4 + $0x560] sm:$0xff]
    %v205 = vld [vmem:[#allocation4 + $0x568] sm:$0xff]
    %v206 = vld [vmem:[#allocation4 + $0x570] sm:$0xff]
    %v207 = vld [vmem:[#allocation4 + $0x578] sm:$0xff]
    %v208 = vld [vmem:[#allocation4 + $0x580] sm:$0xff]
    %v209 = vld [vmem:[#allocation4 + $0x588] sm:$0xff]
    %v210 = vld [vmem:[#allocation4 + $0x590] sm:$0xff]
    %v211 = vld [vmem:[#allocation4 + $0x598] sm:$0xff]
    %v212 = vld [vmem:[#allocation4 + $0x5a0] sm:$0xff]
    %v213 = vld [vmem:[#allocation4 + $0x5a8] sm:$0xff]
    %v214 = vld [vmem:[#allocation4 + $0x5b0] sm:$0xff]
    %v215 = vld [vmem:[#allocation4 + $0x5b8] sm:$0xff]
    %v216 = vld [vmem:[#allocation4 + $0x5c0] sm:$0xff]
    %v217 = vld [vmem:[#allocation4 + $0x5c8] sm:$0xff]
    %v218 = vld [vmem:[#allocation4 + $0x5d0] sm:$0xff]
    %v219 = vld [vmem:[#allocation4 + $0x5d8] sm:$0xff]
    %v220 = vld [vmem:[#allocation4 + $0x5e0] sm:$0xff]
    %v221 = vld [vmem:[#allocation4 + $0x5e8] sm:$0xff]
    %v222 = vld [vmem:[#allocation4 + $0x5f0] sm:$0xff]
    %v223 = vld [vmem:[#allocation4 + $0x5f8] sm:$0xff]
    %v224 = vld [vmem:[#allocation4 + $0x600] sm:$0xff]
    %v225 = vld [vmem:[#allocation4 + $0x608] sm:$0xff]
    %v226 = vld [vmem:[#allocation4 + $0x610] sm:$0xff]
    %v227 = vld [vmem:[#allocation4 + $0x618] sm:$0xff]
    %v228 = vld [vmem:[#allocation4 + $0x620] sm:$0xff]
    %v229 = vld [vmem:[#allocation4 + $0x628] sm:$0xff]
    %v230 = vld [vmem:[#allocation4 + $0x630] sm:$0xff]
    %v231 = vld [vmem:[#allocation4 + $0x638] sm:$0xff]
    %v232 = vld [vmem:[#allocation4 + $0x640] sm:$0xff]
    %v233 = vld [vmem:[#allocation4 + $0x648] sm:$0xff]
    %v234 = vld [vmem:[#allocation4 + $0x650] sm:$0xff]
    %v235 = vld [vmem:[#allocation4 + $0x658] sm:$0xff]
    %v236 = vld [vmem:[#allocation4 + $0x660] sm:$0xff]
    %v237 = vld [vmem:[#allocation4 + $0x668] sm:$0xff]
    %v238 = vld [vmem:[#allocation4 + $0x670] sm:$0xff]
    %v239 = vld [vmem:[#allocation4 + $0x678] sm:$0xff]
    %v240 = vld [vmem:[#allocation4 + $0x680] sm:$0xff]
    %v241 = vld [vmem:[#allocation4 + $0x688] sm:$0xff]
    %v242 = vld [vmem:[#allocation4 + $0x690] sm:$0xff]
    %v243 = vld [vmem:[#allocation4 + $0x698] sm:$0xff]
    %v244 = vld [vmem:[#allocation4 + $0x6a0] sm:$0xff]
    %v245 = vld [vmem:[#allocation4 + $0x6a8] sm:$0xff]
    %v246 = vld [vmem:[#allocation4 + $0x6b0] sm:$0xff]
    %v247 = vld [vmem:[#allocation4 + $0x6b8] sm:$0xff]
    %v248 = vld [vmem:[#allocation4 + $0x6c0] sm:$0xff]
    %v249 = vld [vmem:[#allocation4 + $0x6c8] sm:$0xff]
    %v250 = vld [vmem:[#allocation4 + $0x6d0] sm:$0xff]
    %v251 = vld [vmem:[#allocation4 + $0x6d8] sm:$0xff]
    %v252 = vld [vmem:[#allocation4 + $0x6e0] sm:$0xff]
    %v253 = vld [vmem:[#allocation4 + $0x6e8] sm:$0xff]
    %v254 = vld [vmem:[#allocation4 + $0x6f0] sm:$0xff]
    %v255 = vld [vmem:[#allocation4 + $0x6f8] sm:$0xff]
    %v256 = vld [vmem:[#allocation4 + $0x700] sm:$0xff]
    %v257 = vld [vmem:[#allocation4 + $0x708] sm:$0xff]
    %v258 = vld [vmem:[#allocation4 + $0x710] sm:$0xff]
    %v259 = vld [vmem:[#allocation4 + $0x718] sm:$0xff]
    %v260 = vld [vmem:[#allocation4 + $0x720] sm:$0xff]
    %v261 = vld [vmem:[#allocation4 + $0x728] sm:$0xff]
    %v262 = vld [vmem:[#allocation4 + $0x730] sm:$0xff]
    %v263 = vld [vmem:[#allocation4 + $0x738] sm:$0xff]
    %v264 = vld [vmem:[#allocation4 + $0x740] sm:$0xff]
    %v265 = vld [vmem:[#allocation4 + $0x748] sm:$0xff]
    %v266 = vld [vmem:[#allocation4 + $0x750] sm:$0xff]
    %v267 = vld [vmem:[#allocation4 + $0x758] sm:$0xff]
    %v268 = vld [vmem:[#allocation4 + $0x760] sm:$0xff]
    %v269 = vld [vmem:[#allocation4 + $0x768] sm:$0xff]
    %v270 = vld [vmem:[#allocation4 + $0x770] sm:$0xff]
    %v271 = vld [vmem:[#allocation4 + $0x778] sm:$0xff]
    %v272 = vld [vmem:[#allocation4 + $0x780] sm:$0xff]
    %v273 = vld [vmem:[#allocation4 + $0x788] sm:$0xff]
    %v274 = vld [vmem:[#allocation4 + $0x790] sm:$0xff]
    %v275 = vld [vmem:[#allocation4 + $0x798] sm:$0xff]
    %v276 = vld [vmem:[#allocation4 + $0x7a0] sm:$0xff]
    %v277 = vld [vmem:[#allocation4 + $0x7a8] sm:$0xff]
    %v278 = vld [vmem:[#allocation4 + $0x7b0] sm:$0xff]
    %v279 = vld [vmem:[#allocation4 + $0x7b8] sm:$0xff]
    %v280 = vld [vmem:[#allocation4 + $0x7c0] sm:$0xff]
    %v281 = vld [vmem:[#allocation4 + $0x7c8] sm:$0xff]
    %v282 = vld [vmem:[#allocation4 + $0x7d0] sm:$0xff]
    %v283 = vld [vmem:[#allocation4 + $0x7d8] sm:$0xff]
    %v284 = vld [vmem:[#allocation4 + $0x7e0] sm:$0xff]
    %v285 = vld [vmem:[#allocation4 + $0x7e8] sm:$0xff]
    %v286 = vld [vmem:[#allocation4 + $0x7f0] sm:$0xff]
    %v287 = vld [vmem:[#allocation4 + $0x7f8] sm:$0xff]
    %v288 = vld [vmem:[#allocation3] sm:$0xf]
    %v289 = vadd.f32 %v32, %v36
    %v290 = vadd.f32 %v289, %v40
    %v291 = vadd.f32 %v290, %v44
    %v292 = vadd.f32 %v291, %v48
    %v293 = vadd.f32 %v292, %v52
    %v294 = vadd.f32 %v293, %v56
    %v295 = vadd.f32 %v294, %v60
    %v296 = vadd.f32 %v295, %v64
    %v297 = vadd.f32 %v296, %v68
    %v298 = vadd.f32 %v297, %v72
    %v299 = vadd.f32 %v298, %v76
    %v300 = vadd.f32 %v299, %v80
    %v301 = vadd.f32 %v300, %v84
    %v302 = vadd.f32 %v301, %v88
    %v303 = vadd.f32 %v302, %v92
    %v304 = vadd.f32 %v303, %v96
    %v305 = vadd.f32 %v304, %v100
    %v306 = vadd.f32 %v305, %v104
    %v307 = vadd.f32 %v306, %v108
    %v308 = vadd.f32 %v307, %v112
    %v309 = vadd.f32 %v308, %v116
    %v310 = vadd.f32 %v309, %v120
    %v311 = vadd.f32 %v310, %v124
    %v312 = vadd.f32 %v311, %v128
    %v313 = vadd.f32 %v312, %v132
    %v314 = vadd.f32 %v313, %v136
    %v315 = vadd.f32 %v314, %v140
    %v316 = vadd.f32 %v315, %v144
    %v317 = vadd.f32 %v316, %v148
    %v318 = vadd.f32 %v317, %v152
    %v319 = vadd.f32 %v318, %v156
    %v320 = vadd.f32 %v319, %v160
    %v321 = vadd.f32 %v320, %v164
    %v322 = vadd.f32 %v321, %v168
    %v323 = vadd.f32 %v322, %v172
    %v324 = vadd.f32 %v323, %v176
    %v325 = vadd.f32 %v324, %v180
    %v326 = vadd.f32 %v325, %v184
    %v327 = vadd.f32 %v326, %v188
    %v328 = vadd.f32 %v327, %v192
    %v329 = vadd.f32 %v328, %v196
    %v330 = vadd.f32 %v329, %v200
    %v331 = vadd.f32 %v330, %v204
    %v332 = vadd.f32 %v331, %v208
    %v333 = vadd.f32 %v332, %v212
    %v334 = vadd.f32 %v333, %v216
    %v335 = vadd.f32 %v334, %v220
    %v336 = vadd.f32 %v335, %v224
    %v337 = vadd.f32 %v336, %v228
    %v338 = vadd.f32 %v337, %v232
    %v339 = vadd.f32 %v338, %v236
    %v340 = vadd.f32 %v339, %v240
    %v341 = vadd.f32 %v340, %v244
    %v342 = vadd.f32 %v341, %v248
    %v343 = vadd.f32 %v342, %v252
    %v344 = vadd.f32 %v343, %v256
    %v345 = vadd.f32 %v344, %v260
    %v346 = vadd.f32 %v345, %v264
    %v347 = vadd.f32 %v346, %v268
    %v348 = vadd.f32 %v347, %v272
    %v349 = vadd.f32 %v348, %v276
    %v350 = vadd.f32 %v349, %v280
    %v351 = vadd.f32 %v350, %v284
    %v352 = vrot.slane %v351, 4
    %v353 = vadd.f32 %v351, %v352
    %v354 = vrot.slane %v353, 2
    %v355 = vadd.f32 %v353, %v354
    %v356 = vrot.slane %v355, 1
    %v357 = vadd.f32 %v355, %v356
    %v358 = vadd.f32 %v33, %v37
    %v359 = vadd.f32 %v358, %v41
    %v360 = vadd.f32 %v359, %v45
    %v361 = vadd.f32 %v360, %v49
    %v362 = vadd.f32 %v361, %v53
    %v363 = vadd.f32 %v362, %v57
    %v364 = vadd.f32 %v363, %v61
    %v365 = vadd.f32 %v364, %v65
    %v366 = vadd.f32 %v365, %v69
    %v367 = vadd.f32 %v366, %v73
    %v368 = vadd.f32 %v367, %v77
    %v369 = vadd.f32 %v368, %v81
    %v370 = vadd.f32 %v369, %v85
    %v371 = vadd.f32 %v370, %v89
    %v372 = vadd.f32 %v371, %v93
    %v373 = vadd.f32 %v372, %v97
    %v374 = vadd.f32 %v373, %v101
    %v375 = vadd.f32 %v374, %v105
    %v376 = vadd.f32 %v375, %v109
    %v377 = vadd.f32 %v376, %v113
    %v378 = vadd.f32 %v377, %v117
    %v379 = vadd.f32 %v378, %v121
    %v380 = vadd.f32 %v379, %v125
    %v381 = vadd.f32 %v380, %v129
    %v382 = vadd.f32 %v381, %v133
    %v383 = vadd.f32 %v382, %v137
    %v384 = vadd.f32 %v383, %v141
    %v385 = vadd.f32 %v384, %v145
    %v386 = vadd.f32 %v385, %v149
    %v387 = vadd.f32 %v386, %v153
    %v388 = vadd.f32 %v387, %v157
    %v389 = vadd.f32 %v388, %v161
    %v390 = vadd.f32 %v389, %v165
    %v391 = vadd.f32 %v390, %v169
    %v392 = vadd.f32 %v391, %v173
    %v393 = vadd.f32 %v392, %v177
    %v394 = vadd.f32 %v393, %v181
    %v395 = vadd.f32 %v394, %v185
    %v396 = vadd.f32 %v395, %v189
    %v397 = vadd.f32 %v396, %v193
    %v398 = vadd.f32 %v397, %v197
    %v399 = vadd.f32 %v398, %v201
    %v400 = vadd.f32 %v399, %v205
    %v401 = vadd.f32 %v400, %v209
    %v402 = vadd.f32 %v401, %v213
    %v403 = vadd.f32 %v402, %v217
    %v404 = vadd.f32 %v403, %v221
    %v405 = vadd.f32 %v404, %v225
    %v406 = vadd.f32 %v405, %v229
    %v407 = vadd.f32 %v406, %v233
    %v408 = vadd.f32 %v407, %v237
    %v409 = vadd.f32 %v408, %v241
    %v410 = vadd.f32 %v409, %v245
    %v411 = vadd.f32 %v410, %v249
    %v412 = vadd.f32 %v411, %v253
    %v413 = vadd.f32 %v412, %v257
    %v414 = vadd.f32 %v413, %v261
    %v415 = vadd.f32 %v414, %v265
    %v416 = vadd.f32 %v415, %v269
    %v417 = vadd.f32 %v416, %v273
    %v418 = vadd.f32 %v417, %v277
    %v419 = vadd.f32 %v418, %v281
    %v420 = vadd.f32 %v419, %v285
    %v421 = vrot.slane %v420, 4
    %v422 = vadd.f32 %v420, %v421
    %v423 = vrot.slane %v422, 2
    %v424 = vadd.f32 %v422, %v423
    %v425 = vrot.slane %v424, 1
    %v426 = vadd.f32 %v424, %v425
    %v427 = vadd.f32 %v34, %v38
    %v428 = vadd.f32 %v427, %v42
    %v429 = vadd.f32 %v428, %v46
    %v430 = vadd.f32 %v429, %v50
    %v431 = vadd.f32 %v430, %v54
    %v432 = vadd.f32 %v431, %v58
    %v433 = vadd.f32 %v432, %v62
    %v434 = vadd.f32 %v433, %v66
    %v435 = vadd.f32 %v434, %v70
    %v436 = vadd.f32 %v435, %v74
    %v437 = vadd.f32 %v436, %v78
    %v438 = vadd.f32 %v437, %v82
    %v439 = vadd.f32 %v438, %v86
    %v440 = vadd.f32 %v439, %v90
    %v441 = vadd.f32 %v440, %v94
    %v442 = vadd.f32 %v441, %v98
    %v443 = vadd.f32 %v442, %v102
    %v444 = vadd.f32 %v443, %v106
    %v445 = vadd.f32 %v444, %v110
    %v446 = vadd.f32 %v445, %v114
    %v447 = vadd.f32 %v446, %v118
    %v448 = vadd.f32 %v447, %v122
    %v449 = vadd.f32 %v448, %v126
    %v450 = vadd.f32 %v449, %v130
    %v451 = vadd.f32 %v450, %v134
    %v452 = vadd.f32 %v451, %v138
    %v453 = vadd.f32 %v452, %v142
    %v454 = vadd.f32 %v453, %v146
    %v455 = vadd.f32 %v454, %v150
    %v456 = vadd.f32 %v455, %v154
    %v457 = vadd.f32 %v456, %v158
    %v458 = vadd.f32 %v457, %v162
    %v459 = vadd.f32 %v458, %v166
    %v460 = vadd.f32 %v459, %v170
    %v461 = vadd.f32 %v460, %v174
    %v462 = vadd.f32 %v461, %v178
    %v463 = vadd.f32 %v462, %v182
    %v464 = vadd.f32 %v463, %v186
    %v465 = vadd.f32 %v464, %v190
    %v466 = vadd.f32 %v465, %v194
    %v467 = vadd.f32 %v466, %v198
    %v468 = vadd.f32 %v467, %v202
    %v469 = vadd.f32 %v468, %v206
    %v470 = vadd.f32 %v469, %v210
    %v471 = vadd.f32 %v470, %v214
    %v472 = vadd.f32 %v471, %v218
    %v473 = vadd.f32 %v472, %v222
    %v474 = vadd.f32 %v473, %v226
    %v475 = vadd.f32 %v474, %v230
    %v476 = vadd.f32 %v475, %v234
    %v477 = vadd.f32 %v476, %v238
    %v478 = vadd.f32 %v477, %v242
    %v479 = vadd.f32 %v478, %v246
    %v480 = vadd.f32 %v479, %v250
    %v481 = vadd.f32 %v480, %v254
    %v482 = vadd.f32 %v481, %v258
    %v483 = vadd.f32 %v482, %v262
    %v484 = vadd.f32 %v483, %v266
    %v485 = vadd.f32 %v484, %v270
    %v486 = vadd.f32 %v485, %v274
    %v487 = vadd.f32 %v486, %v278
    %v488 = vadd.f32 %v487, %v282
    %v489 = vadd.f32 %v488, %v286
    %v490 = vrot.slane %v489, 4
    %v491 = vadd.f32 %v489, %v490
    %v492 = vrot.slane %v491, 2
    %v493 = vadd.f32 %v491, %v492
    %v494 = vrot.slane %v493, 1
    %v495 = vadd.f32 %v493, %v494
    %v496 = vadd.f32 %v35, %v39
    %v497 = vadd.f32 %v496, %v43
    %v498 = vadd.f32 %v497, %v47
    %v499 = vadd.f32 %v498, %v51
    %v500 = vadd.f32 %v499, %v55
    %v501 = vadd.f32 %v500, %v59
    %v502 = vadd.f32 %v501, %v63
    %v503 = vadd.f32 %v502, %v67
    %v504 = vadd.f32 %v503, %v71
    %v505 = vadd.f32 %v504, %v75
    %v506 = vadd.f32 %v505, %v79
    %v507 = vadd.f32 %v506, %v83
    %v508 = vadd.f32 %v507, %v87
    %v509 = vadd.f32 %v508, %v91
    %v510 = vadd.f32 %v509, %v95
    %v511 = vadd.f32 %v510, %v99
    %v512 = vadd.f32 %v511, %v103
    %v513 = vadd.f32 %v512, %v107
    %v514 = vadd.f32 %v513, %v111
    %v515 = vadd.f32 %v514, %v115
    %v516 = vadd.f32 %v515, %v119
    %v517 = vadd.f32 %v516, %v123
    %v518 = vadd.f32 %v517, %v127
    %v519 = vadd.f32 %v518, %v131
    %v520 = vadd.f32 %v519, %v135
    %v521 = vadd.f32 %v520, %v139
    %v522 = vadd.f32 %v521, %v143
    %v523 = vadd.f32 %v522, %v147
    %v524 = vadd.f32 %v523, %v151
    %v525 = vadd.f32 %v524, %v155
    %v526 = vadd.f32 %v525, %v159
    %v527 = vadd.f32 %v526, %v163
    %v528 = vadd.f32 %v527, %v167
    %v529 = vadd.f32 %v528, %v171
    %v530 = vadd.f32 %v529, %v175
    %v531 = vadd.f32 %v530, %v179
    %v532 = vadd.f32 %v531, %v183
    %v533 = vadd.f32 %v532, %v187
    %v534 = vadd.f32 %v533, %v191
    %v535 = vadd.f32 %v534, %v195
    %v536 = vadd.f32 %v535, %v199
    %v537 = vadd.f32 %v536, %v203
    %v538 = vadd.f32 %v537, %v207
    %v539 = vadd.f32 %v538, %v211
    %v540 = vadd.f32 %v539, %v215
    %v541 = vadd.f32 %v540, %v219
    %v542 = vadd.f32 %v541, %v223
    %v543 = vadd.f32 %v542, %v227
    %v544 = vadd.f32 %v543, %v231
    %v545 = vadd.f32 %v544, %v235
    %v546 = vadd.f32 %v545, %v239
    %v547 = vadd.f32 %v546, %v243
    %v548 = vadd.f32 %v547, %v247
    %v549 = vadd.f32 %v548, %v251
    %v550 = vadd.f32 %v549, %v255
    %v551 = vadd.f32 %v550, %v259
    %v552 = vadd.f32 %v551, %v263
    %v553 = vadd.f32 %v552, %v267
    %v554 = vadd.f32 %v553, %v271
    %v555 = vadd.f32 %v554, %v275
    %v556 = vadd.f32 %v555, %v279
    %v557 = vadd.f32 %v556, %v283
    %v558 = vadd.f32 %v557, %v287
    %v559 = vrot.slane %v558, 4
    %v560 = vadd.f32 %v558, %v559
    %v561 = vrot.slane %v560, 2
    %v562 = vadd.f32 %v560, %v561
    %v563 = vrot.slane %v562, 1
    %v564 = vadd.f32 %v562, %v563
    %v569 = vcombine.low %v357, %v426
    %v570 = vcombine.low %v495, %v564
    %v572 = vunpack.c.l.s4 1966171168
    %v573 = vunpack.c.0.s8 %v572
    %v574 = vlaneseq
    %v575 = vshrl.u32 %v574, 7
    %v576 = vsub.s32 %v573, %v575
    %v577 = vrot.slane %v569, %v576
    %v579 = vunpack.c.l.s4 1966171168
    %v580 = vunpack.c.0.s8 %v579
    %v581 = vlaneseq
    %v582 = vshrl.u32 %v581, 7
    %v583 = vsub.s32 %v580, %v582
    %v584 = vrot.slane %v570, %v583
    %v585 = vcombine.low %v577, %v584
    %v587 = vunpack.c.l.s4 1966171168
    %v588 = vunpack.c.0.s8 %v587
    %v589 = vlaneseq
    %v590 = vshrl.u32 %v589, 7
    %v591 = vsub.s32 %v588, %v590
    %v592 = vrot.slane %v585, %v591
    %v594 = vadd.f32 %v288, %v592
    %v595 = vlaneseq
    %vm596 = vcmp.ge.s32.totalorder %v595, 0
    %vm597 = vcmp.lt.s32.totalorder %v595, 512
    %vm598 = vmand %vm596, %vm597
    %599 = vst.msk [vmem:[#allocation3] sm:$0xf] %vm598, %v594
    %v600 = vadd.f32 %v32, %v33
    %v601 = vadd.f32 %v600, %v34
    %v602 = vadd.f32 %v601, %v35
    %603 = vadd.xlane.f32.xlu0 %v602
    %v604 = vpop.xlane.xlu0 %603
    %v605 = vadd.f32 %v36, %v37
    %v606 = vadd.f32 %v605, %v38
    %v607 = vadd.f32 %v606, %v39
    %608 = vadd.xlane.f32.xlu0 %v607
    %v609 = vpop.xlane.xlu0 %608
    %v610 = vadd.f32 %v40, %v41
    %v611 = vadd.f32 %v610, %v42
    %v612 = vadd.f32 %v611, %v43
    %613 = vadd.xlane.f32.xlu0 %v612
    %v614 = vpop.xlane.xlu0 %613
    %v615 = vadd.f32 %v44, %v45
    %v616 = vadd.f32 %v615, %v46
    %v617 = vadd.f32 %v616, %v47
    %618 = vadd.xlane.f32.xlu0 %v617
    %v619 = vpop.xlane.xlu0 %618
    %v620 = vadd.f32 %v48, %v49
    %v621 = vadd.f32 %v620, %v50
    %v622 = vadd.f32 %v621, %v51
    %623 = vadd.xlane.f32.xlu0 %v622
    %v624 = vpop.xlane.xlu0 %623
    %v625 = vadd.f32 %v52, %v53
    %v626 = vadd.f32 %v625, %v54
    %v627 = vadd.f32 %v626, %v55
    %628 = vadd.xlane.f32.xlu0 %v627
    %v629 = vpop.xlane.xlu0 %628
    %v630 = vadd.f32 %v56, %v57
    %v631 = vadd.f32 %v630, %v58
    %v632 = vadd.f32 %v631, %v59
    %633 = vadd.xlane.f32.xlu0 %v632
    %v634 = vpop.xlane.xlu0 %633
    %v635 = vadd.f32 %v60, %v61
    %v636 = vadd.f32 %v635, %v62
    %v637 = vadd.f32 %v636, %v63
    %638 = vadd.xlane.f32.xlu0 %v637
    %v639 = vpop.xlane.xlu0 %638
    %v640 = vadd.f32 %v64, %v65
    %v641 = vadd.f32 %v640, %v66
    %v642 = vadd.f32 %v641, %v67
    %643 = vadd.xlane.f32.xlu0 %v642
    %v644 = vpop.xlane.xlu0 %643
    %v645 = vadd.f32 %v68, %v69
    %v646 = vadd.f32 %v645, %v70
    %v647 = vadd.f32 %v646, %v71
    %648 = vadd.xlane.f32.xlu0 %v647
    %v649 = vpop.xlane.xlu0 %648
    %v650 = vadd.f32 %v72, %v73
    %v651 = vadd.f32 %v650, %v74
    %v652 = vadd.f32 %v651, %v75
    %653 = vadd.xlane.f32.xlu0 %v652
    %v654 = vpop.xlane.xlu0 %653
    %v655 = vadd.f32 %v76, %v77
    %v656 = vadd.f32 %v655, %v78
    %v657 = vadd.f32 %v656, %v79
    %658 = vadd.xlane.f32.xlu0 %v657
    %v659 = vpop.xlane.xlu0 %658
    %v660 = vadd.f32 %v80, %v81
    %v661 = vadd.f32 %v660, %v82
    %v662 = vadd.f32 %v661, %v83
    %663 = vadd.xlane.f32.xlu0 %v662
    %v664 = vpop.xlane.xlu0 %663
    %v665 = vadd.f32 %v84, %v85
    %v666 = vadd.f32 %v665, %v86
    %v667 = vadd.f32 %v666, %v87
    %668 = vadd.xlane.f32.xlu0 %v667
    %v669 = vpop.xlane.xlu0 %668
    %v670 = vadd.f32 %v88, %v89
    %v671 = vadd.f32 %v670, %v90
    %v672 = vadd.f32 %v671, %v91
    %673 = vadd.xlane.f32.xlu0 %v672
    %v674 = vpop.xlane.xlu0 %673
    %v675 = vadd.f32 %v92, %v93
    %v676 = vadd.f32 %v675, %v94
    %v677 = vadd.f32 %v676, %v95
    %678 = vadd.xlane.f32.xlu0 %v677
    %v679 = vpop.xlane.xlu0 %678
    %v680 = vadd.f32 %v96, %v97
    %v681 = vadd.f32 %v680, %v98
    %v682 = vadd.f32 %v681, %v99
    %683 = vadd.xlane.f32.xlu0 %v682
    %v684 = vpop.xlane.xlu0 %683
    %v685 = vadd.f32 %v100, %v101
    %v686 = vadd.f32 %v685, %v102
    %v687 = vadd.f32 %v686, %v103
    %688 = vadd.xlane.f32.xlu0 %v687
    %v689 = vpop.xlane.xlu0 %688
    %v690 = vadd.f32 %v104, %v105
    %v691 = vadd.f32 %v690, %v106
    %v692 = vadd.f32 %v691, %v107
    %693 = vadd.xlane.f32.xlu0 %v692
    %v694 = vpop.xlane.xlu0 %693
    %v695 = vadd.f32 %v108, %v109
    %v696 = vadd.f32 %v695, %v110
    %v697 = vadd.f32 %v696, %v111
    %698 = vadd.xlane.f32.xlu0 %v697
    %v699 = vpop.xlane.xlu0 %698
    %v700 = vadd.f32 %v112, %v113
    %v701 = vadd.f32 %v700, %v114
    %v702 = vadd.f32 %v701, %v115
    %703 = vadd.xlane.f32.xlu0 %v702
    %v704 = vpop.xlane.xlu0 %703
    %v705 = vadd.f32 %v116, %v117
    %v706 = vadd.f32 %v705, %v118
    %v707 = vadd.f32 %v706, %v119
    %708 = vadd.xlane.f32.xlu0 %v707
    %v709 = vpop.xlane.xlu0 %708
    %v710 = vadd.f32 %v120, %v121
    %v711 = vadd.f32 %v710, %v122
    %v712 = vadd.f32 %v711, %v123
    %713 = vadd.xlane.f32.xlu0 %v712
    %v714 = vpop.xlane.xlu0 %713
    %v715 = vadd.f32 %v124, %v125
    %v716 = vadd.f32 %v715, %v126
    %v717 = vadd.f32 %v716, %v127
    %718 = vadd.xlane.f32.xlu0 %v717
    %v719 = vpop.xlane.xlu0 %718
    %v720 = vadd.f32 %v128, %v129
    %v721 = vadd.f32 %v720, %v130
    %v722 = vadd.f32 %v721, %v131
    %723 = vadd.xlane.f32.xlu0 %v722
    %v724 = vpop.xlane.xlu0 %723
    %v725 = vadd.f32 %v132, %v133
    %v726 = vadd.f32 %v725, %v134
    %v727 = vadd.f32 %v726, %v135
    %728 = vadd.xlane.f32.xlu0 %v727
    %v729 = vpop.xlane.xlu0 %728
    %v730 = vadd.f32 %v136, %v137
    %v731 = vadd.f32 %v730, %v138
    %v732 = vadd.f32 %v731, %v139
    %733 = vadd.xlane.f32.xlu0 %v732
    %v734 = vpop.xlane.xlu0 %733
    %v735 = vadd.f32 %v140, %v141
    %v736 = vadd.f32 %v735, %v142
    %v737 = vadd.f32 %v736, %v143
    %738 = vadd.xlane.f32.xlu0 %v737
    %v739 = vpop.xlane.xlu0 %738
    %v740 = vadd.f32 %v144, %v145
    %v741 = vadd.f32 %v740, %v146
    %v742 = vadd.f32 %v741, %v147
    %743 = vadd.xlane.f32.xlu0 %v742
    %v744 = vpop.xlane.xlu0 %743
    %v745 = vadd.f32 %v148, %v149
    %v746 = vadd.f32 %v745, %v150
    %v747 = vadd.f32 %v746, %v151
    %748 = vadd.xlane.f32.xlu0 %v747
    %v749 = vpop.xlane.xlu0 %748
    %v750 = vadd.f32 %v152, %v153
    %v751 = vadd.f32 %v750, %v154
    %v752 = vadd.f32 %v751, %v155
    %753 = vadd.xlane.f32.xlu0 %v752
    %v754 = vpop.xlane.xlu0 %753
    %v755 = vadd.f32 %v156, %v157
    %v756 = vadd.f32 %v755, %v158
    %v757 = vadd.f32 %v756, %v159
    %758 = vadd.xlane.f32.xlu0 %v757
    %v759 = vpop.xlane.xlu0 %758
    %v760 = vadd.f32 %v160, %v161
    %v761 = vadd.f32 %v760, %v162
    %v762 = vadd.f32 %v761, %v163
    %763 = vadd.xlane.f32.xlu0 %v762
    %v764 = vpop.xlane.xlu0 %763
    %v765 = vadd.f32 %v164, %v165
    %v766 = vadd.f32 %v765, %v166
    %v767 = vadd.f32 %v766, %v167
    %768 = vadd.xlane.f32.xlu0 %v767
    %v769 = vpop.xlane.xlu0 %768
    %v770 = vadd.f32 %v168, %v169
    %v771 = vadd.f32 %v770, %v170
    %v772 = vadd.f32 %v771, %v171
    %773 = vadd.xlane.f32.xlu0 %v772
    %v774 = vpop.xlane.xlu0 %773
    %v775 = vadd.f32 %v172, %v173
    %v776 = vadd.f32 %v775, %v174
    %v777 = vadd.f32 %v776, %v175
    %778 = vadd.xlane.f32.xlu0 %v777
    %v779 = vpop.xlane.xlu0 %778
    %v780 = vadd.f32 %v176, %v177
    %v781 = vadd.f32 %v780, %v178
    %v782 = vadd.f32 %v781, %v179
    %783 = vadd.xlane.f32.xlu0 %v782
    %v784 = vpop.xlane.xlu0 %783
    %v785 = vadd.f32 %v180, %v181
    %v786 = vadd.f32 %v785, %v182
    %v787 = vadd.f32 %v786, %v183
    %788 = vadd.xlane.f32.xlu0 %v787
    %v789 = vpop.xlane.xlu0 %788
    %v790 = vadd.f32 %v184, %v185
    %v791 = vadd.f32 %v790, %v186
    %v792 = vadd.f32 %v791, %v187
    %793 = vadd.xlane.f32.xlu0 %v792
    %v794 = vpop.xlane.xlu0 %793
    %v795 = vadd.f32 %v188, %v189
    %v796 = vadd.f32 %v795, %v190
    %v797 = vadd.f32 %v796, %v191
    %798 = vadd.xlane.f32.xlu0 %v797
    %v799 = vpop.xlane.xlu0 %798
    %v800 = vadd.f32 %v192, %v193
    %v801 = vadd.f32 %v800, %v194
    %v802 = vadd.f32 %v801, %v195
    %803 = vadd.xlane.f32.xlu0 %v802
    %v804 = vpop.xlane.xlu0 %803
    %v805 = vadd.f32 %v196, %v197
    %v806 = vadd.f32 %v805, %v198
    %v807 = vadd.f32 %v806, %v199
    %808 = vadd.xlane.f32.xlu0 %v807
    %v809 = vpop.xlane.xlu0 %808
    %v810 = vadd.f32 %v200, %v201
    %v811 = vadd.f32 %v810, %v202
    %v812 = vadd.f32 %v811, %v203
    %813 = vadd.xlane.f32.xlu0 %v812
    %v814 = vpop.xlane.xlu0 %813
    %v815 = vadd.f32 %v204, %v205
    %v816 = vadd.f32 %v815, %v206
    %v817 = vadd.f32 %v816, %v207
    %818 = vadd.xlane.f32.xlu0 %v817
    %v819 = vpop.xlane.xlu0 %818
    %v820 = vadd.f32 %v208, %v209
    %v821 = vadd.f32 %v820, %v210
    %v822 = vadd.f32 %v821, %v211
    %823 = vadd.xlane.f32.xlu0 %v822
    %v824 = vpop.xlane.xlu0 %823
    %v825 = vadd.f32 %v212, %v213
    %v826 = vadd.f32 %v825, %v214
    %v827 = vadd.f32 %v826, %v215
    %828 = vadd.xlane.f32.xlu0 %v827
    %v829 = vpop.xlane.xlu0 %828
    %v830 = vadd.f32 %v216, %v217
    %v831 = vadd.f32 %v830, %v218
    %v832 = vadd.f32 %v831, %v219
    %833 = vadd.xlane.f32.xlu0 %v832
    %v834 = vpop.xlane.xlu0 %833
    %v835 = vadd.f32 %v220, %v221
    %v836 = vadd.f32 %v835, %v222
    %v837 = vadd.f32 %v836, %v223
    %838 = vadd.xlane.f32.xlu0 %v837
    %v839 = vpop.xlane.xlu0 %838
    %v840 = vadd.f32 %v224, %v225
    %v841 = vadd.f32 %v840, %v226
    %v842 = vadd.f32 %v841, %v227
    %843 = vadd.xlane.f32.xlu0 %v842
    %v844 = vpop.xlane.xlu0 %843
    %v845 = vadd.f32 %v228, %v229
    %v846 = vadd.f32 %v845, %v230
    %v847 = vadd.f32 %v846, %v231
    %848 = vadd.xlane.f32.xlu0 %v847
    %v849 = vpop.xlane.xlu0 %848
    %v850 = vadd.f32 %v232, %v233
    %v851 = vadd.f32 %v850, %v234
    %v852 = vadd.f32 %v851, %v235
    %853 = vadd.xlane.f32.xlu0 %v852
    %v854 = vpop.xlane.xlu0 %853
    %v855 = vadd.f32 %v236, %v237
    %v856 = vadd.f32 %v855, %v238
    %v857 = vadd.f32 %v856, %v239
    %858 = vadd.xlane.f32.xlu0 %v857
    %v859 = vpop.xlane.xlu0 %858
    %v860 = vadd.f32 %v240, %v241
    %v861 = vadd.f32 %v860, %v242
    %v862 = vadd.f32 %v861, %v243
    %863 = vadd.xlane.f32.xlu0 %v862
    %v864 = vpop.xlane.xlu0 %863
    %v865 = vadd.f32 %v244, %v245
    %v866 = vadd.f32 %v865, %v246
    %v867 = vadd.f32 %v866, %v247
    %868 = vadd.xlane.f32.xlu0 %v867
    %v869 = vpop.xlane.xlu0 %868
    %v870 = vadd.f32 %v248, %v249
    %v871 = vadd.f32 %v870, %v250
    %v872 = vadd.f32 %v871, %v251
    %873 = vadd.xlane.f32.xlu0 %v872
    %v874 = vpop.xlane.xlu0 %873
    %v875 = vadd.f32 %v252, %v253
    %v876 = vadd.f32 %v875, %v254
    %v877 = vadd.f32 %v876, %v255
    %878 = vadd.xlane.f32.xlu0 %v877
    %v879 = vpop.xlane.xlu0 %878
    %v880 = vadd.f32 %v256, %v257
    %v881 = vadd.f32 %v880, %v258
    %v882 = vadd.f32 %v881, %v259
    %883 = vadd.xlane.f32.xlu0 %v882
    %v884 = vpop.xlane.xlu0 %883
    %v885 = vadd.f32 %v260, %v261
    %v886 = vadd.f32 %v885, %v262
    %v887 = vadd.f32 %v886, %v263
    %888 = vadd.xlane.f32.xlu0 %v887
    %v889 = vpop.xlane.xlu0 %888
    %v890 = vadd.f32 %v264, %v265
    %v891 = vadd.f32 %v890, %v266
    %v892 = vadd.f32 %v891, %v267
    %893 = vadd.xlane.f32.xlu0 %v892
    %v894 = vpop.xlane.xlu0 %893
    %v895 = vadd.f32 %v268, %v269
    %v896 = vadd.f32 %v895, %v270
    %v897 = vadd.f32 %v896, %v271
    %898 = vadd.xlane.f32.xlu0 %v897
    %v899 = vpop.xlane.xlu0 %898
    %v900 = vadd.f32 %v272, %v273
    %v901 = vadd.f32 %v900, %v274
    %v902 = vadd.f32 %v901, %v275
    %903 = vadd.xlane.f32.xlu0 %v902
    %v904 = vpop.xlane.xlu0 %903
    %v905 = vadd.f32 %v276, %v277
    %v906 = vadd.f32 %v905, %v278
    %v907 = vadd.f32 %v906, %v279
    %908 = vadd.xlane.f32.xlu0 %v907
    %v909 = vpop.xlane.xlu0 %908
    %v910 = vadd.f32 %v280, %v281
    %v911 = vadd.f32 %v910, %v282
    %v912 = vadd.f32 %v911, %v283
    %913 = vadd.xlane.f32.xlu0 %v912
    %v914 = vpop.xlane.xlu0 %913
    %v915 = vadd.f32 %v284, %v285
    %v916 = vadd.f32 %v915, %v286
    %v917 = vadd.f32 %v916, %v287
    %918 = vadd.xlane.f32.xlu0 %v917
    %v919 = vpop.xlane.xlu0 %918
    %v984 = vlaneseq
    %v985 = vshrl.u32 %v984, 7
    %v986 = vsub.s32 0, %v985
    %v987 = vrot.slane %v604, %v986
    %v988 = vlaneseq
    %v989 = vshrl.u32 %v988, 7
    %v990 = vsub.s32 1, %v989
    %v991 = vrot.slane %v604, %v990
    %v992 = vlaneseq
    %v993 = vshrl.u32 %v992, 7
    %v994 = vsub.s32 2, %v993
    %v995 = vrot.slane %v604, %v994
    %v996 = vlaneseq
    %v997 = vshrl.u32 %v996, 7
    %v998 = vsub.s32 3, %v997
    %v999 = vrot.slane %v604, %v998
    %v1000 = vlaneseq
    %v1001 = vshrl.u32 %v1000, 7
    %v1002 = vsub.s32 4, %v1001
    %v1003 = vrot.slane %v604, %v1002
    %v1004 = vlaneseq
    %v1005 = vshrl.u32 %v1004, 7
    %v1006 = vsub.s32 5, %v1005
    %v1007 = vrot.slane %v604, %v1006
    %v1008 = vlaneseq
    %v1009 = vshrl.u32 %v1008, 7
    %v1010 = vsub.s32 6, %v1009
    %v1011 = vrot.slane %v604, %v1010
    %v1012 = vlaneseq
    %v1013 = vshrl.u32 %v1012, 7
    %v1014 = vsub.s32 7, %v1013
    %v1015 = vrot.slane %v604, %v1014
    %v1016 = vlaneseq
    %v1017 = vshrl.u32 %v1016, 7
    %v1018 = vsub.s32 0, %v1017
    %v1019 = vrot.slane %v609, %v1018
    %v1020 = vlaneseq
    %v1021 = vshrl.u32 %v1020, 7
    %v1022 = vsub.s32 1, %v1021
    %v1023 = vrot.slane %v609, %v1022
    %v1024 = vlaneseq
    %v1025 = vshrl.u32 %v1024, 7
    %v1026 = vsub.s32 2, %v1025
    %v1027 = vrot.slane %v609, %v1026
    %v1028 = vlaneseq
    %v1029 = vshrl.u32 %v1028, 7
    %v1030 = vsub.s32 3, %v1029
    %v1031 = vrot.slane %v609, %v1030
    %v1032 = vlaneseq
    %v1033 = vshrl.u32 %v1032, 7
    %v1034 = vsub.s32 4, %v1033
    %v1035 = vrot.slane %v609, %v1034
    %v1036 = vlaneseq
    %v1037 = vshrl.u32 %v1036, 7
    %v1038 = vsub.s32 5, %v1037
    %v1039 = vrot.slane %v609, %v1038
    %v1040 = vlaneseq
    %v1041 = vshrl.u32 %v1040, 7
    %v1042 = vsub.s32 6, %v1041
    %v1043 = vrot.slane %v609, %v1042
    %v1044 = vlaneseq
    %v1045 = vshrl.u32 %v1044, 7
    %v1046 = vsub.s32 7, %v1045
    %v1047 = vrot.slane %v609, %v1046
    %v1048 = vlaneseq
    %v1049 = vshrl.u32 %v1048, 7
    %v1050 = vsub.s32 0, %v1049
    %v1051 = vrot.slane %v614, %v1050
    %v1052 = vlaneseq
    %v1053 = vshrl.u32 %v1052, 7
    %v1054 = vsub.s32 1, %v1053
    %v1055 = vrot.slane %v614, %v1054
    %v1056 = vlaneseq
    %v1057 = vshrl.u32 %v1056, 7
    %v1058 = vsub.s32 2, %v1057
    %v1059 = vrot.slane %v614, %v1058
    %v1060 = vlaneseq
    %v1061 = vshrl.u32 %v1060, 7
    %v1062 = vsub.s32 3, %v1061
    %v1063 = vrot.slane %v614, %v1062
    %v1064 = vlaneseq
    %v1065 = vshrl.u32 %v1064, 7
    %v1066 = vsub.s32 4, %v1065
    %v1067 = vrot.slane %v614, %v1066
    %v1068 = vlaneseq
    %v1069 = vshrl.u32 %v1068, 7
    %v1070 = vsub.s32 5, %v1069
    %v1071 = vrot.slane %v614, %v1070
    %v1072 = vlaneseq
    %v1073 = vshrl.u32 %v1072, 7
    %v1074 = vsub.s32 6, %v1073
    %v1075 = vrot.slane %v614, %v1074
    %v1076 = vlaneseq
    %v1077 = vshrl.u32 %v1076, 7
    %v1078 = vsub.s32 7, %v1077
    %v1079 = vrot.slane %v614, %v1078
    %v1080 = vlaneseq
    %v1081 = vshrl.u32 %v1080, 7
    %v1082 = vsub.s32 0, %v1081
    %v1083 = vrot.slane %v619, %v1082
    %v1084 = vlaneseq
    %v1085 = vshrl.u32 %v1084, 7
    %v1086 = vsub.s32 1, %v1085
    %v1087 = vrot.slane %v619, %v1086
    %v1088 = vlaneseq
    %v1089 = vshrl.u32 %v1088, 7
    %v1090 = vsub.s32 2, %v1089
    %v1091 = vrot.slane %v619, %v1090
    %v1092 = vlaneseq
    %v1093 = vshrl.u32 %v1092, 7
    %v1094 = vsub.s32 3, %v1093
    %v1095 = vrot.slane %v619, %v1094
    %v1096 = vlaneseq
    %v1097 = vshrl.u32 %v1096, 7
    %v1098 = vsub.s32 4, %v1097
    %v1099 = vrot.slane %v619, %v1098
    %v1100 = vlaneseq
    %v1101 = vshrl.u32 %v1100, 7
    %v1102 = vsub.s32 5, %v1101
    %v1103 = vrot.slane %v619, %v1102
    %v1104 = vlaneseq
    %v1105 = vshrl.u32 %v1104, 7
    %v1106 = vsub.s32 6, %v1105
    %v1107 = vrot.slane %v619, %v1106
    %v1108 = vlaneseq
    %v1109 = vshrl.u32 %v1108, 7
    %v1110 = vsub.s32 7, %v1109
    %v1111 = vrot.slane %v619, %v1110
    %v1112 = vlaneseq
    %v1113 = vshrl.u32 %v1112, 7
    %v1114 = vsub.s32 0, %v1113
    %v1115 = vrot.slane %v624, %v1114
    %v1116 = vlaneseq
    %v1117 = vshrl.u32 %v1116, 7
    %v1118 = vsub.s32 1, %v1117
    %v1119 = vrot.slane %v624, %v1118
    %v1120 = vlaneseq
    %v1121 = vshrl.u32 %v1120, 7
    %v1122 = vsub.s32 2, %v1121
    %v1123 = vrot.slane %v624, %v1122
    %v1124 = vlaneseq
    %v1125 = vshrl.u32 %v1124, 7
    %v1126 = vsub.s32 3, %v1125
    %v1127 = vrot.slane %v624, %v1126
    %v1128 = vlaneseq
    %v1129 = vshrl.u32 %v1128, 7
    %v1130 = vsub.s32 4, %v1129
    %v1131 = vrot.slane %v624, %v1130
    %v1132 = vlaneseq
    %v1133 = vshrl.u32 %v1132, 7
    %v1134 = vsub.s32 5, %v1133
    %v1135 = vrot.slane %v624, %v1134
    %v1136 = vlaneseq
    %v1137 = vshrl.u32 %v1136, 7
    %v1138 = vsub.s32 6, %v1137
    %v1139 = vrot.slane %v624, %v1138
    %v1140 = vlaneseq
    %v1141 = vshrl.u32 %v1140, 7
    %v1142 = vsub.s32 7, %v1141
    %v1143 = vrot.slane %v624, %v1142
    %v1144 = vlaneseq
    %v1145 = vshrl.u32 %v1144, 7
    %v1146 = vsub.s32 0, %v1145
    %v1147 = vrot.slane %v629, %v1146
    %v1148 = vlaneseq
    %v1149 = vshrl.u32 %v1148, 7
    %v1150 = vsub.s32 1, %v1149
    %v1151 = vrot.slane %v629, %v1150
    %v1152 = vlaneseq
    %v1153 = vshrl.u32 %v1152, 7
    %v1154 = vsub.s32 2, %v1153
    %v1155 = vrot.slane %v629, %v1154
    %v1156 = vlaneseq
    %v1157 = vshrl.u32 %v1156, 7
    %v1158 = vsub.s32 3, %v1157
    %v1159 = vrot.slane %v629, %v1158
    %v1160 = vlaneseq
    %v1161 = vshrl.u32 %v1160, 7
    %v1162 = vsub.s32 4, %v1161
    %v1163 = vrot.slane %v629, %v1162
    %v1164 = vlaneseq
    %v1165 = vshrl.u32 %v1164, 7
    %v1166 = vsub.s32 5, %v1165
    %v1167 = vrot.slane %v629, %v1166
    %v1168 = vlaneseq
    %v1169 = vshrl.u32 %v1168, 7
    %v1170 = vsub.s32 6, %v1169
    %v1171 = vrot.slane %v629, %v1170
    %v1172 = vlaneseq
    %v1173 = vshrl.u32 %v1172, 7
    %v1174 = vsub.s32 7, %v1173
    %v1175 = vrot.slane %v629, %v1174
    %v1176 = vlaneseq
    %v1177 = vshrl.u32 %v1176, 7
    %v1178 = vsub.s32 0, %v1177
    %v1179 = vrot.slane %v634, %v1178
    %v1180 = vlaneseq
    %v1181 = vshrl.u32 %v1180, 7
    %v1182 = vsub.s32 1, %v1181
    %v1183 = vrot.slane %v634, %v1182
    %v1184 = vlaneseq
    %v1185 = vshrl.u32 %v1184, 7
    %v1186 = vsub.s32 2, %v1185
    %v1187 = vrot.slane %v634, %v1186
    %v1188 = vlaneseq
    %v1189 = vshrl.u32 %v1188, 7
    %v1190 = vsub.s32 3, %v1189
    %v1191 = vrot.slane %v634, %v1190
    %v1192 = vlaneseq
    %v1193 = vshrl.u32 %v1192, 7
    %v1194 = vsub.s32 4, %v1193
    %v1195 = vrot.slane %v634, %v1194
    %v1196 = vlaneseq
    %v1197 = vshrl.u32 %v1196, 7
    %v1198 = vsub.s32 5, %v1197
    %v1199 = vrot.slane %v634, %v1198
    %v1200 = vlaneseq
    %v1201 = vshrl.u32 %v1200, 7
    %v1202 = vsub.s32 6, %v1201
    %v1203 = vrot.slane %v634, %v1202
    %v1204 = vlaneseq
    %v1205 = vshrl.u32 %v1204, 7
    %v1206 = vsub.s32 7, %v1205
    %v1207 = vrot.slane %v634, %v1206
    %v1208 = vlaneseq
    %v1209 = vshrl.u32 %v1208, 7
    %v1210 = vsub.s32 0, %v1209
    %v1211 = vrot.slane %v639, %v1210
    %v1212 = vlaneseq
    %v1213 = vshrl.u32 %v1212, 7
    %v1214 = vsub.s32 1, %v1213
    %v1215 = vrot.slane %v639, %v1214
    %v1216 = vlaneseq
    %v1217 = vshrl.u32 %v1216, 7
    %v1218 = vsub.s32 2, %v1217
    %v1219 = vrot.slane %v639, %v1218
    %v1220 = vlaneseq
    %v1221 = vshrl.u32 %v1220, 7
    %v1222 = vsub.s32 3, %v1221
    %v1223 = vrot.slane %v639, %v1222
    %v1224 = vlaneseq
    %v1225 = vshrl.u32 %v1224, 7
    %v1226 = vsub.s32 4, %v1225
    %v1227 = vrot.slane %v639, %v1226
    %v1228 = vlaneseq
    %v1229 = vshrl.u32 %v1228, 7
    %v1230 = vsub.s32 5, %v1229
    %v1231 = vrot.slane %v639, %v1230
    %v1232 = vlaneseq
    %v1233 = vshrl.u32 %v1232, 7
    %v1234 = vsub.s32 6, %v1233
    %v1235 = vrot.slane %v639, %v1234
    %v1236 = vlaneseq
    %v1237 = vshrl.u32 %v1236, 7
    %v1238 = vsub.s32 7, %v1237
    %v1239 = vrot.slane %v639, %v1238
    %v1240 = vlaneseq
    %v1241 = vshrl.u32 %v1240, 7
    %v1242 = vsub.s32 0, %v1241
    %v1243 = vrot.slane %v644, %v1242
    %v1244 = vlaneseq
    %v1245 = vshrl.u32 %v1244, 7
    %v1246 = vsub.s32 1, %v1245
    %v1247 = vrot.slane %v644, %v1246
    %v1248 = vlaneseq
    %v1249 = vshrl.u32 %v1248, 7
    %v1250 = vsub.s32 2, %v1249
    %v1251 = vrot.slane %v644, %v1250
    %v1252 = vlaneseq
    %v1253 = vshrl.u32 %v1252, 7
    %v1254 = vsub.s32 3, %v1253
    %v1255 = vrot.slane %v644, %v1254
    %v1256 = vlaneseq
    %v1257 = vshrl.u32 %v1256, 7
    %v1258 = vsub.s32 4, %v1257
    %v1259 = vrot.slane %v644, %v1258
    %v1260 = vlaneseq
    %v1261 = vshrl.u32 %v1260, 7
    %v1262 = vsub.s32 5, %v1261
    %v1263 = vrot.slane %v644, %v1262
    %v1264 = vlaneseq
    %v1265 = vshrl.u32 %v1264, 7
    %v1266 = vsub.s32 6, %v1265
    %v1267 = vrot.slane %v644, %v1266
    %v1268 = vlaneseq
    %v1269 = vshrl.u32 %v1268, 7
    %v1270 = vsub.s32 7, %v1269
    %v1271 = vrot.slane %v644, %v1270
    %v1272 = vlaneseq
    %v1273 = vshrl.u32 %v1272, 7
    %v1274 = vsub.s32 0, %v1273
    %v1275 = vrot.slane %v649, %v1274
    %v1276 = vlaneseq
    %v1277 = vshrl.u32 %v1276, 7
    %v1278 = vsub.s32 1, %v1277
    %v1279 = vrot.slane %v649, %v1278
    %v1280 = vlaneseq
    %v1281 = vshrl.u32 %v1280, 7
    %v1282 = vsub.s32 2, %v1281
    %v1283 = vrot.slane %v649, %v1282
    %v1284 = vlaneseq
    %v1285 = vshrl.u32 %v1284, 7
    %v1286 = vsub.s32 3, %v1285
    %v1287 = vrot.slane %v649, %v1286
    %v1288 = vlaneseq
    %v1289 = vshrl.u32 %v1288, 7
    %v1290 = vsub.s32 4, %v1289
    %v1291 = vrot.slane %v649, %v1290
    %v1292 = vlaneseq
    %v1293 = vshrl.u32 %v1292, 7
    %v1294 = vsub.s32 5, %v1293
    %v1295 = vrot.slane %v649, %v1294
    %v1296 = vlaneseq
    %v1297 = vshrl.u32 %v1296, 7
    %v1298 = vsub.s32 6, %v1297
    %v1299 = vrot.slane %v649, %v1298
    %v1300 = vlaneseq
    %v1301 = vshrl.u32 %v1300, 7
    %v1302 = vsub.s32 7, %v1301
    %v1303 = vrot.slane %v649, %v1302
    %v1304 = vlaneseq
    %v1305 = vshrl.u32 %v1304, 7
    %v1306 = vsub.s32 0, %v1305
    %v1307 = vrot.slane %v654, %v1306
    %v1308 = vlaneseq
    %v1309 = vshrl.u32 %v1308, 7
    %v1310 = vsub.s32 1, %v1309
    %v1311 = vrot.slane %v654, %v1310
    %v1312 = vlaneseq
    %v1313 = vshrl.u32 %v1312, 7
    %v1314 = vsub.s32 2, %v1313
    %v1315 = vrot.slane %v654, %v1314
    %v1316 = vlaneseq
    %v1317 = vshrl.u32 %v1316, 7
    %v1318 = vsub.s32 3, %v1317
    %v1319 = vrot.slane %v654, %v1318
    %v1320 = vlaneseq
    %v1321 = vshrl.u32 %v1320, 7
    %v1322 = vsub.s32 4, %v1321
    %v1323 = vrot.slane %v654, %v1322
    %v1324 = vlaneseq
    %v1325 = vshrl.u32 %v1324, 7
    %v1326 = vsub.s32 5, %v1325
    %v1327 = vrot.slane %v654, %v1326
    %v1328 = vlaneseq
    %v1329 = vshrl.u32 %v1328, 7
    %v1330 = vsub.s32 6, %v1329
    %v1331 = vrot.slane %v654, %v1330
    %v1332 = vlaneseq
    %v1333 = vshrl.u32 %v1332, 7
    %v1334 = vsub.s32 7, %v1333
    %v1335 = vrot.slane %v654, %v1334
    %v1336 = vlaneseq
    %v1337 = vshrl.u32 %v1336, 7
    %v1338 = vsub.s32 0, %v1337
    %v1339 = vrot.slane %v659, %v1338
    %v1340 = vlaneseq
    %v1341 = vshrl.u32 %v1340, 7
    %v1342 = vsub.s32 1, %v1341
    %v1343 = vrot.slane %v659, %v1342
    %v1344 = vlaneseq
    %v1345 = vshrl.u32 %v1344, 7
    %v1346 = vsub.s32 2, %v1345
    %v1347 = vrot.slane %v659, %v1346
    %v1348 = vlaneseq
    %v1349 = vshrl.u32 %v1348, 7
    %v1350 = vsub.s32 3, %v1349
    %v1351 = vrot.slane %v659, %v1350
    %v1352 = vlaneseq
    %v1353 = vshrl.u32 %v1352, 7
    %v1354 = vsub.s32 4, %v1353
    %v1355 = vrot.slane %v659, %v1354
    %v1356 = vlaneseq
    %v1357 = vshrl.u32 %v1356, 7
    %v1358 = vsub.s32 5, %v1357
    %v1359 = vrot.slane %v659, %v1358
    %v1360 = vlaneseq
    %v1361 = vshrl.u32 %v1360, 7
    %v1362 = vsub.s32 6, %v1361
    %v1363 = vrot.slane %v659, %v1362
    %v1364 = vlaneseq
    %v1365 = vshrl.u32 %v1364, 7
    %v1366 = vsub.s32 7, %v1365
    %v1367 = vrot.slane %v659, %v1366
    %v1368 = vlaneseq
    %v1369 = vshrl.u32 %v1368, 7
    %v1370 = vsub.s32 0, %v1369
    %v1371 = vrot.slane %v664, %v1370
    %v1372 = vlaneseq
    %v1373 = vshrl.u32 %v1372, 7
    %v1374 = vsub.s32 1, %v1373
    %v1375 = vrot.slane %v664, %v1374
    %v1376 = vlaneseq
    %v1377 = vshrl.u32 %v1376, 7
    %v1378 = vsub.s32 2, %v1377
    %v1379 = vrot.slane %v664, %v1378
    %v1380 = vlaneseq
    %v1381 = vshrl.u32 %v1380, 7
    %v1382 = vsub.s32 3, %v1381
    %v1383 = vrot.slane %v664, %v1382
    %v1384 = vlaneseq
    %v1385 = vshrl.u32 %v1384, 7
    %v1386 = vsub.s32 4, %v1385
    %v1387 = vrot.slane %v664, %v1386
    %v1388 = vlaneseq
    %v1389 = vshrl.u32 %v1388, 7
    %v1390 = vsub.s32 5, %v1389
    %v1391 = vrot.slane %v664, %v1390
    %v1392 = vlaneseq
    %v1393 = vshrl.u32 %v1392, 7
    %v1394 = vsub.s32 6, %v1393
    %v1395 = vrot.slane %v664, %v1394
    %v1396 = vlaneseq
    %v1397 = vshrl.u32 %v1396, 7
    %v1398 = vsub.s32 7, %v1397
    %v1399 = vrot.slane %v664, %v1398
    %v1400 = vlaneseq
    %v1401 = vshrl.u32 %v1400, 7
    %v1402 = vsub.s32 0, %v1401
    %v1403 = vrot.slane %v669, %v1402
    %v1404 = vlaneseq
    %v1405 = vshrl.u32 %v1404, 7
    %v1406 = vsub.s32 1, %v1405
    %v1407 = vrot.slane %v669, %v1406
    %v1408 = vlaneseq
    %v1409 = vshrl.u32 %v1408, 7
    %v1410 = vsub.s32 2, %v1409
    %v1411 = vrot.slane %v669, %v1410
    %v1412 = vlaneseq
    %v1413 = vshrl.u32 %v1412, 7
    %v1414 = vsub.s32 3, %v1413
    %v1415 = vrot.slane %v669, %v1414
    %v1416 = vlaneseq
    %v1417 = vshrl.u32 %v1416, 7
    %v1418 = vsub.s32 4, %v1417
    %v1419 = vrot.slane %v669, %v1418
    %v1420 = vlaneseq
    %v1421 = vshrl.u32 %v1420, 7
    %v1422 = vsub.s32 5, %v1421
    %v1423 = vrot.slane %v669, %v1422
    %v1424 = vlaneseq
    %v1425 = vshrl.u32 %v1424, 7
    %v1426 = vsub.s32 6, %v1425
    %v1427 = vrot.slane %v669, %v1426
    %v1428 = vlaneseq
    %v1429 = vshrl.u32 %v1428, 7
    %v1430 = vsub.s32 7, %v1429
    %v1431 = vrot.slane %v669, %v1430
    %v1432 = vlaneseq
    %v1433 = vshrl.u32 %v1432, 7
    %v1434 = vsub.s32 0, %v1433
    %v1435 = vrot.slane %v674, %v1434
    %v1436 = vlaneseq
    %v1437 = vshrl.u32 %v1436, 7
    %v1438 = vsub.s32 1, %v1437
    %v1439 = vrot.slane %v674, %v1438
    %v1440 = vlaneseq
    %v1441 = vshrl.u32 %v1440, 7
    %v1442 = vsub.s32 2, %v1441
    %v1443 = vrot.slane %v674, %v1442
    %v1444 = vlaneseq
    %v1445 = vshrl.u32 %v1444, 7
    %v1446 = vsub.s32 3, %v1445
    %v1447 = vrot.slane %v674, %v1446
    %v1448 = vlaneseq
    %v1449 = vshrl.u32 %v1448, 7
    %v1450 = vsub.s32 4, %v1449
    %v1451 = vrot.slane %v674, %v1450
    %v1452 = vlaneseq
    %v1453 = vshrl.u32 %v1452, 7
    %v1454 = vsub.s32 5, %v1453
    %v1455 = vrot.slane %v674, %v1454
    %v1456 = vlaneseq
    %v1457 = vshrl.u32 %v1456, 7
    %v1458 = vsub.s32 6, %v1457
    %v1459 = vrot.slane %v674, %v1458
    %v1460 = vlaneseq
    %v1461 = vshrl.u32 %v1460, 7
    %v1462 = vsub.s32 7, %v1461
    %v1463 = vrot.slane %v674, %v1462
    %v1464 = vlaneseq
    %v1465 = vshrl.u32 %v1464, 7
    %v1466 = vsub.s32 0, %v1465
    %v1467 = vrot.slane %v679, %v1466
    %v1468 = vlaneseq
    %v1469 = vshrl.u32 %v1468, 7
    %v1470 = vsub.s32 1, %v1469
    %v1471 = vrot.slane %v679, %v1470
    %v1472 = vlaneseq
    %v1473 = vshrl.u32 %v1472, 7
    %v1474 = vsub.s32 2, %v1473
    %v1475 = vrot.slane %v679, %v1474
    %v1476 = vlaneseq
    %v1477 = vshrl.u32 %v1476, 7
    %v1478 = vsub.s32 3, %v1477
    %v1479 = vrot.slane %v679, %v1478
    %v1480 = vlaneseq
    %v1481 = vshrl.u32 %v1480, 7
    %v1482 = vsub.s32 4, %v1481
    %v1483 = vrot.slane %v679, %v1482
    %v1484 = vlaneseq
    %v1485 = vshrl.u32 %v1484, 7
    %v1486 = vsub.s32 5, %v1485
    %v1487 = vrot.slane %v679, %v1486
    %v1488 = vlaneseq
    %v1489 = vshrl.u32 %v1488, 7
    %v1490 = vsub.s32 6, %v1489
    %v1491 = vrot.slane %v679, %v1490
    %v1492 = vlaneseq
    %v1493 = vshrl.u32 %v1492, 7
    %v1494 = vsub.s32 7, %v1493
    %v1495 = vrot.slane %v679, %v1494
    %v1496 = vlaneseq
    %v1497 = vshrl.u32 %v1496, 7
    %v1498 = vsub.s32 0, %v1497
    %v1499 = vrot.slane %v684, %v1498
    %v1500 = vlaneseq
    %v1501 = vshrl.u32 %v1500, 7
    %v1502 = vsub.s32 1, %v1501
    %v1503 = vrot.slane %v684, %v1502
    %v1504 = vlaneseq
    %v1505 = vshrl.u32 %v1504, 7
    %v1506 = vsub.s32 2, %v1505
    %v1507 = vrot.slane %v684, %v1506
    %v1508 = vlaneseq
    %v1509 = vshrl.u32 %v1508, 7
    %v1510 = vsub.s32 3, %v1509
    %v1511 = vrot.slane %v684, %v1510
    %v1512 = vlaneseq
    %v1513 = vshrl.u32 %v1512, 7
    %v1514 = vsub.s32 4, %v1513
    %v1515 = vrot.slane %v684, %v1514
    %v1516 = vlaneseq
    %v1517 = vshrl.u32 %v1516, 7
    %v1518 = vsub.s32 5, %v1517
    %v1519 = vrot.slane %v684, %v1518
    %v1520 = vlaneseq
    %v1521 = vshrl.u32 %v1520, 7
    %v1522 = vsub.s32 6, %v1521
    %v1523 = vrot.slane %v684, %v1522
    %v1524 = vlaneseq
    %v1525 = vshrl.u32 %v1524, 7
    %v1526 = vsub.s32 7, %v1525
    %v1527 = vrot.slane %v684, %v1526
    %v1528 = vlaneseq
    %v1529 = vshrl.u32 %v1528, 7
    %v1530 = vsub.s32 0, %v1529
    %v1531 = vrot.slane %v689, %v1530
    %v1532 = vlaneseq
    %v1533 = vshrl.u32 %v1532, 7
    %v1534 = vsub.s32 1, %v1533
    %v1535 = vrot.slane %v689, %v1534
    %v1536 = vlaneseq
    %v1537 = vshrl.u32 %v1536, 7
    %v1538 = vsub.s32 2, %v1537
    %v1539 = vrot.slane %v689, %v1538
    %v1540 = vlaneseq
    %v1541 = vshrl.u32 %v1540, 7
    %v1542 = vsub.s32 3, %v1541
    %v1543 = vrot.slane %v689, %v1542
    %v1544 = vlaneseq
    %v1545 = vshrl.u32 %v1544, 7
    %v1546 = vsub.s32 4, %v1545
    %v1547 = vrot.slane %v689, %v1546
    %v1548 = vlaneseq
    %v1549 = vshrl.u32 %v1548, 7
    %v1550 = vsub.s32 5, %v1549
    %v1551 = vrot.slane %v689, %v1550
    %v1552 = vlaneseq
    %v1553 = vshrl.u32 %v1552, 7
    %v1554 = vsub.s32 6, %v1553
    %v1555 = vrot.slane %v689, %v1554
    %v1556 = vlaneseq
    %v1557 = vshrl.u32 %v1556, 7
    %v1558 = vsub.s32 7, %v1557
    %v1559 = vrot.slane %v689, %v1558
    %v1560 = vlaneseq
    %v1561 = vshrl.u32 %v1560, 7
    %v1562 = vsub.s32 0, %v1561
    %v1563 = vrot.slane %v694, %v1562
    %v1564 = vlaneseq
    %v1565 = vshrl.u32 %v1564, 7
    %v1566 = vsub.s32 1, %v1565
    %v1567 = vrot.slane %v694, %v1566
    %v1568 = vlaneseq
    %v1569 = vshrl.u32 %v1568, 7
    %v1570 = vsub.s32 2, %v1569
    %v1571 = vrot.slane %v694, %v1570
    %v1572 = vlaneseq
    %v1573 = vshrl.u32 %v1572, 7
    %v1574 = vsub.s32 3, %v1573
    %v1575 = vrot.slane %v694, %v1574
    %v1576 = vlaneseq
    %v1577 = vshrl.u32 %v1576, 7
    %v1578 = vsub.s32 4, %v1577
    %v1579 = vrot.slane %v694, %v1578
    %v1580 = vlaneseq
    %v1581 = vshrl.u32 %v1580, 7
    %v1582 = vsub.s32 5, %v1581
    %v1583 = vrot.slane %v694, %v1582
    %v1584 = vlaneseq
    %v1585 = vshrl.u32 %v1584, 7
    %v1586 = vsub.s32 6, %v1585
    %v1587 = vrot.slane %v694, %v1586
    %v1588 = vlaneseq
    %v1589 = vshrl.u32 %v1588, 7
    %v1590 = vsub.s32 7, %v1589
    %v1591 = vrot.slane %v694, %v1590
    %v1592 = vlaneseq
    %v1593 = vshrl.u32 %v1592, 7
    %v1594 = vsub.s32 0, %v1593
    %v1595 = vrot.slane %v699, %v1594
    %v1596 = vlaneseq
    %v1597 = vshrl.u32 %v1596, 7
    %v1598 = vsub.s32 1, %v1597
    %v1599 = vrot.slane %v699, %v1598
    %v1600 = vlaneseq
    %v1601 = vshrl.u32 %v1600, 7
    %v1602 = vsub.s32 2, %v1601
    %v1603 = vrot.slane %v699, %v1602
    %v1604 = vlaneseq
    %v1605 = vshrl.u32 %v1604, 7
    %v1606 = vsub.s32 3, %v1605
    %v1607 = vrot.slane %v699, %v1606
    %v1608 = vlaneseq
    %v1609 = vshrl.u32 %v1608, 7
    %v1610 = vsub.s32 4, %v1609
    %v1611 = vrot.slane %v699, %v1610
    %v1612 = vlaneseq
    %v1613 = vshrl.u32 %v1612, 7
    %v1614 = vsub.s32 5, %v1613
    %v1615 = vrot.slane %v699, %v1614
    %v1616 = vlaneseq
    %v1617 = vshrl.u32 %v1616, 7
    %v1618 = vsub.s32 6, %v1617
    %v1619 = vrot.slane %v699, %v1618
    %v1620 = vlaneseq
    %v1621 = vshrl.u32 %v1620, 7
    %v1622 = vsub.s32 7, %v1621
    %v1623 = vrot.slane %v699, %v1622
    %v1624 = vlaneseq
    %v1625 = vshrl.u32 %v1624, 7
    %v1626 = vsub.s32 0, %v1625
    %v1627 = vrot.slane %v704, %v1626
    %v1628 = vlaneseq
    %v1629 = vshrl.u32 %v1628, 7
    %v1630 = vsub.s32 1, %v1629
    %v1631 = vrot.slane %v704, %v1630
    %v1632 = vlaneseq
    %v1633 = vshrl.u32 %v1632, 7
    %v1634 = vsub.s32 2, %v1633
    %v1635 = vrot.slane %v704, %v1634
    %v1636 = vlaneseq
    %v1637 = vshrl.u32 %v1636, 7
    %v1638 = vsub.s32 3, %v1637
    %v1639 = vrot.slane %v704, %v1638
    %v1640 = vlaneseq
    %v1641 = vshrl.u32 %v1640, 7
    %v1642 = vsub.s32 4, %v1641
    %v1643 = vrot.slane %v704, %v1642
    %v1644 = vlaneseq
    %v1645 = vshrl.u32 %v1644, 7
    %v1646 = vsub.s32 5, %v1645
    %v1647 = vrot.slane %v704, %v1646
    %v1648 = vlaneseq
    %v1649 = vshrl.u32 %v1648, 7
    %v1650 = vsub.s32 6, %v1649
    %v1651 = vrot.slane %v704, %v1650
    %v1652 = vlaneseq
    %v1653 = vshrl.u32 %v1652, 7
    %v1654 = vsub.s32 7, %v1653
    %v1655 = vrot.slane %v704, %v1654
    %v1656 = vlaneseq
    %v1657 = vshrl.u32 %v1656, 7
    %v1658 = vsub.s32 0, %v1657
    %v1659 = vrot.slane %v709, %v1658
    %v1660 = vlaneseq
    %v1661 = vshrl.u32 %v1660, 7
    %v1662 = vsub.s32 1, %v1661
    %v1663 = vrot.slane %v709, %v1662
    %v1664 = vlaneseq
    %v1665 = vshrl.u32 %v1664, 7
    %v1666 = vsub.s32 2, %v1665
    %v1667 = vrot.slane %v709, %v1666
    %v1668 = vlaneseq
    %v1669 = vshrl.u32 %v1668, 7
    %v1670 = vsub.s32 3, %v1669
    %v1671 = vrot.slane %v709, %v1670
    %v1672 = vlaneseq
    %v1673 = vshrl.u32 %v1672, 7
    %v1674 = vsub.s32 4, %v1673
    %v1675 = vrot.slane %v709, %v1674
    %v1676 = vlaneseq
    %v1677 = vshrl.u32 %v1676, 7
    %v1678 = vsub.s32 5, %v1677
    %v1679 = vrot.slane %v709, %v1678
    %v1680 = vlaneseq
    %v1681 = vshrl.u32 %v1680, 7
    %v1682 = vsub.s32 6, %v1681
    %v1683 = vrot.slane %v709, %v1682
    %v1684 = vlaneseq
    %v1685 = vshrl.u32 %v1684, 7
    %v1686 = vsub.s32 7, %v1685
    %v1687 = vrot.slane %v709, %v1686
    %v1688 = vlaneseq
    %v1689 = vshrl.u32 %v1688, 7
    %v1690 = vsub.s32 0, %v1689
    %v1691 = vrot.slane %v714, %v1690
    %v1692 = vlaneseq
    %v1693 = vshrl.u32 %v1692, 7
    %v1694 = vsub.s32 1, %v1693
    %v1695 = vrot.slane %v714, %v1694
    %v1696 = vlaneseq
    %v1697 = vshrl.u32 %v1696, 7
    %v1698 = vsub.s32 2, %v1697
    %v1699 = vrot.slane %v714, %v1698
    %v1700 = vlaneseq
    %v1701 = vshrl.u32 %v1700, 7
    %v1702 = vsub.s32 3, %v1701
    %v1703 = vrot.slane %v714, %v1702
    %v1704 = vlaneseq
    %v1705 = vshrl.u32 %v1704, 7
    %v1706 = vsub.s32 4, %v1705
    %v1707 = vrot.slane %v714, %v1706
    %v1708 = vlaneseq
    %v1709 = vshrl.u32 %v1708, 7
    %v1710 = vsub.s32 5, %v1709
    %v1711 = vrot.slane %v714, %v1710
    %v1712 = vlaneseq
    %v1713 = vshrl.u32 %v1712, 7
    %v1714 = vsub.s32 6, %v1713
    %v1715 = vrot.slane %v714, %v1714
    %v1716 = vlaneseq
    %v1717 = vshrl.u32 %v1716, 7
    %v1718 = vsub.s32 7, %v1717
    %v1719 = vrot.slane %v714, %v1718
    %v1720 = vlaneseq
    %v1721 = vshrl.u32 %v1720, 7
    %v1722 = vsub.s32 0, %v1721
    %v1723 = vrot.slane %v719, %v1722
    %v1724 = vlaneseq
    %v1725 = vshrl.u32 %v1724, 7
    %v1726 = vsub.s32 1, %v1725
    %v1727 = vrot.slane %v719, %v1726
    %v1728 = vlaneseq
    %v1729 = vshrl.u32 %v1728, 7
    %v1730 = vsub.s32 2, %v1729
    %v1731 = vrot.slane %v719, %v1730
    %v1732 = vlaneseq
    %v1733 = vshrl.u32 %v1732, 7
    %v1734 = vsub.s32 3, %v1733
    %v1735 = vrot.slane %v719, %v1734
    %v1736 = vlaneseq
    %v1737 = vshrl.u32 %v1736, 7
    %v1738 = vsub.s32 4, %v1737
    %v1739 = vrot.slane %v719, %v1738
    %v1740 = vlaneseq
    %v1741 = vshrl.u32 %v1740, 7
    %v1742 = vsub.s32 5, %v1741
    %v1743 = vrot.slane %v719, %v1742
    %v1744 = vlaneseq
    %v1745 = vshrl.u32 %v1744, 7
    %v1746 = vsub.s32 6, %v1745
    %v1747 = vrot.slane %v719, %v1746
    %v1748 = vlaneseq
    %v1749 = vshrl.u32 %v1748, 7
    %v1750 = vsub.s32 7, %v1749
    %v1751 = vrot.slane %v719, %v1750
    %v1752 = vlaneseq
    %v1753 = vshrl.u32 %v1752, 7
    %v1754 = vsub.s32 0, %v1753
    %v1755 = vrot.slane %v724, %v1754
    %v1756 = vlaneseq
    %v1757 = vshrl.u32 %v1756, 7
    %v1758 = vsub.s32 1, %v1757
    %v1759 = vrot.slane %v724, %v1758
    %v1760 = vlaneseq
    %v1761 = vshrl.u32 %v1760, 7
    %v1762 = vsub.s32 2, %v1761
    %v1763 = vrot.slane %v724, %v1762
    %v1764 = vlaneseq
    %v1765 = vshrl.u32 %v1764, 7
    %v1766 = vsub.s32 3, %v1765
    %v1767 = vrot.slane %v724, %v1766
    %v1768 = vlaneseq
    %v1769 = vshrl.u32 %v1768, 7
    %v1770 = vsub.s32 4, %v1769
    %v1771 = vrot.slane %v724, %v1770
    %v1772 = vlaneseq
    %v1773 = vshrl.u32 %v1772, 7
    %v1774 = vsub.s32 5, %v1773
    %v1775 = vrot.slane %v724, %v1774
    %v1776 = vlaneseq
    %v1777 = vshrl.u32 %v1776, 7
    %v1778 = vsub.s32 6, %v1777
    %v1779 = vrot.slane %v724, %v1778
    %v1780 = vlaneseq
    %v1781 = vshrl.u32 %v1780, 7
    %v1782 = vsub.s32 7, %v1781
    %v1783 = vrot.slane %v724, %v1782
    %v1784 = vlaneseq
    %v1785 = vshrl.u32 %v1784, 7
    %v1786 = vsub.s32 0, %v1785
    %v1787 = vrot.slane %v729, %v1786
    %v1788 = vlaneseq
    %v1789 = vshrl.u32 %v1788, 7
    %v1790 = vsub.s32 1, %v1789
    %v1791 = vrot.slane %v729, %v1790
    %v1792 = vlaneseq
    %v1793 = vshrl.u32 %v1792, 7
    %v1794 = vsub.s32 2, %v1793
    %v1795 = vrot.slane %v729, %v1794
    %v1796 = vlaneseq
    %v1797 = vshrl.u32 %v1796, 7
    %v1798 = vsub.s32 3, %v1797
    %v1799 = vrot.slane %v729, %v1798
    %v1800 = vlaneseq
    %v1801 = vshrl.u32 %v1800, 7
    %v1802 = vsub.s32 4, %v1801
    %v1803 = vrot.slane %v729, %v1802
    %v1804 = vlaneseq
    %v1805 = vshrl.u32 %v1804, 7
    %v1806 = vsub.s32 5, %v1805
    %v1807 = vrot.slane %v729, %v1806
    %v1808 = vlaneseq
    %v1809 = vshrl.u32 %v1808, 7
    %v1810 = vsub.s32 6, %v1809
    %v1811 = vrot.slane %v729, %v1810
    %v1812 = vlaneseq
    %v1813 = vshrl.u32 %v1812, 7
    %v1814 = vsub.s32 7, %v1813
    %v1815 = vrot.slane %v729, %v1814
    %v1816 = vlaneseq
    %v1817 = vshrl.u32 %v1816, 7
    %v1818 = vsub.s32 0, %v1817
    %v1819 = vrot.slane %v734, %v1818
    %v1820 = vlaneseq
    %v1821 = vshrl.u32 %v1820, 7
    %v1822 = vsub.s32 1, %v1821
    %v1823 = vrot.slane %v734, %v1822
    %v1824 = vlaneseq
    %v1825 = vshrl.u32 %v1824, 7
    %v1826 = vsub.s32 2, %v1825
    %v1827 = vrot.slane %v734, %v1826
    %v1828 = vlaneseq
    %v1829 = vshrl.u32 %v1828, 7
    %v1830 = vsub.s32 3, %v1829
    %v1831 = vrot.slane %v734, %v1830
    %v1832 = vlaneseq
    %v1833 = vshrl.u32 %v1832, 7
    %v1834 = vsub.s32 4, %v1833
    %v1835 = vrot.slane %v734, %v1834
    %v1836 = vlaneseq
    %v1837 = vshrl.u32 %v1836, 7
    %v1838 = vsub.s32 5, %v1837
    %v1839 = vrot.slane %v734, %v1838
    %v1840 = vlaneseq
    %v1841 = vshrl.u32 %v1840, 7
    %v1842 = vsub.s32 6, %v1841
    %v1843 = vrot.slane %v734, %v1842
    %v1844 = vlaneseq
    %v1845 = vshrl.u32 %v1844, 7
    %v1846 = vsub.s32 7, %v1845
    %v1847 = vrot.slane %v734, %v1846
    %v1848 = vlaneseq
    %v1849 = vshrl.u32 %v1848, 7
    %v1850 = vsub.s32 0, %v1849
    %v1851 = vrot.slane %v739, %v1850
    %v1852 = vlaneseq
    %v1853 = vshrl.u32 %v1852, 7
    %v1854 = vsub.s32 1, %v1853
    %v1855 = vrot.slane %v739, %v1854
    %v1856 = vlaneseq
    %v1857 = vshrl.u32 %v1856, 7
    %v1858 = vsub.s32 2, %v1857
    %v1859 = vrot.slane %v739, %v1858
    %v1860 = vlaneseq
    %v1861 = vshrl.u32 %v1860, 7
    %v1862 = vsub.s32 3, %v1861
    %v1863 = vrot.slane %v739, %v1862
    %v1864 = vlaneseq
    %v1865 = vshrl.u32 %v1864, 7
    %v1866 = vsub.s32 4, %v1865
    %v1867 = vrot.slane %v739, %v1866
    %v1868 = vlaneseq
    %v1869 = vshrl.u32 %v1868, 7
    %v1870 = vsub.s32 5, %v1869
    %v1871 = vrot.slane %v739, %v1870
    %v1872 = vlaneseq
    %v1873 = vshrl.u32 %v1872, 7
    %v1874 = vsub.s32 6, %v1873
    %v1875 = vrot.slane %v739, %v1874
    %v1876 = vlaneseq
    %v1877 = vshrl.u32 %v1876, 7
    %v1878 = vsub.s32 7, %v1877
    %v1879 = vrot.slane %v739, %v1878
    %v1880 = vlaneseq
    %v1881 = vshrl.u32 %v1880, 7
    %v1882 = vsub.s32 0, %v1881
    %v1883 = vrot.slane %v744, %v1882
    %v1884 = vlaneseq
    %v1885 = vshrl.u32 %v1884, 7
    %v1886 = vsub.s32 1, %v1885
    %v1887 = vrot.slane %v744, %v1886
    %v1888 = vlaneseq
    %v1889 = vshrl.u32 %v1888, 7
    %v1890 = vsub.s32 2, %v1889
    %v1891 = vrot.slane %v744, %v1890
    %v1892 = vlaneseq
    %v1893 = vshrl.u32 %v1892, 7
    %v1894 = vsub.s32 3, %v1893
    %v1895 = vrot.slane %v744, %v1894
    %v1896 = vlaneseq
    %v1897 = vshrl.u32 %v1896, 7
    %v1898 = vsub.s32 4, %v1897
    %v1899 = vrot.slane %v744, %v1898
    %v1900 = vlaneseq
    %v1901 = vshrl.u32 %v1900, 7
    %v1902 = vsub.s32 5, %v1901
    %v1903 = vrot.slane %v744, %v1902
    %v1904 = vlaneseq
    %v1905 = vshrl.u32 %v1904, 7
    %v1906 = vsub.s32 6, %v1905
    %v1907 = vrot.slane %v744, %v1906
    %v1908 = vlaneseq
    %v1909 = vshrl.u32 %v1908, 7
    %v1910 = vsub.s32 7, %v1909
    %v1911 = vrot.slane %v744, %v1910
    %v1912 = vlaneseq
    %v1913 = vshrl.u32 %v1912, 7
    %v1914 = vsub.s32 0, %v1913
    %v1915 = vrot.slane %v749, %v1914
    %v1916 = vlaneseq
    %v1917 = vshrl.u32 %v1916, 7
    %v1918 = vsub.s32 1, %v1917
    %v1919 = vrot.slane %v749, %v1918
    %v1920 = vlaneseq
    %v1921 = vshrl.u32 %v1920, 7
    %v1922 = vsub.s32 2, %v1921
    %v1923 = vrot.slane %v749, %v1922
    %v1924 = vlaneseq
    %v1925 = vshrl.u32 %v1924, 7
    %v1926 = vsub.s32 3, %v1925
    %v1927 = vrot.slane %v749, %v1926
    %v1928 = vlaneseq
    %v1929 = vshrl.u32 %v1928, 7
    %v1930 = vsub.s32 4, %v1929
    %v1931 = vrot.slane %v749, %v1930
    %v1932 = vlaneseq
    %v1933 = vshrl.u32 %v1932, 7
    %v1934 = vsub.s32 5, %v1933
    %v1935 = vrot.slane %v749, %v1934
    %v1936 = vlaneseq
    %v1937 = vshrl.u32 %v1936, 7
    %v1938 = vsub.s32 6, %v1937
    %v1939 = vrot.slane %v749, %v1938
    %v1940 = vlaneseq
    %v1941 = vshrl.u32 %v1940, 7
    %v1942 = vsub.s32 7, %v1941
    %v1943 = vrot.slane %v749, %v1942
    %v1944 = vlaneseq
    %v1945 = vshrl.u32 %v1944, 7
    %v1946 = vsub.s32 0, %v1945
    %v1947 = vrot.slane %v754, %v1946
    %v1948 = vlaneseq
    %v1949 = vshrl.u32 %v1948, 7
    %v1950 = vsub.s32 1, %v1949
    %v1951 = vrot.slane %v754, %v1950
    %v1952 = vlaneseq
    %v1953 = vshrl.u32 %v1952, 7
    %v1954 = vsub.s32 2, %v1953
    %v1955 = vrot.slane %v754, %v1954
    %v1956 = vlaneseq
    %v1957 = vshrl.u32 %v1956, 7
    %v1958 = vsub.s32 3, %v1957
    %v1959 = vrot.slane %v754, %v1958
    %v1960 = vlaneseq
    %v1961 = vshrl.u32 %v1960, 7
    %v1962 = vsub.s32 4, %v1961
    %v1963 = vrot.slane %v754, %v1962
    %v1964 = vlaneseq
    %v1965 = vshrl.u32 %v1964, 7
    %v1966 = vsub.s32 5, %v1965
    %v1967 = vrot.slane %v754, %v1966
    %v1968 = vlaneseq
    %v1969 = vshrl.u32 %v1968, 7
    %v1970 = vsub.s32 6, %v1969
    %v1971 = vrot.slane %v754, %v1970
    %v1972 = vlaneseq
    %v1973 = vshrl.u32 %v1972, 7
    %v1974 = vsub.s32 7, %v1973
    %v1975 = vrot.slane %v754, %v1974
    %v1976 = vlaneseq
    %v1977 = vshrl.u32 %v1976, 7
    %v1978 = vsub.s32 0, %v1977
    %v1979 = vrot.slane %v759, %v1978
    %v1980 = vlaneseq
    %v1981 = vshrl.u32 %v1980, 7
    %v1982 = vsub.s32 1, %v1981
    %v1983 = vrot.slane %v759, %v1982
    %v1984 = vlaneseq
    %v1985 = vshrl.u32 %v1984, 7
    %v1986 = vsub.s32 2, %v1985
    %v1987 = vrot.slane %v759, %v1986
    %v1988 = vlaneseq
    %v1989 = vshrl.u32 %v1988, 7
    %v1990 = vsub.s32 3, %v1989
    %v1991 = vrot.slane %v759, %v1990
    %v1992 = vlaneseq
    %v1993 = vshrl.u32 %v1992, 7
    %v1994 = vsub.s32 4, %v1993
    %v1995 = vrot.slane %v759, %v1994
    %v1996 = vlaneseq
    %v1997 = vshrl.u32 %v1996, 7
    %v1998 = vsub.s32 5, %v1997
    %v1999 = vrot.slane %v759, %v1998
    %v2000 = vlaneseq
    %v2001 = vshrl.u32 %v2000, 7
    %v2002 = vsub.s32 6, %v2001
    %v2003 = vrot.slane %v759, %v2002
    %v2004 = vlaneseq
    %v2005 = vshrl.u32 %v2004, 7
    %v2006 = vsub.s32 7, %v2005
    %v2007 = vrot.slane %v759, %v2006
    %v2008 = vlaneseq
    %v2009 = vshrl.u32 %v2008, 7
    %v2010 = vsub.s32 0, %v2009
    %v2011 = vrot.slane %v764, %v2010
    %v2012 = vlaneseq
    %v2013 = vshrl.u32 %v2012, 7
    %v2014 = vsub.s32 1, %v2013
    %v2015 = vrot.slane %v764, %v2014
    %v2016 = vlaneseq
    %v2017 = vshrl.u32 %v2016, 7
    %v2018 = vsub.s32 2, %v2017
    %v2019 = vrot.slane %v764, %v2018
    %v2020 = vlaneseq
    %v2021 = vshrl.u32 %v2020, 7
    %v2022 = vsub.s32 3, %v2021
    %v2023 = vrot.slane %v764, %v2022
    %v2024 = vlaneseq
    %v2025 = vshrl.u32 %v2024, 7
    %v2026 = vsub.s32 4, %v2025
    %v2027 = vrot.slane %v764, %v2026
    %v2028 = vlaneseq
    %v2029 = vshrl.u32 %v2028, 7
    %v2030 = vsub.s32 5, %v2029
    %v2031 = vrot.slane %v764, %v2030
    %v2032 = vlaneseq
    %v2033 = vshrl.u32 %v2032, 7
    %v2034 = vsub.s32 6, %v2033
    %v2035 = vrot.slane %v764, %v2034
    %v2036 = vlaneseq
    %v2037 = vshrl.u32 %v2036, 7
    %v2038 = vsub.s32 7, %v2037
    %v2039 = vrot.slane %v764, %v2038
    %v2040 = vlaneseq
    %v2041 = vshrl.u32 %v2040, 7
    %v2042 = vsub.s32 0, %v2041
    %v2043 = vrot.slane %v769, %v2042
    %v2044 = vlaneseq
    %v2045 = vshrl.u32 %v2044, 7
    %v2046 = vsub.s32 1, %v2045
    %v2047 = vrot.slane %v769, %v2046
    %v2048 = vlaneseq
    %v2049 = vshrl.u32 %v2048, 7
    %v2050 = vsub.s32 2, %v2049
    %v2051 = vrot.slane %v769, %v2050
    %v2052 = vlaneseq
    %v2053 = vshrl.u32 %v2052, 7
    %v2054 = vsub.s32 3, %v2053
    %v2055 = vrot.slane %v769, %v2054
    %v2056 = vlaneseq
    %v2057 = vshrl.u32 %v2056, 7
    %v2058 = vsub.s32 4, %v2057
    %v2059 = vrot.slane %v769, %v2058
    %v2060 = vlaneseq
    %v2061 = vshrl.u32 %v2060, 7
    %v2062 = vsub.s32 5, %v2061
    %v2063 = vrot.slane %v769, %v2062
    %v2064 = vlaneseq
    %v2065 = vshrl.u32 %v2064, 7
    %v2066 = vsub.s32 6, %v2065
    %v2067 = vrot.slane %v769, %v2066
    %v2068 = vlaneseq
    %v2069 = vshrl.u32 %v2068, 7
    %v2070 = vsub.s32 7, %v2069
    %v2071 = vrot.slane %v769, %v2070
    %v2072 = vlaneseq
    %v2073 = vshrl.u32 %v2072, 7
    %v2074 = vsub.s32 0, %v2073
    %v2075 = vrot.slane %v774, %v2074
    %v2076 = vlaneseq
    %v2077 = vshrl.u32 %v2076, 7
    %v2078 = vsub.s32 1, %v2077
    %v2079 = vrot.slane %v774, %v2078
    %v2080 = vlaneseq
    %v2081 = vshrl.u32 %v2080, 7
    %v2082 = vsub.s32 2, %v2081
    %v2083 = vrot.slane %v774, %v2082
    %v2084 = vlaneseq
    %v2085 = vshrl.u32 %v2084, 7
    %v2086 = vsub.s32 3, %v2085
    %v2087 = vrot.slane %v774, %v2086
    %v2088 = vlaneseq
    %v2089 = vshrl.u32 %v2088, 7
    %v2090 = vsub.s32 4, %v2089
    %v2091 = vrot.slane %v774, %v2090
    %v2092 = vlaneseq
    %v2093 = vshrl.u32 %v2092, 7
    %v2094 = vsub.s32 5, %v2093
    %v2095 = vrot.slane %v774, %v2094
    %v2096 = vlaneseq
    %v2097 = vshrl.u32 %v2096, 7
    %v2098 = vsub.s32 6, %v2097
    %v2099 = vrot.slane %v774, %v2098
    %v2100 = vlaneseq
    %v2101 = vshrl.u32 %v2100, 7
    %v2102 = vsub.s32 7, %v2101
    %v2103 = vrot.slane %v774, %v2102
    %v2104 = vlaneseq
    %v2105 = vshrl.u32 %v2104, 7
    %v2106 = vsub.s32 0, %v2105
    %v2107 = vrot.slane %v779, %v2106
    %v2108 = vlaneseq
    %v2109 = vshrl.u32 %v2108, 7
    %v2110 = vsub.s32 1, %v2109
    %v2111 = vrot.slane %v779, %v2110
    %v2112 = vlaneseq
    %v2113 = vshrl.u32 %v2112, 7
    %v2114 = vsub.s32 2, %v2113
    %v2115 = vrot.slane %v779, %v2114
    %v2116 = vlaneseq
    %v2117 = vshrl.u32 %v2116, 7
    %v2118 = vsub.s32 3, %v2117
    %v2119 = vrot.slane %v779, %v2118
    %v2120 = vlaneseq
    %v2121 = vshrl.u32 %v2120, 7
    %v2122 = vsub.s32 4, %v2121
    %v2123 = vrot.slane %v779, %v2122
    %v2124 = vlaneseq
    %v2125 = vshrl.u32 %v2124, 7
    %v2126 = vsub.s32 5, %v2125
    %v2127 = vrot.slane %v779, %v2126
    %v2128 = vlaneseq
    %v2129 = vshrl.u32 %v2128, 7
    %v2130 = vsub.s32 6, %v2129
    %v2131 = vrot.slane %v779, %v2130
    %v2132 = vlaneseq
    %v2133 = vshrl.u32 %v2132, 7
    %v2134 = vsub.s32 7, %v2133
    %v2135 = vrot.slane %v779, %v2134
    %v2136 = vlaneseq
    %v2137 = vshrl.u32 %v2136, 7
    %v2138 = vsub.s32 0, %v2137
    %v2139 = vrot.slane %v784, %v2138
    %v2140 = vlaneseq
    %v2141 = vshrl.u32 %v2140, 7
    %v2142 = vsub.s32 1, %v2141
    %v2143 = vrot.slane %v784, %v2142
    %v2144 = vlaneseq
    %v2145 = vshrl.u32 %v2144, 7
    %v2146 = vsub.s32 2, %v2145
    %v2147 = vrot.slane %v784, %v2146
    %v2148 = vlaneseq
    %v2149 = vshrl.u32 %v2148, 7
    %v2150 = vsub.s32 3, %v2149
    %v2151 = vrot.slane %v784, %v2150
    %v2152 = vlaneseq
    %v2153 = vshrl.u32 %v2152, 7
    %v2154 = vsub.s32 4, %v2153
    %v2155 = vrot.slane %v784, %v2154
    %v2156 = vlaneseq
    %v2157 = vshrl.u32 %v2156, 7
    %v2158 = vsub.s32 5, %v2157
    %v2159 = vrot.slane %v784, %v2158
    %v2160 = vlaneseq
    %v2161 = vshrl.u32 %v2160, 7
    %v2162 = vsub.s32 6, %v2161
    %v2163 = vrot.slane %v784, %v2162
    %v2164 = vlaneseq
    %v2165 = vshrl.u32 %v2164, 7
    %v2166 = vsub.s32 7, %v2165
    %v2167 = vrot.slane %v784, %v2166
    %v2168 = vlaneseq
    %v2169 = vshrl.u32 %v2168, 7
    %v2170 = vsub.s32 0, %v2169
    %v2171 = vrot.slane %v789, %v2170
    %v2172 = vlaneseq
    %v2173 = vshrl.u32 %v2172, 7
    %v2174 = vsub.s32 1, %v2173
    %v2175 = vrot.slane %v789, %v2174
    %v2176 = vlaneseq
    %v2177 = vshrl.u32 %v2176, 7
    %v2178 = vsub.s32 2, %v2177
    %v2179 = vrot.slane %v789, %v2178
    %v2180 = vlaneseq
    %v2181 = vshrl.u32 %v2180, 7
    %v2182 = vsub.s32 3, %v2181
    %v2183 = vrot.slane %v789, %v2182
    %v2184 = vlaneseq
    %v2185 = vshrl.u32 %v2184, 7
    %v2186 = vsub.s32 4, %v2185
    %v2187 = vrot.slane %v789, %v2186
    %v2188 = vlaneseq
    %v2189 = vshrl.u32 %v2188, 7
    %v2190 = vsub.s32 5, %v2189
    %v2191 = vrot.slane %v789, %v2190
    %v2192 = vlaneseq
    %v2193 = vshrl.u32 %v2192, 7
    %v2194 = vsub.s32 6, %v2193
    %v2195 = vrot.slane %v789, %v2194
    %v2196 = vlaneseq
    %v2197 = vshrl.u32 %v2196, 7
    %v2198 = vsub.s32 7, %v2197
    %v2199 = vrot.slane %v789, %v2198
    %v2200 = vlaneseq
    %v2201 = vshrl.u32 %v2200, 7
    %v2202 = vsub.s32 0, %v2201
    %v2203 = vrot.slane %v794, %v2202
    %v2204 = vlaneseq
    %v2205 = vshrl.u32 %v2204, 7
    %v2206 = vsub.s32 1, %v2205
    %v2207 = vrot.slane %v794, %v2206
    %v2208 = vlaneseq
    %v2209 = vshrl.u32 %v2208, 7
    %v2210 = vsub.s32 2, %v2209
    %v2211 = vrot.slane %v794, %v2210
    %v2212 = vlaneseq
    %v2213 = vshrl.u32 %v2212, 7
    %v2214 = vsub.s32 3, %v2213
    %v2215 = vrot.slane %v794, %v2214
    %v2216 = vlaneseq
    %v2217 = vshrl.u32 %v2216, 7
    %v2218 = vsub.s32 4, %v2217
    %v2219 = vrot.slane %v794, %v2218
    %v2220 = vlaneseq
    %v2221 = vshrl.u32 %v2220, 7
    %v2222 = vsub.s32 5, %v2221
    %v2223 = vrot.slane %v794, %v2222
    %v2224 = vlaneseq
    %v2225 = vshrl.u32 %v2224, 7
    %v2226 = vsub.s32 6, %v2225
    %v2227 = vrot.slane %v794, %v2226
    %v2228 = vlaneseq
    %v2229 = vshrl.u32 %v2228, 7
    %v2230 = vsub.s32 7, %v2229
    %v2231 = vrot.slane %v794, %v2230
    %v2232 = vlaneseq
    %v2233 = vshrl.u32 %v2232, 7
    %v2234 = vsub.s32 0, %v2233
    %v2235 = vrot.slane %v799, %v2234
    %v2236 = vlaneseq
    %v2237 = vshrl.u32 %v2236, 7
    %v2238 = vsub.s32 1, %v2237
    %v2239 = vrot.slane %v799, %v2238
    %v2240 = vlaneseq
    %v2241 = vshrl.u32 %v2240, 7
    %v2242 = vsub.s32 2, %v2241
    %v2243 = vrot.slane %v799, %v2242
    %v2244 = vlaneseq
    %v2245 = vshrl.u32 %v2244, 7
    %v2246 = vsub.s32 3, %v2245
    %v2247 = vrot.slane %v799, %v2246
    %v2248 = vlaneseq
    %v2249 = vshrl.u32 %v2248, 7
    %v2250 = vsub.s32 4, %v2249
    %v2251 = vrot.slane %v799, %v2250
    %v2252 = vlaneseq
    %v2253 = vshrl.u32 %v2252, 7
    %v2254 = vsub.s32 5, %v2253
    %v2255 = vrot.slane %v799, %v2254
    %v2256 = vlaneseq
    %v2257 = vshrl.u32 %v2256, 7
    %v2258 = vsub.s32 6, %v2257
    %v2259 = vrot.slane %v799, %v2258
    %v2260 = vlaneseq
    %v2261 = vshrl.u32 %v2260, 7
    %v2262 = vsub.s32 7, %v2261
    %v2263 = vrot.slane %v799, %v2262
    %v2264 = vlaneseq
    %v2265 = vshrl.u32 %v2264, 7
    %v2266 = vsub.s32 0, %v2265
    %v2267 = vrot.slane %v804, %v2266
    %v2268 = vlaneseq
    %v2269 = vshrl.u32 %v2268, 7
    %v2270 = vsub.s32 1, %v2269
    %v2271 = vrot.slane %v804, %v2270
    %v2272 = vlaneseq
    %v2273 = vshrl.u32 %v2272, 7
    %v2274 = vsub.s32 2, %v2273
    %v2275 = vrot.slane %v804, %v2274
    %v2276 = vlaneseq
    %v2277 = vshrl.u32 %v2276, 7
    %v2278 = vsub.s32 3, %v2277
    %v2279 = vrot.slane %v804, %v2278
    %v2280 = vlaneseq
    %v2281 = vshrl.u32 %v2280, 7
    %v2282 = vsub.s32 4, %v2281
    %v2283 = vrot.slane %v804, %v2282
    %v2284 = vlaneseq
    %v2285 = vshrl.u32 %v2284, 7
    %v2286 = vsub.s32 5, %v2285
    %v2287 = vrot.slane %v804, %v2286
    %v2288 = vlaneseq
    %v2289 = vshrl.u32 %v2288, 7
    %v2290 = vsub.s32 6, %v2289
    %v2291 = vrot.slane %v804, %v2290
    %v2292 = vlaneseq
    %v2293 = vshrl.u32 %v2292, 7
    %v2294 = vsub.s32 7, %v2293
    %v2295 = vrot.slane %v804, %v2294
    %v2296 = vlaneseq
    %v2297 = vshrl.u32 %v2296, 7
    %v2298 = vsub.s32 0, %v2297
    %v2299 = vrot.slane %v809, %v2298
    %v2300 = vlaneseq
    %v2301 = vshrl.u32 %v2300, 7
    %v2302 = vsub.s32 1, %v2301
    %v2303 = vrot.slane %v809, %v2302
    %v2304 = vlaneseq
    %v2305 = vshrl.u32 %v2304, 7
    %v2306 = vsub.s32 2, %v2305
    %v2307 = vrot.slane %v809, %v2306
    %v2308 = vlaneseq
    %v2309 = vshrl.u32 %v2308, 7
    %v2310 = vsub.s32 3, %v2309
    %v2311 = vrot.slane %v809, %v2310
    %v2312 = vlaneseq
    %v2313 = vshrl.u32 %v2312, 7
    %v2314 = vsub.s32 4, %v2313
    %v2315 = vrot.slane %v809, %v2314
    %v2316 = vlaneseq
    %v2317 = vshrl.u32 %v2316, 7
    %v2318 = vsub.s32 5, %v2317
    %v2319 = vrot.slane %v809, %v2318
    %v2320 = vlaneseq
    %v2321 = vshrl.u32 %v2320, 7
    %v2322 = vsub.s32 6, %v2321
    %v2323 = vrot.slane %v809, %v2322
    %v2324 = vlaneseq
    %v2325 = vshrl.u32 %v2324, 7
    %v2326 = vsub.s32 7, %v2325
    %v2327 = vrot.slane %v809, %v2326
    %v2328 = vlaneseq
    %v2329 = vshrl.u32 %v2328, 7
    %v2330 = vsub.s32 0, %v2329
    %v2331 = vrot.slane %v814, %v2330
    %v2332 = vlaneseq
    %v2333 = vshrl.u32 %v2332, 7
    %v2334 = vsub.s32 1, %v2333
    %v2335 = vrot.slane %v814, %v2334
    %v2336 = vlaneseq
    %v2337 = vshrl.u32 %v2336, 7
    %v2338 = vsub.s32 2, %v2337
    %v2339 = vrot.slane %v814, %v2338
    %v2340 = vlaneseq
    %v2341 = vshrl.u32 %v2340, 7
    %v2342 = vsub.s32 3, %v2341
    %v2343 = vrot.slane %v814, %v2342
    %v2344 = vlaneseq
    %v2345 = vshrl.u32 %v2344, 7
    %v2346 = vsub.s32 4, %v2345
    %v2347 = vrot.slane %v814, %v2346
    %v2348 = vlaneseq
    %v2349 = vshrl.u32 %v2348, 7
    %v2350 = vsub.s32 5, %v2349
    %v2351 = vrot.slane %v814, %v2350
    %v2352 = vlaneseq
    %v2353 = vshrl.u32 %v2352, 7
    %v2354 = vsub.s32 6, %v2353
    %v2355 = vrot.slane %v814, %v2354
    %v2356 = vlaneseq
    %v2357 = vshrl.u32 %v2356, 7
    %v2358 = vsub.s32 7, %v2357
    %v2359 = vrot.slane %v814, %v2358
    %v2360 = vlaneseq
    %v2361 = vshrl.u32 %v2360, 7
    %v2362 = vsub.s32 0, %v2361
    %v2363 = vrot.slane %v819, %v2362
    %v2364 = vlaneseq
    %v2365 = vshrl.u32 %v2364, 7
    %v2366 = vsub.s32 1, %v2365
    %v2367 = vrot.slane %v819, %v2366
    %v2368 = vlaneseq
    %v2369 = vshrl.u32 %v2368, 7
    %v2370 = vsub.s32 2, %v2369
    %v2371 = vrot.slane %v819, %v2370
    %v2372 = vlaneseq
    %v2373 = vshrl.u32 %v2372, 7
    %v2374 = vsub.s32 3, %v2373
    %v2375 = vrot.slane %v819, %v2374
    %v2376 = vlaneseq
    %v2377 = vshrl.u32 %v2376, 7
    %v2378 = vsub.s32 4, %v2377
    %v2379 = vrot.slane %v819, %v2378
    %v2380 = vlaneseq
    %v2381 = vshrl.u32 %v2380, 7
    %v2382 = vsub.s32 5, %v2381
    %v2383 = vrot.slane %v819, %v2382
    %v2384 = vlaneseq
    %v2385 = vshrl.u32 %v2384, 7
    %v2386 = vsub.s32 6, %v2385
    %v2387 = vrot.slane %v819, %v2386
    %v2388 = vlaneseq
    %v2389 = vshrl.u32 %v2388, 7
    %v2390 = vsub.s32 7, %v2389
    %v2391 = vrot.slane %v819, %v2390
    %v2392 = vlaneseq
    %v2393 = vshrl.u32 %v2392, 7
    %v2394 = vsub.s32 0, %v2393
    %v2395 = vrot.slane %v824, %v2394
    %v2396 = vlaneseq
    %v2397 = vshrl.u32 %v2396, 7
    %v2398 = vsub.s32 1, %v2397
    %v2399 = vrot.slane %v824, %v2398
    %v2400 = vlaneseq
    %v2401 = vshrl.u32 %v2400, 7
    %v2402 = vsub.s32 2, %v2401
    %v2403 = vrot.slane %v824, %v2402
    %v2404 = vlaneseq
    %v2405 = vshrl.u32 %v2404, 7
    %v2406 = vsub.s32 3, %v2405
    %v2407 = vrot.slane %v824, %v2406
    %v2408 = vlaneseq
    %v2409 = vshrl.u32 %v2408, 7
    %v2410 = vsub.s32 4, %v2409
    %v2411 = vrot.slane %v824, %v2410
    %v2412 = vlaneseq
    %v2413 = vshrl.u32 %v2412, 7
    %v2414 = vsub.s32 5, %v2413
    %v2415 = vrot.slane %v824, %v2414
    %v2416 = vlaneseq
    %v2417 = vshrl.u32 %v2416, 7
    %v2418 = vsub.s32 6, %v2417
    %v2419 = vrot.slane %v824, %v2418
    %v2420 = vlaneseq
    %v2421 = vshrl.u32 %v2420, 7
    %v2422 = vsub.s32 7, %v2421
    %v2423 = vrot.slane %v824, %v2422
    %v2424 = vlaneseq
    %v2425 = vshrl.u32 %v2424, 7
    %v2426 = vsub.s32 0, %v2425
    %v2427 = vrot.slane %v829, %v2426
    %v2428 = vlaneseq
    %v2429 = vshrl.u32 %v2428, 7
    %v2430 = vsub.s32 1, %v2429
    %v2431 = vrot.slane %v829, %v2430
    %v2432 = vlaneseq
    %v2433 = vshrl.u32 %v2432, 7
    %v2434 = vsub.s32 2, %v2433
    %v2435 = vrot.slane %v829, %v2434
    %v2436 = vlaneseq
    %v2437 = vshrl.u32 %v2436, 7
    %v2438 = vsub.s32 3, %v2437
    %v2439 = vrot.slane %v829, %v2438
    %v2440 = vlaneseq
    %v2441 = vshrl.u32 %v2440, 7
    %v2442 = vsub.s32 4, %v2441
    %v2443 = vrot.slane %v829, %v2442
    %v2444 = vlaneseq
    %v2445 = vshrl.u32 %v2444, 7
    %v2446 = vsub.s32 5, %v2445
    %v2447 = vrot.slane %v829, %v2446
    %v2448 = vlaneseq
    %v2449 = vshrl.u32 %v2448, 7
    %v2450 = vsub.s32 6, %v2449
    %v2451 = vrot.slane %v829, %v2450
    %v2452 = vlaneseq
    %v2453 = vshrl.u32 %v2452, 7
    %v2454 = vsub.s32 7, %v2453
    %v2455 = vrot.slane %v829, %v2454
    %v2456 = vlaneseq
    %v2457 = vshrl.u32 %v2456, 7
    %v2458 = vsub.s32 0, %v2457
    %v2459 = vrot.slane %v834, %v2458
    %v2460 = vlaneseq
    %v2461 = vshrl.u32 %v2460, 7
    %v2462 = vsub.s32 1, %v2461
    %v2463 = vrot.slane %v834, %v2462
    %v2464 = vlaneseq
    %v2465 = vshrl.u32 %v2464, 7
    %v2466 = vsub.s32 2, %v2465
    %v2467 = vrot.slane %v834, %v2466
    %v2468 = vlaneseq
    %v2469 = vshrl.u32 %v2468, 7
    %v2470 = vsub.s32 3, %v2469
    %v2471 = vrot.slane %v834, %v2470
    %v2472 = vlaneseq
    %v2473 = vshrl.u32 %v2472, 7
    %v2474 = vsub.s32 4, %v2473
    %v2475 = vrot.slane %v834, %v2474
    %v2476 = vlaneseq
    %v2477 = vshrl.u32 %v2476, 7
    %v2478 = vsub.s32 5, %v2477
    %v2479 = vrot.slane %v834, %v2478
    %v2480 = vlaneseq
    %v2481 = vshrl.u32 %v2480, 7
    %v2482 = vsub.s32 6, %v2481
    %v2483 = vrot.slane %v834, %v2482
    %v2484 = vlaneseq
    %v2485 = vshrl.u32 %v2484, 7
    %v2486 = vsub.s32 7, %v2485
    %v2487 = vrot.slane %v834, %v2486
    %v2488 = vlaneseq
    %v2489 = vshrl.u32 %v2488, 7
    %v2490 = vsub.s32 0, %v2489
    %v2491 = vrot.slane %v839, %v2490
    %v2492 = vlaneseq
    %v2493 = vshrl.u32 %v2492, 7
    %v2494 = vsub.s32 1, %v2493
    %v2495 = vrot.slane %v839, %v2494
    %v2496 = vlaneseq
    %v2497 = vshrl.u32 %v2496, 7
    %v2498 = vsub.s32 2, %v2497
    %v2499 = vrot.slane %v839, %v2498
    %v2500 = vlaneseq
    %v2501 = vshrl.u32 %v2500, 7
    %v2502 = vsub.s32 3, %v2501
    %v2503 = vrot.slane %v839, %v2502
    %v2504 = vlaneseq
    %v2505 = vshrl.u32 %v2504, 7
    %v2506 = vsub.s32 4, %v2505
    %v2507 = vrot.slane %v839, %v2506
    %v2508 = vlaneseq
    %v2509 = vshrl.u32 %v2508, 7
    %v2510 = vsub.s32 5, %v2509
    %v2511 = vrot.slane %v839, %v2510
    %v2512 = vlaneseq
    %v2513 = vshrl.u32 %v2512, 7
    %v2514 = vsub.s32 6, %v2513
    %v2515 = vrot.slane %v839, %v2514
    %v2516 = vlaneseq
    %v2517 = vshrl.u32 %v2516, 7
    %v2518 = vsub.s32 7, %v2517
    %v2519 = vrot.slane %v839, %v2518
    %v2520 = vlaneseq
    %v2521 = vshrl.u32 %v2520, 7
    %v2522 = vsub.s32 0, %v2521
    %v2523 = vrot.slane %v844, %v2522
    %v2524 = vlaneseq
    %v2525 = vshrl.u32 %v2524, 7
    %v2526 = vsub.s32 1, %v2525
    %v2527 = vrot.slane %v844, %v2526
    %v2528 = vlaneseq
    %v2529 = vshrl.u32 %v2528, 7
    %v2530 = vsub.s32 2, %v2529
    %v2531 = vrot.slane %v844, %v2530
    %v2532 = vlaneseq
    %v2533 = vshrl.u32 %v2532, 7
    %v2534 = vsub.s32 3, %v2533
    %v2535 = vrot.slane %v844, %v2534
    %v2536 = vlaneseq
    %v2537 = vshrl.u32 %v2536, 7
    %v2538 = vsub.s32 4, %v2537
    %v2539 = vrot.slane %v844, %v2538
    %v2540 = vlaneseq
    %v2541 = vshrl.u32 %v2540, 7
    %v2542 = vsub.s32 5, %v2541
    %v2543 = vrot.slane %v844, %v2542
    %v2544 = vlaneseq
    %v2545 = vshrl.u32 %v2544, 7
    %v2546 = vsub.s32 6, %v2545
    %v2547 = vrot.slane %v844, %v2546
    %v2548 = vlaneseq
    %v2549 = vshrl.u32 %v2548, 7
    %v2550 = vsub.s32 7, %v2549
    %v2551 = vrot.slane %v844, %v2550
    %v2552 = vlaneseq
    %v2553 = vshrl.u32 %v2552, 7
    %v2554 = vsub.s32 0, %v2553
    %v2555 = vrot.slane %v849, %v2554
    %v2556 = vlaneseq
    %v2557 = vshrl.u32 %v2556, 7
    %v2558 = vsub.s32 1, %v2557
    %v2559 = vrot.slane %v849, %v2558
    %v2560 = vlaneseq
    %v2561 = vshrl.u32 %v2560, 7
    %v2562 = vsub.s32 2, %v2561
    %v2563 = vrot.slane %v849, %v2562
    %v2564 = vlaneseq
    %v2565 = vshrl.u32 %v2564, 7
    %v2566 = vsub.s32 3, %v2565
    %v2567 = vrot.slane %v849, %v2566
    %v2568 = vlaneseq
    %v2569 = vshrl.u32 %v2568, 7
    %v2570 = vsub.s32 4, %v2569
    %v2571 = vrot.slane %v849, %v2570
    %v2572 = vlaneseq
    %v2573 = vshrl.u32 %v2572, 7
    %v2574 = vsub.s32 5, %v2573
    %v2575 = vrot.slane %v849, %v2574
    %v2576 = vlaneseq
    %v2577 = vshrl.u32 %v2576, 7
    %v2578 = vsub.s32 6, %v2577
    %v2579 = vrot.slane %v849, %v2578
    %v2580 = vlaneseq
    %v2581 = vshrl.u32 %v2580, 7
    %v2582 = vsub.s32 7, %v2581
    %v2583 = vrot.slane %v849, %v2582
    %v2584 = vlaneseq
    %v2585 = vshrl.u32 %v2584, 7
    %v2586 = vsub.s32 0, %v2585
    %v2587 = vrot.slane %v854, %v2586
    %v2588 = vlaneseq
    %v2589 = vshrl.u32 %v2588, 7
    %v2590 = vsub.s32 1, %v2589
    %v2591 = vrot.slane %v854, %v2590
    %v2592 = vlaneseq
    %v2593 = vshrl.u32 %v2592, 7
    %v2594 = vsub.s32 2, %v2593
    %v2595 = vrot.slane %v854, %v2594
    %v2596 = vlaneseq
    %v2597 = vshrl.u32 %v2596, 7
    %v2598 = vsub.s32 3, %v2597
    %v2599 = vrot.slane %v854, %v2598
    %v2600 = vlaneseq
    %v2601 = vshrl.u32 %v2600, 7
    %v2602 = vsub.s32 4, %v2601
    %v2603 = vrot.slane %v854, %v2602
    %v2604 = vlaneseq
    %v2605 = vshrl.u32 %v2604, 7
    %v2606 = vsub.s32 5, %v2605
    %v2607 = vrot.slane %v854, %v2606
    %v2608 = vlaneseq
    %v2609 = vshrl.u32 %v2608, 7
    %v2610 = vsub.s32 6, %v2609
    %v2611 = vrot.slane %v854, %v2610
    %v2612 = vlaneseq
    %v2613 = vshrl.u32 %v2612, 7
    %v2614 = vsub.s32 7, %v2613
    %v2615 = vrot.slane %v854, %v2614
    %v2616 = vlaneseq
    %v2617 = vshrl.u32 %v2616, 7
    %v2618 = vsub.s32 0, %v2617
    %v2619 = vrot.slane %v859, %v2618
    %v2620 = vlaneseq
    %v2621 = vshrl.u32 %v2620, 7
    %v2622 = vsub.s32 1, %v2621
    %v2623 = vrot.slane %v859, %v2622
    %v2624 = vlaneseq
    %v2625 = vshrl.u32 %v2624, 7
    %v2626 = vsub.s32 2, %v2625
    %v2627 = vrot.slane %v859, %v2626
    %v2628 = vlaneseq
    %v2629 = vshrl.u32 %v2628, 7
    %v2630 = vsub.s32 3, %v2629
    %v2631 = vrot.slane %v859, %v2630
    %v2632 = vlaneseq
    %v2633 = vshrl.u32 %v2632, 7
    %v2634 = vsub.s32 4, %v2633
    %v2635 = vrot.slane %v859, %v2634
    %v2636 = vlaneseq
    %v2637 = vshrl.u32 %v2636, 7
    %v2638 = vsub.s32 5, %v2637
    %v2639 = vrot.slane %v859, %v2638
    %v2640 = vlaneseq
    %v2641 = vshrl.u32 %v2640, 7
    %v2642 = vsub.s32 6, %v2641
    %v2643 = vrot.slane %v859, %v2642
    %v2644 = vlaneseq
    %v2645 = vshrl.u32 %v2644, 7
    %v2646 = vsub.s32 7, %v2645
    %v2647 = vrot.slane %v859, %v2646
    %v2648 = vlaneseq
    %v2649 = vshrl.u32 %v2648, 7
    %v2650 = vsub.s32 0, %v2649
    %v2651 = vrot.slane %v864, %v2650
    %v2652 = vlaneseq
    %v2653 = vshrl.u32 %v2652, 7
    %v2654 = vsub.s32 1, %v2653
    %v2655 = vrot.slane %v864, %v2654
    %v2656 = vlaneseq
    %v2657 = vshrl.u32 %v2656, 7
    %v2658 = vsub.s32 2, %v2657
    %v2659 = vrot.slane %v864, %v2658
    %v2660 = vlaneseq
    %v2661 = vshrl.u32 %v2660, 7
    %v2662 = vsub.s32 3, %v2661
    %v2663 = vrot.slane %v864, %v2662
    %v2664 = vlaneseq
    %v2665 = vshrl.u32 %v2664, 7
    %v2666 = vsub.s32 4, %v2665
    %v2667 = vrot.slane %v864, %v2666
    %v2668 = vlaneseq
    %v2669 = vshrl.u32 %v2668, 7
    %v2670 = vsub.s32 5, %v2669
    %v2671 = vrot.slane %v864, %v2670
    %v2672 = vlaneseq
    %v2673 = vshrl.u32 %v2672, 7
    %v2674 = vsub.s32 6, %v2673
    %v2675 = vrot.slane %v864, %v2674
    %v2676 = vlaneseq
    %v2677 = vshrl.u32 %v2676, 7
    %v2678 = vsub.s32 7, %v2677
    %v2679 = vrot.slane %v864, %v2678
    %v2680 = vlaneseq
    %v2681 = vshrl.u32 %v2680, 7
    %v2682 = vsub.s32 0, %v2681
    %v2683 = vrot.slane %v869, %v2682
    %v2684 = vlaneseq
    %v2685 = vshrl.u32 %v2684, 7
    %v2686 = vsub.s32 1, %v2685
    %v2687 = vrot.slane %v869, %v2686
    %v2688 = vlaneseq
    %v2689 = vshrl.u32 %v2688, 7
    %v2690 = vsub.s32 2, %v2689
    %v2691 = vrot.slane %v869, %v2690
    %v2692 = vlaneseq
    %v2693 = vshrl.u32 %v2692, 7
    %v2694 = vsub.s32 3, %v2693
    %v2695 = vrot.slane %v869, %v2694
    %v2696 = vlaneseq
    %v2697 = vshrl.u32 %v2696, 7
    %v2698 = vsub.s32 4, %v2697
    %v2699 = vrot.slane %v869, %v2698
    %v2700 = vlaneseq
    %v2701 = vshrl.u32 %v2700, 7
    %v2702 = vsub.s32 5, %v2701
    %v2703 = vrot.slane %v869, %v2702
    %v2704 = vlaneseq
    %v2705 = vshrl.u32 %v2704, 7
    %v2706 = vsub.s32 6, %v2705
    %v2707 = vrot.slane %v869, %v2706
    %v2708 = vlaneseq
    %v2709 = vshrl.u32 %v2708, 7
    %v2710 = vsub.s32 7, %v2709
    %v2711 = vrot.slane %v869, %v2710
    %v2712 = vlaneseq
    %v2713 = vshrl.u32 %v2712, 7
    %v2714 = vsub.s32 0, %v2713
    %v2715 = vrot.slane %v874, %v2714
    %v2716 = vlaneseq
    %v2717 = vshrl.u32 %v2716, 7
    %v2718 = vsub.s32 1, %v2717
    %v2719 = vrot.slane %v874, %v2718
    %v2720 = vlaneseq
    %v2721 = vshrl.u32 %v2720, 7
    %v2722 = vsub.s32 2, %v2721
    %v2723 = vrot.slane %v874, %v2722
    %v2724 = vlaneseq
    %v2725 = vshrl.u32 %v2724, 7
    %v2726 = vsub.s32 3, %v2725
    %v2727 = vrot.slane %v874, %v2726
    %v2728 = vlaneseq
    %v2729 = vshrl.u32 %v2728, 7
    %v2730 = vsub.s32 4, %v2729
    %v2731 = vrot.slane %v874, %v2730
    %v2732 = vlaneseq
    %v2733 = vshrl.u32 %v2732, 7
    %v2734 = vsub.s32 5, %v2733
    %v2735 = vrot.slane %v874, %v2734
    %v2736 = vlaneseq
    %v2737 = vshrl.u32 %v2736, 7
    %v2738 = vsub.s32 6, %v2737
    %v2739 = vrot.slane %v874, %v2738
    %v2740 = vlaneseq
    %v2741 = vshrl.u32 %v2740, 7
    %v2742 = vsub.s32 7, %v2741
    %v2743 = vrot.slane %v874, %v2742
    %v2744 = vlaneseq
    %v2745 = vshrl.u32 %v2744, 7
    %v2746 = vsub.s32 0, %v2745
    %v2747 = vrot.slane %v879, %v2746
    %v2748 = vlaneseq
    %v2749 = vshrl.u32 %v2748, 7
    %v2750 = vsub.s32 1, %v2749
    %v2751 = vrot.slane %v879, %v2750
    %v2752 = vlaneseq
    %v2753 = vshrl.u32 %v2752, 7
    %v2754 = vsub.s32 2, %v2753
    %v2755 = vrot.slane %v879, %v2754
    %v2756 = vlaneseq
    %v2757 = vshrl.u32 %v2756, 7
    %v2758 = vsub.s32 3, %v2757
    %v2759 = vrot.slane %v879, %v2758
    %v2760 = vlaneseq
    %v2761 = vshrl.u32 %v2760, 7
    %v2762 = vsub.s32 4, %v2761
    %v2763 = vrot.slane %v879, %v2762
    %v2764 = vlaneseq
    %v2765 = vshrl.u32 %v2764, 7
    %v2766 = vsub.s32 5, %v2765
    %v2767 = vrot.slane %v879, %v2766
    %v2768 = vlaneseq
    %v2769 = vshrl.u32 %v2768, 7
    %v2770 = vsub.s32 6, %v2769
    %v2771 = vrot.slane %v879, %v2770
    %v2772 = vlaneseq
    %v2773 = vshrl.u32 %v2772, 7
    %v2774 = vsub.s32 7, %v2773
    %v2775 = vrot.slane %v879, %v2774
    %v2776 = vlaneseq
    %v2777 = vshrl.u32 %v2776, 7
    %v2778 = vsub.s32 0, %v2777
    %v2779 = vrot.slane %v884, %v2778
    %v2780 = vlaneseq
    %v2781 = vshrl.u32 %v2780, 7
    %v2782 = vsub.s32 1, %v2781
    %v2783 = vrot.slane %v884, %v2782
    %v2784 = vlaneseq
    %v2785 = vshrl.u32 %v2784, 7
    %v2786 = vsub.s32 2, %v2785
    %v2787 = vrot.slane %v884, %v2786
    %v2788 = vlaneseq
    %v2789 = vshrl.u32 %v2788, 7
    %v2790 = vsub.s32 3, %v2789
    %v2791 = vrot.slane %v884, %v2790
    %v2792 = vlaneseq
    %v2793 = vshrl.u32 %v2792, 7
    %v2794 = vsub.s32 4, %v2793
    %v2795 = vrot.slane %v884, %v2794
    %v2796 = vlaneseq
    %v2797 = vshrl.u32 %v2796, 7
    %v2798 = vsub.s32 5, %v2797
    %v2799 = vrot.slane %v884, %v2798
    %v2800 = vlaneseq
    %v2801 = vshrl.u32 %v2800, 7
    %v2802 = vsub.s32 6, %v2801
    %v2803 = vrot.slane %v884, %v2802
    %v2804 = vlaneseq
    %v2805 = vshrl.u32 %v2804, 7
    %v2806 = vsub.s32 7, %v2805
    %v2807 = vrot.slane %v884, %v2806
    %v2808 = vlaneseq
    %v2809 = vshrl.u32 %v2808, 7
    %v2810 = vsub.s32 0, %v2809
    %v2811 = vrot.slane %v889, %v2810
    %v2812 = vlaneseq
    %v2813 = vshrl.u32 %v2812, 7
    %v2814 = vsub.s32 1, %v2813
    %v2815 = vrot.slane %v889, %v2814
    %v2816 = vlaneseq
    %v2817 = vshrl.u32 %v2816, 7
    %v2818 = vsub.s32 2, %v2817
    %v2819 = vrot.slane %v889, %v2818
    %v2820 = vlaneseq
    %v2821 = vshrl.u32 %v2820, 7
    %v2822 = vsub.s32 3, %v2821
    %v2823 = vrot.slane %v889, %v2822
    %v2824 = vlaneseq
    %v2825 = vshrl.u32 %v2824, 7
    %v2826 = vsub.s32 4, %v2825
    %v2827 = vrot.slane %v889, %v2826
    %v2828 = vlaneseq
    %v2829 = vshrl.u32 %v2828, 7
    %v2830 = vsub.s32 5, %v2829
    %v2831 = vrot.slane %v889, %v2830
    %v2832 = vlaneseq
    %v2833 = vshrl.u32 %v2832, 7
    %v2834 = vsub.s32 6, %v2833
    %v2835 = vrot.slane %v889, %v2834
    %v2836 = vlaneseq
    %v2837 = vshrl.u32 %v2836, 7
    %v2838 = vsub.s32 7, %v2837
    %v2839 = vrot.slane %v889, %v2838
    %v2840 = vlaneseq
    %v2841 = vshrl.u32 %v2840, 7
    %v2842 = vsub.s32 0, %v2841
    %v2843 = vrot.slane %v894, %v2842
    %v2844 = vlaneseq
    %v2845 = vshrl.u32 %v2844, 7
    %v2846 = vsub.s32 1, %v2845
    %v2847 = vrot.slane %v894, %v2846
    %v2848 = vlaneseq
    %v2849 = vshrl.u32 %v2848, 7
    %v2850 = vsub.s32 2, %v2849
    %v2851 = vrot.slane %v894, %v2850
    %v2852 = vlaneseq
    %v2853 = vshrl.u32 %v2852, 7
    %v2854 = vsub.s32 3, %v2853
    %v2855 = vrot.slane %v894, %v2854
    %v2856 = vlaneseq
    %v2857 = vshrl.u32 %v2856, 7
    %v2858 = vsub.s32 4, %v2857
    %v2859 = vrot.slane %v894, %v2858
    %v2860 = vlaneseq
    %v2861 = vshrl.u32 %v2860, 7
    %v2862 = vsub.s32 5, %v2861
    %v2863 = vrot.slane %v894, %v2862
    %v2864 = vlaneseq
    %v2865 = vshrl.u32 %v2864, 7
    %v2866 = vsub.s32 6, %v2865
    %v2867 = vrot.slane %v894, %v2866
    %v2868 = vlaneseq
    %v2869 = vshrl.u32 %v2868, 7
    %v2870 = vsub.s32 7, %v2869
    %v2871 = vrot.slane %v894, %v2870
    %v2872 = vlaneseq
    %v2873 = vshrl.u32 %v2872, 7
    %v2874 = vsub.s32 0, %v2873
    %v2875 = vrot.slane %v899, %v2874
    %v2876 = vlaneseq
    %v2877 = vshrl.u32 %v2876, 7
    %v2878 = vsub.s32 1, %v2877
    %v2879 = vrot.slane %v899, %v2878
    %v2880 = vlaneseq
    %v2881 = vshrl.u32 %v2880, 7
    %v2882 = vsub.s32 2, %v2881
    %v2883 = vrot.slane %v899, %v2882
    %v2884 = vlaneseq
    %v2885 = vshrl.u32 %v2884, 7
    %v2886 = vsub.s32 3, %v2885
    %v2887 = vrot.slane %v899, %v2886
    %v2888 = vlaneseq
    %v2889 = vshrl.u32 %v2888, 7
    %v2890 = vsub.s32 4, %v2889
    %v2891 = vrot.slane %v899, %v2890
    %v2892 = vlaneseq
    %v2893 = vshrl.u32 %v2892, 7
    %v2894 = vsub.s32 5, %v2893
    %v2895 = vrot.slane %v899, %v2894
    %v2896 = vlaneseq
    %v2897 = vshrl.u32 %v2896, 7
    %v2898 = vsub.s32 6, %v2897
    %v2899 = vrot.slane %v899, %v2898
    %v2900 = vlaneseq
    %v2901 = vshrl.u32 %v2900, 7
    %v2902 = vsub.s32 7, %v2901
    %v2903 = vrot.slane %v899, %v2902
    %v2904 = vlaneseq
    %v2905 = vshrl.u32 %v2904, 7
    %v2906 = vsub.s32 0, %v2905
    %v2907 = vrot.slane %v904, %v2906
    %v2908 = vlaneseq
    %v2909 = vshrl.u32 %v2908, 7
    %v2910 = vsub.s32 1, %v2909
    %v2911 = vrot.slane %v904, %v2910
    %v2912 = vlaneseq
    %v2913 = vshrl.u32 %v2912, 7
    %v2914 = vsub.s32 2, %v2913
    %v2915 = vrot.slane %v904, %v2914
    %v2916 = vlaneseq
    %v2917 = vshrl.u32 %v2916, 7
    %v2918 = vsub.s32 3, %v2917
    %v2919 = vrot.slane %v904, %v2918
    %v2920 = vlaneseq
    %v2921 = vshrl.u32 %v2920, 7
    %v2922 = vsub.s32 4, %v2921
    %v2923 = vrot.slane %v904, %v2922
    %v2924 = vlaneseq
    %v2925 = vshrl.u32 %v2924, 7
    %v2926 = vsub.s32 5, %v2925
    %v2927 = vrot.slane %v904, %v2926
    %v2928 = vlaneseq
    %v2929 = vshrl.u32 %v2928, 7
    %v2930 = vsub.s32 6, %v2929
    %v2931 = vrot.slane %v904, %v2930
    %v2932 = vlaneseq
    %v2933 = vshrl.u32 %v2932, 7
    %v2934 = vsub.s32 7, %v2933
    %v2935 = vrot.slane %v904, %v2934
    %v2936 = vlaneseq
    %v2937 = vshrl.u32 %v2936, 7
    %v2938 = vsub.s32 0, %v2937
    %v2939 = vrot.slane %v909, %v2938
    %v2940 = vlaneseq
    %v2941 = vshrl.u32 %v2940, 7
    %v2942 = vsub.s32 1, %v2941
    %v2943 = vrot.slane %v909, %v2942
    %v2944 = vlaneseq
    %v2945 = vshrl.u32 %v2944, 7
    %v2946 = vsub.s32 2, %v2945
    %v2947 = vrot.slane %v909, %v2946
    %v2948 = vlaneseq
    %v2949 = vshrl.u32 %v2948, 7
    %v2950 = vsub.s32 3, %v2949
    %v2951 = vrot.slane %v909, %v2950
    %v2952 = vlaneseq
    %v2953 = vshrl.u32 %v2952, 7
    %v2954 = vsub.s32 4, %v2953
    %v2955 = vrot.slane %v909, %v2954
    %v2956 = vlaneseq
    %v2957 = vshrl.u32 %v2956, 7
    %v2958 = vsub.s32 5, %v2957
    %v2959 = vrot.slane %v909, %v2958
    %v2960 = vlaneseq
    %v2961 = vshrl.u32 %v2960, 7
    %v2962 = vsub.s32 6, %v2961
    %v2963 = vrot.slane %v909, %v2962
    %v2964 = vlaneseq
    %v2965 = vshrl.u32 %v2964, 7
    %v2966 = vsub.s32 7, %v2965
    %v2967 = vrot.slane %v909, %v2966
    %v2968 = vlaneseq
    %v2969 = vshrl.u32 %v2968, 7
    %v2970 = vsub.s32 0, %v2969
    %v2971 = vrot.slane %v914, %v2970
    %v2972 = vlaneseq
    %v2973 = vshrl.u32 %v2972, 7
    %v2974 = vsub.s32 1, %v2973
    %v2975 = vrot.slane %v914, %v2974
    %v2976 = vlaneseq
    %v2977 = vshrl.u32 %v2976, 7
    %v2978 = vsub.s32 2, %v2977
    %v2979 = vrot.slane %v914, %v2978
    %v2980 = vlaneseq
    %v2981 = vshrl.u32 %v2980, 7
    %v2982 = vsub.s32 3, %v2981
    %v2983 = vrot.slane %v914, %v2982
    %v2984 = vlaneseq
    %v2985 = vshrl.u32 %v2984, 7
    %v2986 = vsub.s32 4, %v2985
    %v2987 = vrot.slane %v914, %v2986
    %v2988 = vlaneseq
    %v2989 = vshrl.u32 %v2988, 7
    %v2990 = vsub.s32 5, %v2989
    %v2991 = vrot.slane %v914, %v2990
    %v2992 = vlaneseq
    %v2993 = vshrl.u32 %v2992, 7
    %v2994 = vsub.s32 6, %v2993
    %v2995 = vrot.slane %v914, %v2994
    %v2996 = vlaneseq
    %v2997 = vshrl.u32 %v2996, 7
    %v2998 = vsub.s32 7, %v2997
    %v2999 = vrot.slane %v914, %v2998
    %v3000 = vlaneseq
    %v3001 = vshrl.u32 %v3000, 7
    %v3002 = vsub.s32 0, %v3001
    %v3003 = vrot.slane %v919, %v3002
    %v3004 = vlaneseq
    %v3005 = vshrl.u32 %v3004, 7
    %v3006 = vsub.s32 1, %v3005
    %v3007 = vrot.slane %v919, %v3006
    %v3008 = vlaneseq
    %v3009 = vshrl.u32 %v3008, 7
    %v3010 = vsub.s32 2, %v3009
    %v3011 = vrot.slane %v919, %v3010
    %v3012 = vlaneseq
    %v3013 = vshrl.u32 %v3012, 7
    %v3014 = vsub.s32 3, %v3013
    %v3015 = vrot.slane %v919, %v3014
    %v3016 = vlaneseq
    %v3017 = vshrl.u32 %v3016, 7
    %v3018 = vsub.s32 4, %v3017
    %v3019 = vrot.slane %v919, %v3018
    %v3020 = vlaneseq
    %v3021 = vshrl.u32 %v3020, 7
    %v3022 = vsub.s32 5, %v3021
    %v3023 = vrot.slane %v919, %v3022
    %v3024 = vlaneseq
    %v3025 = vshrl.u32 %v3024, 7
    %v3026 = vsub.s32 6, %v3025
    %v3027 = vrot.slane %v919, %v3026
    %v3028 = vlaneseq
    %v3029 = vshrl.u32 %v3028, 7
    %v3030 = vsub.s32 7, %v3029
    %v3031 = vrot.slane %v919, %v3030
    %v3032 = vcombine.low %v987, %v991
    %v3033 = vcombine.low %v995, %v999
    %v3034 = vcombine.low %v1003, %v1007
    %v3035 = vcombine.low %v1011, %v1015
    %v3037 = vunpack.c.l.s4 1966171168
    %v3038 = vunpack.c.0.s8 %v3037
    %v3039 = vlaneseq
    %v3040 = vshrl.u32 %v3039, 7
    %v3041 = vsub.s32 %v3038, %v3040
    %v3042 = vrot.slane %v3032, %v3041
    %v3044 = vunpack.c.l.s4 1966171168
    %v3045 = vunpack.c.0.s8 %v3044
    %v3046 = vlaneseq
    %v3047 = vshrl.u32 %v3046, 7
    %v3048 = vsub.s32 %v3045, %v3047
    %v3049 = vrot.slane %v3033, %v3048
    %v3051 = vunpack.c.l.s4 1966171168
    %v3052 = vunpack.c.0.s8 %v3051
    %v3053 = vlaneseq
    %v3054 = vshrl.u32 %v3053, 7
    %v3055 = vsub.s32 %v3052, %v3054
    %v3056 = vrot.slane %v3034, %v3055
    %v3058 = vunpack.c.l.s4 1966171168
    %v3059 = vunpack.c.0.s8 %v3058
    %v3060 = vlaneseq
    %v3061 = vshrl.u32 %v3060, 7
    %v3062 = vsub.s32 %v3059, %v3061
    %v3063 = vrot.slane %v3035, %v3062
    %v3064 = vcombine.low %v3042, %v3049
    %v3065 = vcombine.low %v3056, %v3063
    %v3067 = vunpack.c.l.s4 1966171168
    %v3068 = vunpack.c.0.s8 %v3067
    %v3069 = vlaneseq
    %v3070 = vshrl.u32 %v3069, 7
    %v3071 = vsub.s32 %v3068, %v3070
    %v3072 = vrot.slane %v3064, %v3071
    %v3074 = vunpack.c.l.s4 1966171168
    %v3075 = vunpack.c.0.s8 %v3074
    %v3076 = vlaneseq
    %v3077 = vshrl.u32 %v3076, 7
    %v3078 = vsub.s32 %v3075, %v3077
    %v3079 = vrot.slane %v3065, %v3078
    %v3080 = vcombine.low %v3072, %v3079
    %v3081 = vcombine.low %v1019, %v1023
    %v3082 = vcombine.low %v1027, %v1031
    %v3083 = vcombine.low %v1035, %v1039
    %v3084 = vcombine.low %v1043, %v1047
    %v3086 = vunpack.c.l.s4 1966171168
    %v3087 = vunpack.c.0.s8 %v3086
    %v3088 = vlaneseq
    %v3089 = vshrl.u32 %v3088, 7
    %v3090 = vsub.s32 %v3087, %v3089
    %v3091 = vrot.slane %v3081, %v3090
    %v3093 = vunpack.c.l.s4 1966171168
    %v3094 = vunpack.c.0.s8 %v3093
    %v3095 = vlaneseq
    %v3096 = vshrl.u32 %v3095, 7
    %v3097 = vsub.s32 %v3094, %v3096
    %v3098 = vrot.slane %v3082, %v3097
    %v3100 = vunpack.c.l.s4 1966171168
    %v3101 = vunpack.c.0.s8 %v3100
    %v3102 = vlaneseq
    %v3103 = vshrl.u32 %v3102, 7
    %v3104 = vsub.s32 %v3101, %v3103
    %v3105 = vrot.slane %v3083, %v3104
    %v3107 = vunpack.c.l.s4 1966171168
    %v3108 = vunpack.c.0.s8 %v3107
    %v3109 = vlaneseq
    %v3110 = vshrl.u32 %v3109, 7
    %v3111 = vsub.s32 %v3108, %v3110
    %v3112 = vrot.slane %v3084, %v3111
    %v3113 = vcombine.low %v3091, %v3098
    %v3114 = vcombine.low %v3105, %v3112
    %v3116 = vunpack.c.l.s4 1966171168
    %v3117 = vunpack.c.0.s8 %v3116
    %v3118 = vlaneseq
    %v3119 = vshrl.u32 %v3118, 7
    %v3120 = vsub.s32 %v3117, %v3119
    %v3121 = vrot.slane %v3113, %v3120
    %v3123 = vunpack.c.l.s4 1966171168
    %v3124 = vunpack.c.0.s8 %v3123
    %v3125 = vlaneseq
    %v3126 = vshrl.u32 %v3125, 7
    %v3127 = vsub.s32 %v3124, %v3126
    %v3128 = vrot.slane %v3114, %v3127
    %v3129 = vcombine.low %v3121, %v3128
    %v3130 = vcombine.low %v1051, %v1055
    %v3131 = vcombine.low %v1059, %v1063
    %v3132 = vcombine.low %v1067, %v1071
    %v3133 = vcombine.low %v1075, %v1079
    %v3135 = vunpack.c.l.s4 1966171168
    %v3136 = vunpack.c.0.s8 %v3135
    %v3137 = vlaneseq
    %v3138 = vshrl.u32 %v3137, 7
    %v3139 = vsub.s32 %v3136, %v3138
    %v3140 = vrot.slane %v3130, %v3139
    %v3142 = vunpack.c.l.s4 1966171168
    %v3143 = vunpack.c.0.s8 %v3142
    %v3144 = vlaneseq
    %v3145 = vshrl.u32 %v3144, 7
    %v3146 = vsub.s32 %v3143, %v3145
    %v3147 = vrot.slane %v3131, %v3146
    %v3149 = vunpack.c.l.s4 1966171168
    %v3150 = vunpack.c.0.s8 %v3149
    %v3151 = vlaneseq
    %v3152 = vshrl.u32 %v3151, 7
    %v3153 = vsub.s32 %v3150, %v3152
    %v3154 = vrot.slane %v3132, %v3153
    %v3156 = vunpack.c.l.s4 1966171168
    %v3157 = vunpack.c.0.s8 %v3156
    %v3158 = vlaneseq
    %v3159 = vshrl.u32 %v3158, 7
    %v3160 = vsub.s32 %v3157, %v3159
    %v3161 = vrot.slane %v3133, %v3160
    %v3162 = vcombine.low %v3140, %v3147
    %v3163 = vcombine.low %v3154, %v3161
    %v3165 = vunpack.c.l.s4 1966171168
    %v3166 = vunpack.c.0.s8 %v3165
    %v3167 = vlaneseq
    %v3168 = vshrl.u32 %v3167, 7
    %v3169 = vsub.s32 %v3166, %v3168
    %v3170 = vrot.slane %v3162, %v3169
    %v3172 = vunpack.c.l.s4 1966171168
    %v3173 = vunpack.c.0.s8 %v3172
    %v3174 = vlaneseq
    %v3175 = vshrl.u32 %v3174, 7
    %v3176 = vsub.s32 %v3173, %v3175
    %v3177 = vrot.slane %v3163, %v3176
    %v3178 = vcombine.low %v3170, %v3177
    %v3179 = vcombine.low %v1083, %v1087
    %v3180 = vcombine.low %v1091, %v1095
    %v3181 = vcombine.low %v1099, %v1103
    %v3182 = vcombine.low %v1107, %v1111
    %v3184 = vunpack.c.l.s4 1966171168
    %v3185 = vunpack.c.0.s8 %v3184
    %v3186 = vlaneseq
    %v3187 = vshrl.u32 %v3186, 7
    %v3188 = vsub.s32 %v3185, %v3187
    %v3189 = vrot.slane %v3179, %v3188
    %v3191 = vunpack.c.l.s4 1966171168
    %v3192 = vunpack.c.0.s8 %v3191
    %v3193 = vlaneseq
    %v3194 = vshrl.u32 %v3193, 7
    %v3195 = vsub.s32 %v3192, %v3194
    %v3196 = vrot.slane %v3180, %v3195
    %v3198 = vunpack.c.l.s4 1966171168
    %v3199 = vunpack.c.0.s8 %v3198
    %v3200 = vlaneseq
    %v3201 = vshrl.u32 %v3200, 7
    %v3202 = vsub.s32 %v3199, %v3201
    %v3203 = vrot.slane %v3181, %v3202
    %v3205 = vunpack.c.l.s4 1966171168
    %v3206 = vunpack.c.0.s8 %v3205
    %v3207 = vlaneseq
    %v3208 = vshrl.u32 %v3207, 7
    %v3209 = vsub.s32 %v3206, %v3208
    %v3210 = vrot.slane %v3182, %v3209
    %v3211 = vcombine.low %v3189, %v3196
    %v3212 = vcombine.low %v3203, %v3210
    %v3214 = vunpack.c.l.s4 1966171168
    %v3215 = vunpack.c.0.s8 %v3214
    %v3216 = vlaneseq
    %v3217 = vshrl.u32 %v3216, 7
    %v3218 = vsub.s32 %v3215, %v3217
    %v3219 = vrot.slane %v3211, %v3218
    %v3221 = vunpack.c.l.s4 1966171168
    %v3222 = vunpack.c.0.s8 %v3221
    %v3223 = vlaneseq
    %v3224 = vshrl.u32 %v3223, 7
    %v3225 = vsub.s32 %v3222, %v3224
    %v3226 = vrot.slane %v3212, %v3225
    %v3227 = vcombine.low %v3219, %v3226
    %v3228 = vcombine.low %v1115, %v1119
    %v3229 = vcombine.low %v1123, %v1127
    %v3230 = vcombine.low %v1131, %v1135
    %v3231 = vcombine.low %v1139, %v1143
    %v3233 = vunpack.c.l.s4 1966171168
    %v3234 = vunpack.c.0.s8 %v3233
    %v3235 = vlaneseq
    %v3236 = vshrl.u32 %v3235, 7
    %v3237 = vsub.s32 %v3234, %v3236
    %v3238 = vrot.slane %v3228, %v3237
    %v3240 = vunpack.c.l.s4 1966171168
    %v3241 = vunpack.c.0.s8 %v3240
    %v3242 = vlaneseq
    %v3243 = vshrl.u32 %v3242, 7
    %v3244 = vsub.s32 %v3241, %v3243
    %v3245 = vrot.slane %v3229, %v3244
    %v3247 = vunpack.c.l.s4 1966171168
    %v3248 = vunpack.c.0.s8 %v3247
    %v3249 = vlaneseq
    %v3250 = vshrl.u32 %v3249, 7
    %v3251 = vsub.s32 %v3248, %v3250
    %v3252 = vrot.slane %v3230, %v3251
    %v3254 = vunpack.c.l.s4 1966171168
    %v3255 = vunpack.c.0.s8 %v3254
    %v3256 = vlaneseq
    %v3257 = vshrl.u32 %v3256, 7
    %v3258 = vsub.s32 %v3255, %v3257
    %v3259 = vrot.slane %v3231, %v3258
    %v3260 = vcombine.low %v3238, %v3245
    %v3261 = vcombine.low %v3252, %v3259
    %v3263 = vunpack.c.l.s4 1966171168
    %v3264 = vunpack.c.0.s8 %v3263
    %v3265 = vlaneseq
    %v3266 = vshrl.u32 %v3265, 7
    %v3267 = vsub.s32 %v3264, %v3266
    %v3268 = vrot.slane %v3260, %v3267
    %v3270 = vunpack.c.l.s4 1966171168
    %v3271 = vunpack.c.0.s8 %v3270
    %v3272 = vlaneseq
    %v3273 = vshrl.u32 %v3272, 7
    %v3274 = vsub.s32 %v3271, %v3273
    %v3275 = vrot.slane %v3261, %v3274
    %v3276 = vcombine.low %v3268, %v3275
    %v3277 = vcombine.low %v1147, %v1151
    %v3278 = vcombine.low %v1155, %v1159
    %v3279 = vcombine.low %v1163, %v1167
    %v3280 = vcombine.low %v1171, %v1175
    %v3282 = vunpack.c.l.s4 1966171168
    %v3283 = vunpack.c.0.s8 %v3282
    %v3284 = vlaneseq
    %v3285 = vshrl.u32 %v3284, 7
    %v3286 = vsub.s32 %v3283, %v3285
    %v3287 = vrot.slane %v3277, %v3286
    %v3289 = vunpack.c.l.s4 1966171168
    %v3290 = vunpack.c.0.s8 %v3289
    %v3291 = vlaneseq
    %v3292 = vshrl.u32 %v3291, 7
    %v3293 = vsub.s32 %v3290, %v3292
    %v3294 = vrot.slane %v3278, %v3293
    %v3296 = vunpack.c.l.s4 1966171168
    %v3297 = vunpack.c.0.s8 %v3296
    %v3298 = vlaneseq
    %v3299 = vshrl.u32 %v3298, 7
    %v3300 = vsub.s32 %v3297, %v3299
    %v3301 = vrot.slane %v3279, %v3300
    %v3303 = vunpack.c.l.s4 1966171168
    %v3304 = vunpack.c.0.s8 %v3303
    %v3305 = vlaneseq
    %v3306 = vshrl.u32 %v3305, 7
    %v3307 = vsub.s32 %v3304, %v3306
    %v3308 = vrot.slane %v3280, %v3307
    %v3309 = vcombine.low %v3287, %v3294
    %v3310 = vcombine.low %v3301, %v3308
    %v3312 = vunpack.c.l.s4 1966171168
    %v3313 = vunpack.c.0.s8 %v3312
    %v3314 = vlaneseq
    %v3315 = vshrl.u32 %v3314, 7
    %v3316 = vsub.s32 %v3313, %v3315
    %v3317 = vrot.slane %v3309, %v3316
    %v3319 = vunpack.c.l.s4 1966171168
    %v3320 = vunpack.c.0.s8 %v3319
    %v3321 = vlaneseq
    %v3322 = vshrl.u32 %v3321, 7
    %v3323 = vsub.s32 %v3320, %v3322
    %v3324 = vrot.slane %v3310, %v3323
    %v3325 = vcombine.low %v3317, %v3324
    %v3326 = vcombine.low %v1179, %v1183
    %v3327 = vcombine.low %v1187, %v1191
    %v3328 = vcombine.low %v1195, %v1199
    %v3329 = vcombine.low %v1203, %v1207
    %v3331 = vunpack.c.l.s4 1966171168
    %v3332 = vunpack.c.0.s8 %v3331
    %v3333 = vlaneseq
    %v3334 = vshrl.u32 %v3333, 7
    %v3335 = vsub.s32 %v3332, %v3334
    %v3336 = vrot.slane %v3326, %v3335
    %v3338 = vunpack.c.l.s4 1966171168
    %v3339 = vunpack.c.0.s8 %v3338
    %v3340 = vlaneseq
    %v3341 = vshrl.u32 %v3340, 7
    %v3342 = vsub.s32 %v3339, %v3341
    %v3343 = vrot.slane %v3327, %v3342
    %v3345 = vunpack.c.l.s4 1966171168
    %v3346 = vunpack.c.0.s8 %v3345
    %v3347 = vlaneseq
    %v3348 = vshrl.u32 %v3347, 7
    %v3349 = vsub.s32 %v3346, %v3348
    %v3350 = vrot.slane %v3328, %v3349
    %v3352 = vunpack.c.l.s4 1966171168
    %v3353 = vunpack.c.0.s8 %v3352
    %v3354 = vlaneseq
    %v3355 = vshrl.u32 %v3354, 7
    %v3356 = vsub.s32 %v3353, %v3355
    %v3357 = vrot.slane %v3329, %v3356
    %v3358 = vcombine.low %v3336, %v3343
    %v3359 = vcombine.low %v3350, %v3357
    %v3361 = vunpack.c.l.s4 1966171168
    %v3362 = vunpack.c.0.s8 %v3361
    %v3363 = vlaneseq
    %v3364 = vshrl.u32 %v3363, 7
    %v3365 = vsub.s32 %v3362, %v3364
    %v3366 = vrot.slane %v3358, %v3365
    %v3368 = vunpack.c.l.s4 1966171168
    %v3369 = vunpack.c.0.s8 %v3368
    %v3370 = vlaneseq
    %v3371 = vshrl.u32 %v3370, 7
    %v3372 = vsub.s32 %v3369, %v3371
    %v3373 = vrot.slane %v3359, %v3372
    %v3374 = vcombine.low %v3366, %v3373
    %v3375 = vcombine.low %v1211, %v1215
    %v3376 = vcombine.low %v1219, %v1223
    %v3377 = vcombine.low %v1227, %v1231
    %v3378 = vcombine.low %v1235, %v1239
    %v3380 = vunpack.c.l.s4 1966171168
    %v3381 = vunpack.c.0.s8 %v3380
    %v3382 = vlaneseq
    %v3383 = vshrl.u32 %v3382, 7
    %v3384 = vsub.s32 %v3381, %v3383
    %v3385 = vrot.slane %v3375, %v3384
    %v3387 = vunpack.c.l.s4 1966171168
    %v3388 = vunpack.c.0.s8 %v3387
    %v3389 = vlaneseq
    %v3390 = vshrl.u32 %v3389, 7
    %v3391 = vsub.s32 %v3388, %v3390
    %v3392 = vrot.slane %v3376, %v3391
    %v3394 = vunpack.c.l.s4 1966171168
    %v3395 = vunpack.c.0.s8 %v3394
    %v3396 = vlaneseq
    %v3397 = vshrl.u32 %v3396, 7
    %v3398 = vsub.s32 %v3395, %v3397
    %v3399 = vrot.slane %v3377, %v3398
    %v3401 = vunpack.c.l.s4 1966171168
    %v3402 = vunpack.c.0.s8 %v3401
    %v3403 = vlaneseq
    %v3404 = vshrl.u32 %v3403, 7
    %v3405 = vsub.s32 %v3402, %v3404
    %v3406 = vrot.slane %v3378, %v3405
    %v3407 = vcombine.low %v3385, %v3392
    %v3408 = vcombine.low %v3399, %v3406
    %v3410 = vunpack.c.l.s4 1966171168
    %v3411 = vunpack.c.0.s8 %v3410
    %v3412 = vlaneseq
    %v3413 = vshrl.u32 %v3412, 7
    %v3414 = vsub.s32 %v3411, %v3413
    %v3415 = vrot.slane %v3407, %v3414
    %v3417 = vunpack.c.l.s4 1966171168
    %v3418 = vunpack.c.0.s8 %v3417
    %v3419 = vlaneseq
    %v3420 = vshrl.u32 %v3419, 7
    %v3421 = vsub.s32 %v3418, %v3420
    %v3422 = vrot.slane %v3408, %v3421
    %v3423 = vcombine.low %v3415, %v3422
    %v3424 = vcombine.low %v1243, %v1247
    %v3425 = vcombine.low %v1251, %v1255
    %v3426 = vcombine.low %v1259, %v1263
    %v3427 = vcombine.low %v1267, %v1271
    %v3429 = vunpack.c.l.s4 1966171168
    %v3430 = vunpack.c.0.s8 %v3429
    %v3431 = vlaneseq
    %v3432 = vshrl.u32 %v3431, 7
    %v3433 = vsub.s32 %v3430, %v3432
    %v3434 = vrot.slane %v3424, %v3433
    %v3436 = vunpack.c.l.s4 1966171168
    %v3437 = vunpack.c.0.s8 %v3436
    %v3438 = vlaneseq
    %v3439 = vshrl.u32 %v3438, 7
    %v3440 = vsub.s32 %v3437, %v3439
    %v3441 = vrot.slane %v3425, %v3440
    %v3443 = vunpack.c.l.s4 1966171168
    %v3444 = vunpack.c.0.s8 %v3443
    %v3445 = vlaneseq
    %v3446 = vshrl.u32 %v3445, 7
    %v3447 = vsub.s32 %v3444, %v3446
    %v3448 = vrot.slane %v3426, %v3447
    %v3450 = vunpack.c.l.s4 1966171168
    %v3451 = vunpack.c.0.s8 %v3450
    %v3452 = vlaneseq
    %v3453 = vshrl.u32 %v3452, 7
    %v3454 = vsub.s32 %v3451, %v3453
    %v3455 = vrot.slane %v3427, %v3454
    %v3456 = vcombine.low %v3434, %v3441
    %v3457 = vcombine.low %v3448, %v3455
    %v3459 = vunpack.c.l.s4 1966171168
    %v3460 = vunpack.c.0.s8 %v3459
    %v3461 = vlaneseq
    %v3462 = vshrl.u32 %v3461, 7
    %v3463 = vsub.s32 %v3460, %v3462
    %v3464 = vrot.slane %v3456, %v3463
    %v3466 = vunpack.c.l.s4 1966171168
    %v3467 = vunpack.c.0.s8 %v3466
    %v3468 = vlaneseq
    %v3469 = vshrl.u32 %v3468, 7
    %v3470 = vsub.s32 %v3467, %v3469
    %v3471 = vrot.slane %v3457, %v3470
    %v3472 = vcombine.low %v3464, %v3471
    %v3473 = vcombine.low %v1275, %v1279
    %v3474 = vcombine.low %v1283, %v1287
    %v3475 = vcombine.low %v1291, %v1295
    %v3476 = vcombine.low %v1299, %v1303
    %v3478 = vunpack.c.l.s4 1966171168
    %v3479 = vunpack.c.0.s8 %v3478
    %v3480 = vlaneseq
    %v3481 = vshrl.u32 %v3480, 7
    %v3482 = vsub.s32 %v3479, %v3481
    %v3483 = vrot.slane %v3473, %v3482
    %v3485 = vunpack.c.l.s4 1966171168
    %v3486 = vunpack.c.0.s8 %v3485
    %v3487 = vlaneseq
    %v3488 = vshrl.u32 %v3487, 7
    %v3489 = vsub.s32 %v3486, %v3488
    %v3490 = vrot.slane %v3474, %v3489
    %v3492 = vunpack.c.l.s4 1966171168
    %v3493 = vunpack.c.0.s8 %v3492
    %v3494 = vlaneseq
    %v3495 = vshrl.u32 %v3494, 7
    %v3496 = vsub.s32 %v3493, %v3495
    %v3497 = vrot.slane %v3475, %v3496
    %v3499 = vunpack.c.l.s4 1966171168
    %v3500 = vunpack.c.0.s8 %v3499
    %v3501 = vlaneseq
    %v3502 = vshrl.u32 %v3501, 7
    %v3503 = vsub.s32 %v3500, %v3502
    %v3504 = vrot.slane %v3476, %v3503
    %v3505 = vcombine.low %v3483, %v3490
    %v3506 = vcombine.low %v3497, %v3504
    %v3508 = vunpack.c.l.s4 1966171168
    %v3509 = vunpack.c.0.s8 %v3508
    %v3510 = vlaneseq
    %v3511 = vshrl.u32 %v3510, 7
    %v3512 = vsub.s32 %v3509, %v3511
    %v3513 = vrot.slane %v3505, %v3512
    %v3515 = vunpack.c.l.s4 1966171168
    %v3516 = vunpack.c.0.s8 %v3515
    %v3517 = vlaneseq
    %v3518 = vshrl.u32 %v3517, 7
    %v3519 = vsub.s32 %v3516, %v3518
    %v3520 = vrot.slane %v3506, %v3519
    %v3521 = vcombine.low %v3513, %v3520
    %v3522 = vcombine.low %v1307, %v1311
    %v3523 = vcombine.low %v1315, %v1319
    %v3524 = vcombine.low %v1323, %v1327
    %v3525 = vcombine.low %v1331, %v1335
    %v3527 = vunpack.c.l.s4 1966171168
    %v3528 = vunpack.c.0.s8 %v3527
    %v3529 = vlaneseq
    %v3530 = vshrl.u32 %v3529, 7
    %v3531 = vsub.s32 %v3528, %v3530
    %v3532 = vrot.slane %v3522, %v3531
    %v3534 = vunpack.c.l.s4 1966171168
    %v3535 = vunpack.c.0.s8 %v3534
    %v3536 = vlaneseq
    %v3537 = vshrl.u32 %v3536, 7
    %v3538 = vsub.s32 %v3535, %v3537
    %v3539 = vrot.slane %v3523, %v3538
    %v3541 = vunpack.c.l.s4 1966171168
    %v3542 = vunpack.c.0.s8 %v3541
    %v3543 = vlaneseq
    %v3544 = vshrl.u32 %v3543, 7
    %v3545 = vsub.s32 %v3542, %v3544
    %v3546 = vrot.slane %v3524, %v3545
    %v3548 = vunpack.c.l.s4 1966171168
    %v3549 = vunpack.c.0.s8 %v3548
    %v3550 = vlaneseq
    %v3551 = vshrl.u32 %v3550, 7
    %v3552 = vsub.s32 %v3549, %v3551
    %v3553 = vrot.slane %v3525, %v3552
    %v3554 = vcombine.low %v3532, %v3539
    %v3555 = vcombine.low %v3546, %v3553
    %v3557 = vunpack.c.l.s4 1966171168
    %v3558 = vunpack.c.0.s8 %v3557
    %v3559 = vlaneseq
    %v3560 = vshrl.u32 %v3559, 7
    %v3561 = vsub.s32 %v3558, %v3560
    %v3562 = vrot.slane %v3554, %v3561
    %v3564 = vunpack.c.l.s4 1966171168
    %v3565 = vunpack.c.0.s8 %v3564
    %v3566 = vlaneseq
    %v3567 = vshrl.u32 %v3566, 7
    %v3568 = vsub.s32 %v3565, %v3567
    %v3569 = vrot.slane %v3555, %v3568
    %v3570 = vcombine.low %v3562, %v3569
    %v3571 = vcombine.low %v1339, %v1343
    %v3572 = vcombine.low %v1347, %v1351
    %v3573 = vcombine.low %v1355, %v1359
    %v3574 = vcombine.low %v1363, %v1367
    %v3576 = vunpack.c.l.s4 1966171168
    %v3577 = vunpack.c.0.s8 %v3576
    %v3578 = vlaneseq
    %v3579 = vshrl.u32 %v3578, 7
    %v3580 = vsub.s32 %v3577, %v3579
    %v3581 = vrot.slane %v3571, %v3580
    %v3583 = vunpack.c.l.s4 1966171168
    %v3584 = vunpack.c.0.s8 %v3583
    %v3585 = vlaneseq
    %v3586 = vshrl.u32 %v3585, 7
    %v3587 = vsub.s32 %v3584, %v3586
    %v3588 = vrot.slane %v3572, %v3587
    %v3590 = vunpack.c.l.s4 1966171168
    %v3591 = vunpack.c.0.s8 %v3590
    %v3592 = vlaneseq
    %v3593 = vshrl.u32 %v3592, 7
    %v3594 = vsub.s32 %v3591, %v3593
    %v3595 = vrot.slane %v3573, %v3594
    %v3597 = vunpack.c.l.s4 1966171168
    %v3598 = vunpack.c.0.s8 %v3597
    %v3599 = vlaneseq
    %v3600 = vshrl.u32 %v3599, 7
    %v3601 = vsub.s32 %v3598, %v3600
    %v3602 = vrot.slane %v3574, %v3601
    %v3603 = vcombine.low %v3581, %v3588
    %v3604 = vcombine.low %v3595, %v3602
    %v3606 = vunpack.c.l.s4 1966171168
    %v3607 = vunpack.c.0.s8 %v3606
    %v3608 = vlaneseq
    %v3609 = vshrl.u32 %v3608, 7
    %v3610 = vsub.s32 %v3607, %v3609
    %v3611 = vrot.slane %v3603, %v3610
    %v3613 = vunpack.c.l.s4 1966171168
    %v3614 = vunpack.c.0.s8 %v3613
    %v3615 = vlaneseq
    %v3616 = vshrl.u32 %v3615, 7
    %v3617 = vsub.s32 %v3614, %v3616
    %v3618 = vrot.slane %v3604, %v3617
    %v3619 = vcombine.low %v3611, %v3618
    %v3620 = vcombine.low %v1371, %v1375
    %v3621 = vcombine.low %v1379, %v1383
    %v3622 = vcombine.low %v1387, %v1391
    %v3623 = vcombine.low %v1395, %v1399
    %v3625 = vunpack.c.l.s4 1966171168
    %v3626 = vunpack.c.0.s8 %v3625
    %v3627 = vlaneseq
    %v3628 = vshrl.u32 %v3627, 7
    %v3629 = vsub.s32 %v3626, %v3628
    %v3630 = vrot.slane %v3620, %v3629
    %v3632 = vunpack.c.l.s4 1966171168
    %v3633 = vunpack.c.0.s8 %v3632
    %v3634 = vlaneseq
    %v3635 = vshrl.u32 %v3634, 7
    %v3636 = vsub.s32 %v3633, %v3635
    %v3637 = vrot.slane %v3621, %v3636
    %v3639 = vunpack.c.l.s4 1966171168
    %v3640 = vunpack.c.0.s8 %v3639
    %v3641 = vlaneseq
    %v3642 = vshrl.u32 %v3641, 7
    %v3643 = vsub.s32 %v3640, %v3642
    %v3644 = vrot.slane %v3622, %v3643
    %v3646 = vunpack.c.l.s4 1966171168
    %v3647 = vunpack.c.0.s8 %v3646
    %v3648 = vlaneseq
    %v3649 = vshrl.u32 %v3648, 7
    %v3650 = vsub.s32 %v3647, %v3649
    %v3651 = vrot.slane %v3623, %v3650
    %v3652 = vcombine.low %v3630, %v3637
    %v3653 = vcombine.low %v3644, %v3651
    %v3655 = vunpack.c.l.s4 1966171168
    %v3656 = vunpack.c.0.s8 %v3655
    %v3657 = vlaneseq
    %v3658 = vshrl.u32 %v3657, 7
    %v3659 = vsub.s32 %v3656, %v3658
    %v3660 = vrot.slane %v3652, %v3659
    %v3662 = vunpack.c.l.s4 1966171168
    %v3663 = vunpack.c.0.s8 %v3662
    %v3664 = vlaneseq
    %v3665 = vshrl.u32 %v3664, 7
    %v3666 = vsub.s32 %v3663, %v3665
    %v3667 = vrot.slane %v3653, %v3666
    %v3668 = vcombine.low %v3660, %v3667
    %v3669 = vcombine.low %v1403, %v1407
    %v3670 = vcombine.low %v1411, %v1415
    %v3671 = vcombine.low %v1419, %v1423
    %v3672 = vcombine.low %v1427, %v1431
    %v3674 = vunpack.c.l.s4 1966171168
    %v3675 = vunpack.c.0.s8 %v3674
    %v3676 = vlaneseq
    %v3677 = vshrl.u32 %v3676, 7
    %v3678 = vsub.s32 %v3675, %v3677
    %v3679 = vrot.slane %v3669, %v3678
    %v3681 = vunpack.c.l.s4 1966171168
    %v3682 = vunpack.c.0.s8 %v3681
    %v3683 = vlaneseq
    %v3684 = vshrl.u32 %v3683, 7
    %v3685 = vsub.s32 %v3682, %v3684
    %v3686 = vrot.slane %v3670, %v3685
    %v3688 = vunpack.c.l.s4 1966171168
    %v3689 = vunpack.c.0.s8 %v3688
    %v3690 = vlaneseq
    %v3691 = vshrl.u32 %v3690, 7
    %v3692 = vsub.s32 %v3689, %v3691
    %v3693 = vrot.slane %v3671, %v3692
    %v3695 = vunpack.c.l.s4 1966171168
    %v3696 = vunpack.c.0.s8 %v3695
    %v3697 = vlaneseq
    %v3698 = vshrl.u32 %v3697, 7
    %v3699 = vsub.s32 %v3696, %v3698
    %v3700 = vrot.slane %v3672, %v3699
    %v3701 = vcombine.low %v3679, %v3686
    %v3702 = vcombine.low %v3693, %v3700
    %v3704 = vunpack.c.l.s4 1966171168
    %v3705 = vunpack.c.0.s8 %v3704
    %v3706 = vlaneseq
    %v3707 = vshrl.u32 %v3706, 7
    %v3708 = vsub.s32 %v3705, %v3707
    %v3709 = vrot.slane %v3701, %v3708
    %v3711 = vunpack.c.l.s4 1966171168
    %v3712 = vunpack.c.0.s8 %v3711
    %v3713 = vlaneseq
    %v3714 = vshrl.u32 %v3713, 7
    %v3715 = vsub.s32 %v3712, %v3714
    %v3716 = vrot.slane %v3702, %v3715
    %v3717 = vcombine.low %v3709, %v3716
    %v3718 = vcombine.low %v1435, %v1439
    %v3719 = vcombine.low %v1443, %v1447
    %v3720 = vcombine.low %v1451, %v1455
    %v3721 = vcombine.low %v1459, %v1463
    %v3723 = vunpack.c.l.s4 1966171168
    %v3724 = vunpack.c.0.s8 %v3723
    %v3725 = vlaneseq
    %v3726 = vshrl.u32 %v3725, 7
    %v3727 = vsub.s32 %v3724, %v3726
    %v3728 = vrot.slane %v3718, %v3727
    %v3730 = vunpack.c.l.s4 1966171168
    %v3731 = vunpack.c.0.s8 %v3730
    %v3732 = vlaneseq
    %v3733 = vshrl.u32 %v3732, 7
    %v3734 = vsub.s32 %v3731, %v3733
    %v3735 = vrot.slane %v3719, %v3734
    %v3737 = vunpack.c.l.s4 1966171168
    %v3738 = vunpack.c.0.s8 %v3737
    %v3739 = vlaneseq
    %v3740 = vshrl.u32 %v3739, 7
    %v3741 = vsub.s32 %v3738, %v3740
    %v3742 = vrot.slane %v3720, %v3741
    %v3744 = vunpack.c.l.s4 1966171168
    %v3745 = vunpack.c.0.s8 %v3744
    %v3746 = vlaneseq
    %v3747 = vshrl.u32 %v3746, 7
    %v3748 = vsub.s32 %v3745, %v3747
    %v3749 = vrot.slane %v3721, %v3748
    %v3750 = vcombine.low %v3728, %v3735
    %v3751 = vcombine.low %v3742, %v3749
    %v3753 = vunpack.c.l.s4 1966171168
    %v3754 = vunpack.c.0.s8 %v3753
    %v3755 = vlaneseq
    %v3756 = vshrl.u32 %v3755, 7
    %v3757 = vsub.s32 %v3754, %v3756
    %v3758 = vrot.slane %v3750, %v3757
    %v3760 = vunpack.c.l.s4 1966171168
    %v3761 = vunpack.c.0.s8 %v3760
    %v3762 = vlaneseq
    %v3763 = vshrl.u32 %v3762, 7
    %v3764 = vsub.s32 %v3761, %v3763
    %v3765 = vrot.slane %v3751, %v3764
    %v3766 = vcombine.low %v3758, %v3765
    %v3767 = vcombine.low %v1467, %v1471
    %v3768 = vcombine.low %v1475, %v1479
    %v3769 = vcombine.low %v1483, %v1487
    %v3770 = vcombine.low %v1491, %v1495
    %v3772 = vunpack.c.l.s4 1966171168
    %v3773 = vunpack.c.0.s8 %v3772
    %v3774 = vlaneseq
    %v3775 = vshrl.u32 %v3774, 7
    %v3776 = vsub.s32 %v3773, %v3775
    %v3777 = vrot.slane %v3767, %v3776
    %v3779 = vunpack.c.l.s4 1966171168
    %v3780 = vunpack.c.0.s8 %v3779
    %v3781 = vlaneseq
    %v3782 = vshrl.u32 %v3781, 7
    %v3783 = vsub.s32 %v3780, %v3782
    %v3784 = vrot.slane %v3768, %v3783
    %v3786 = vunpack.c.l.s4 1966171168
    %v3787 = vunpack.c.0.s8 %v3786
    %v3788 = vlaneseq
    %v3789 = vshrl.u32 %v3788, 7
    %v3790 = vsub.s32 %v3787, %v3789
    %v3791 = vrot.slane %v3769, %v3790
    %v3793 = vunpack.c.l.s4 1966171168
    %v3794 = vunpack.c.0.s8 %v3793
    %v3795 = vlaneseq
    %v3796 = vshrl.u32 %v3795, 7
    %v3797 = vsub.s32 %v3794, %v3796
    %v3798 = vrot.slane %v3770, %v3797
    %v3799 = vcombine.low %v3777, %v3784
    %v3800 = vcombine.low %v3791, %v3798
    %v3802 = vunpack.c.l.s4 1966171168
    %v3803 = vunpack.c.0.s8 %v3802
    %v3804 = vlaneseq
    %v3805 = vshrl.u32 %v3804, 7
    %v3806 = vsub.s32 %v3803, %v3805
    %v3807 = vrot.slane %v3799, %v3806
    %v3809 = vunpack.c.l.s4 1966171168
    %v3810 = vunpack.c.0.s8 %v3809
    %v3811 = vlaneseq
    %v3812 = vshrl.u32 %v3811, 7
    %v3813 = vsub.s32 %v3810, %v3812
    %v3814 = vrot.slane %v3800, %v3813
    %v3815 = vcombine.low %v3807, %v3814
    %v3816 = vcombine.low %v1499, %v1503
    %v3817 = vcombine.low %v1507, %v1511
    %v3818 = vcombine.low %v1515, %v1519
    %v3819 = vcombine.low %v1523, %v1527
    %v3821 = vunpack.c.l.s4 1966171168
    %v3822 = vunpack.c.0.s8 %v3821
    %v3823 = vlaneseq
    %v3824 = vshrl.u32 %v3823, 7
    %v3825 = vsub.s32 %v3822, %v3824
    %v3826 = vrot.slane %v3816, %v3825
    %v3828 = vunpack.c.l.s4 1966171168
    %v3829 = vunpack.c.0.s8 %v3828
    %v3830 = vlaneseq
    %v3831 = vshrl.u32 %v3830, 7
    %v3832 = vsub.s32 %v3829, %v3831
    %v3833 = vrot.slane %v3817, %v3832
    %v3835 = vunpack.c.l.s4 1966171168
    %v3836 = vunpack.c.0.s8 %v3835
    %v3837 = vlaneseq
    %v3838 = vshrl.u32 %v3837, 7
    %v3839 = vsub.s32 %v3836, %v3838
    %v3840 = vrot.slane %v3818, %v3839
    %v3842 = vunpack.c.l.s4 1966171168
    %v3843 = vunpack.c.0.s8 %v3842
    %v3844 = vlaneseq
    %v3845 = vshrl.u32 %v3844, 7
    %v3846 = vsub.s32 %v3843, %v3845
    %v3847 = vrot.slane %v3819, %v3846
    %v3848 = vcombine.low %v3826, %v3833
    %v3849 = vcombine.low %v3840, %v3847
    %v3851 = vunpack.c.l.s4 1966171168
    %v3852 = vunpack.c.0.s8 %v3851
    %v3853 = vlaneseq
    %v3854 = vshrl.u32 %v3853, 7
    %v3855 = vsub.s32 %v3852, %v3854
    %v3856 = vrot.slane %v3848, %v3855
    %v3858 = vunpack.c.l.s4 1966171168
    %v3859 = vunpack.c.0.s8 %v3858
    %v3860 = vlaneseq
    %v3861 = vshrl.u32 %v3860, 7
    %v3862 = vsub.s32 %v3859, %v3861
    %v3863 = vrot.slane %v3849, %v3862
    %v3864 = vcombine.low %v3856, %v3863
    %v3865 = vcombine.low %v1531, %v1535
    %v3866 = vcombine.low %v1539, %v1543
    %v3867 = vcombine.low %v1547, %v1551
    %v3868 = vcombine.low %v1555, %v1559
    %v3870 = vunpack.c.l.s4 1966171168
    %v3871 = vunpack.c.0.s8 %v3870
    %v3872 = vlaneseq
    %v3873 = vshrl.u32 %v3872, 7
    %v3874 = vsub.s32 %v3871, %v3873
    %v3875 = vrot.slane %v3865, %v3874
    %v3877 = vunpack.c.l.s4 1966171168
    %v3878 = vunpack.c.0.s8 %v3877
    %v3879 = vlaneseq
    %v3880 = vshrl.u32 %v3879, 7
    %v3881 = vsub.s32 %v3878, %v3880
    %v3882 = vrot.slane %v3866, %v3881
    %v3884 = vunpack.c.l.s4 1966171168
    %v3885 = vunpack.c.0.s8 %v3884
    %v3886 = vlaneseq
    %v3887 = vshrl.u32 %v3886, 7
    %v3888 = vsub.s32 %v3885, %v3887
    %v3889 = vrot.slane %v3867, %v3888
    %v3891 = vunpack.c.l.s4 1966171168
    %v3892 = vunpack.c.0.s8 %v3891
    %v3893 = vlaneseq
    %v3894 = vshrl.u32 %v3893, 7
    %v3895 = vsub.s32 %v3892, %v3894
    %v3896 = vrot.slane %v3868, %v3895
    %v3897 = vcombine.low %v3875, %v3882
    %v3898 = vcombine.low %v3889, %v3896
    %v3900 = vunpack.c.l.s4 1966171168
    %v3901 = vunpack.c.0.s8 %v3900
    %v3902 = vlaneseq
    %v3903 = vshrl.u32 %v3902, 7
    %v3904 = vsub.s32 %v3901, %v3903
    %v3905 = vrot.slane %v3897, %v3904
    %v3907 = vunpack.c.l.s4 1966171168
    %v3908 = vunpack.c.0.s8 %v3907
    %v3909 = vlaneseq
    %v3910 = vshrl.u32 %v3909, 7
    %v3911 = vsub.s32 %v3908, %v3910
    %v3912 = vrot.slane %v3898, %v3911
    %v3913 = vcombine.low %v3905, %v3912
    %v3914 = vcombine.low %v1563, %v1567
    %v3915 = vcombine.low %v1571, %v1575
    %v3916 = vcombine.low %v1579, %v1583
    %v3917 = vcombine.low %v1587, %v1591
    %v3919 = vunpack.c.l.s4 1966171168
    %v3920 = vunpack.c.0.s8 %v3919
    %v3921 = vlaneseq
    %v3922 = vshrl.u32 %v3921, 7
    %v3923 = vsub.s32 %v3920, %v3922
    %v3924 = vrot.slane %v3914, %v3923
    %v3926 = vunpack.c.l.s4 1966171168
    %v3927 = vunpack.c.0.s8 %v3926
    %v3928 = vlaneseq
    %v3929 = vshrl.u32 %v3928, 7
    %v3930 = vsub.s32 %v3927, %v3929
    %v3931 = vrot.slane %v3915, %v3930
    %v3933 = vunpack.c.l.s4 1966171168
    %v3934 = vunpack.c.0.s8 %v3933
    %v3935 = vlaneseq
    %v3936 = vshrl.u32 %v3935, 7
    %v3937 = vsub.s32 %v3934, %v3936
    %v3938 = vrot.slane %v3916, %v3937
    %v3940 = vunpack.c.l.s4 1966171168
    %v3941 = vunpack.c.0.s8 %v3940
    %v3942 = vlaneseq
    %v3943 = vshrl.u32 %v3942, 7
    %v3944 = vsub.s32 %v3941, %v3943
    %v3945 = vrot.slane %v3917, %v3944
    %v3946 = vcombine.low %v3924, %v3931
    %v3947 = vcombine.low %v3938, %v3945
    %v3949 = vunpack.c.l.s4 1966171168
    %v3950 = vunpack.c.0.s8 %v3949
    %v3951 = vlaneseq
    %v3952 = vshrl.u32 %v3951, 7
    %v3953 = vsub.s32 %v3950, %v3952
    %v3954 = vrot.slane %v3946, %v3953
    %v3956 = vunpack.c.l.s4 1966171168
    %v3957 = vunpack.c.0.s8 %v3956
    %v3958 = vlaneseq
    %v3959 = vshrl.u32 %v3958, 7
    %v3960 = vsub.s32 %v3957, %v3959
    %v3961 = vrot.slane %v3947, %v3960
    %v3962 = vcombine.low %v3954, %v3961
    %v3963 = vcombine.low %v1595, %v1599
    %v3964 = vcombine.low %v1603, %v1607
    %v3965 = vcombine.low %v1611, %v1615
    %v3966 = vcombine.low %v1619, %v1623
    %v3968 = vunpack.c.l.s4 1966171168
    %v3969 = vunpack.c.0.s8 %v3968
    %v3970 = vlaneseq
    %v3971 = vshrl.u32 %v3970, 7
    %v3972 = vsub.s32 %v3969, %v3971
    %v3973 = vrot.slane %v3963, %v3972
    %v3975 = vunpack.c.l.s4 1966171168
    %v3976 = vunpack.c.0.s8 %v3975
    %v3977 = vlaneseq
    %v3978 = vshrl.u32 %v3977, 7
    %v3979 = vsub.s32 %v3976, %v3978
    %v3980 = vrot.slane %v3964, %v3979
    %v3982 = vunpack.c.l.s4 1966171168
    %v3983 = vunpack.c.0.s8 %v3982
    %v3984 = vlaneseq
    %v3985 = vshrl.u32 %v3984, 7
    %v3986 = vsub.s32 %v3983, %v3985
    %v3987 = vrot.slane %v3965, %v3986
    %v3989 = vunpack.c.l.s4 1966171168
    %v3990 = vunpack.c.0.s8 %v3989
    %v3991 = vlaneseq
    %v3992 = vshrl.u32 %v3991, 7
    %v3993 = vsub.s32 %v3990, %v3992
    %v3994 = vrot.slane %v3966, %v3993
    %v3995 = vcombine.low %v3973, %v3980
    %v3996 = vcombine.low %v3987, %v3994
    %v3998 = vunpack.c.l.s4 1966171168
    %v3999 = vunpack.c.0.s8 %v3998
    %v4000 = vlaneseq
    %v4001 = vshrl.u32 %v4000, 7
    %v4002 = vsub.s32 %v3999, %v4001
    %v4003 = vrot.slane %v3995, %v4002
    %v4005 = vunpack.c.l.s4 1966171168
    %v4006 = vunpack.c.0.s8 %v4005
    %v4007 = vlaneseq
    %v4008 = vshrl.u32 %v4007, 7
    %v4009 = vsub.s32 %v4006, %v4008
    %v4010 = vrot.slane %v3996, %v4009
    %v4011 = vcombine.low %v4003, %v4010
    %v4012 = vcombine.low %v1627, %v1631
    %v4013 = vcombine.low %v1635, %v1639
    %v4014 = vcombine.low %v1643, %v1647
    %v4015 = vcombine.low %v1651, %v1655
    %v4017 = vunpack.c.l.s4 1966171168
    %v4018 = vunpack.c.0.s8 %v4017
    %v4019 = vlaneseq
    %v4020 = vshrl.u32 %v4019, 7
    %v4021 = vsub.s32 %v4018, %v4020
    %v4022 = vrot.slane %v4012, %v4021
    %v4024 = vunpack.c.l.s4 1966171168
    %v4025 = vunpack.c.0.s8 %v4024
    %v4026 = vlaneseq
    %v4027 = vshrl.u32 %v4026, 7
    %v4028 = vsub.s32 %v4025, %v4027
    %v4029 = vrot.slane %v4013, %v4028
    %v4031 = vunpack.c.l.s4 1966171168
    %v4032 = vunpack.c.0.s8 %v4031
    %v4033 = vlaneseq
    %v4034 = vshrl.u32 %v4033, 7
    %v4035 = vsub.s32 %v4032, %v4034
    %v4036 = vrot.slane %v4014, %v4035
    %v4038 = vunpack.c.l.s4 1966171168
    %v4039 = vunpack.c.0.s8 %v4038
    %v4040 = vlaneseq
    %v4041 = vshrl.u32 %v4040, 7
    %v4042 = vsub.s32 %v4039, %v4041
    %v4043 = vrot.slane %v4015, %v4042
    %v4044 = vcombine.low %v4022, %v4029
    %v4045 = vcombine.low %v4036, %v4043
    %v4047 = vunpack.c.l.s4 1966171168
    %v4048 = vunpack.c.0.s8 %v4047
    %v4049 = vlaneseq
    %v4050 = vshrl.u32 %v4049, 7
    %v4051 = vsub.s32 %v4048, %v4050
    %v4052 = vrot.slane %v4044, %v4051
    %v4054 = vunpack.c.l.s4 1966171168
    %v4055 = vunpack.c.0.s8 %v4054
    %v4056 = vlaneseq
    %v4057 = vshrl.u32 %v4056, 7
    %v4058 = vsub.s32 %v4055, %v4057
    %v4059 = vrot.slane %v4045, %v4058
    %v4060 = vcombine.low %v4052, %v4059
    %v4061 = vcombine.low %v1659, %v1663
    %v4062 = vcombine.low %v1667, %v1671
    %v4063 = vcombine.low %v1675, %v1679
    %v4064 = vcombine.low %v1683, %v1687
    %v4066 = vunpack.c.l.s4 1966171168
    %v4067 = vunpack.c.0.s8 %v4066
    %v4068 = vlaneseq
    %v4069 = vshrl.u32 %v4068, 7
    %v4070 = vsub.s32 %v4067, %v4069
    %v4071 = vrot.slane %v4061, %v4070
    %v4073 = vunpack.c.l.s4 1966171168
    %v4074 = vunpack.c.0.s8 %v4073
    %v4075 = vlaneseq
    %v4076 = vshrl.u32 %v4075, 7
    %v4077 = vsub.s32 %v4074, %v4076
    %v4078 = vrot.slane %v4062, %v4077
    %v4080 = vunpack.c.l.s4 1966171168
    %v4081 = vunpack.c.0.s8 %v4080
    %v4082 = vlaneseq
    %v4083 = vshrl.u32 %v4082, 7
    %v4084 = vsub.s32 %v4081, %v4083
    %v4085 = vrot.slane %v4063, %v4084
    %v4087 = vunpack.c.l.s4 1966171168
    %v4088 = vunpack.c.0.s8 %v4087
    %v4089 = vlaneseq
    %v4090 = vshrl.u32 %v4089, 7
    %v4091 = vsub.s32 %v4088, %v4090
    %v4092 = vrot.slane %v4064, %v4091
    %v4093 = vcombine.low %v4071, %v4078
    %v4094 = vcombine.low %v4085, %v4092
    %v4096 = vunpack.c.l.s4 1966171168
    %v4097 = vunpack.c.0.s8 %v4096
    %v4098 = vlaneseq
    %v4099 = vshrl.u32 %v4098, 7
    %v4100 = vsub.s32 %v4097, %v4099
    %v4101 = vrot.slane %v4093, %v4100
    %v4103 = vunpack.c.l.s4 1966171168
    %v4104 = vunpack.c.0.s8 %v4103
    %v4105 = vlaneseq
    %v4106 = vshrl.u32 %v4105, 7
    %v4107 = vsub.s32 %v4104, %v4106
    %v4108 = vrot.slane %v4094, %v4107
    %v4109 = vcombine.low %v4101, %v4108
    %v4110 = vcombine.low %v1691, %v1695
    %v4111 = vcombine.low %v1699, %v1703
    %v4112 = vcombine.low %v1707, %v1711
    %v4113 = vcombine.low %v1715, %v1719
    %v4115 = vunpack.c.l.s4 1966171168
    %v4116 = vunpack.c.0.s8 %v4115
    %v4117 = vlaneseq
    %v4118 = vshrl.u32 %v4117, 7
    %v4119 = vsub.s32 %v4116, %v4118
    %v4120 = vrot.slane %v4110, %v4119
    %v4122 = vunpack.c.l.s4 1966171168
    %v4123 = vunpack.c.0.s8 %v4122
    %v4124 = vlaneseq
    %v4125 = vshrl.u32 %v4124, 7
    %v4126 = vsub.s32 %v4123, %v4125
    %v4127 = vrot.slane %v4111, %v4126
    %v4129 = vunpack.c.l.s4 1966171168
    %v4130 = vunpack.c.0.s8 %v4129
    %v4131 = vlaneseq
    %v4132 = vshrl.u32 %v4131, 7
    %v4133 = vsub.s32 %v4130, %v4132
    %v4134 = vrot.slane %v4112, %v4133
    %v4136 = vunpack.c.l.s4 1966171168
    %v4137 = vunpack.c.0.s8 %v4136
    %v4138 = vlaneseq
    %v4139 = vshrl.u32 %v4138, 7
    %v4140 = vsub.s32 %v4137, %v4139
    %v4141 = vrot.slane %v4113, %v4140
    %v4142 = vcombine.low %v4120, %v4127
    %v4143 = vcombine.low %v4134, %v4141
    %v4145 = vunpack.c.l.s4 1966171168
    %v4146 = vunpack.c.0.s8 %v4145
    %v4147 = vlaneseq
    %v4148 = vshrl.u32 %v4147, 7
    %v4149 = vsub.s32 %v4146, %v4148
    %v4150 = vrot.slane %v4142, %v4149
    %v4152 = vunpack.c.l.s4 1966171168
    %v4153 = vunpack.c.0.s8 %v4152
    %v4154 = vlaneseq
    %v4155 = vshrl.u32 %v4154, 7
    %v4156 = vsub.s32 %v4153, %v4155
    %v4157 = vrot.slane %v4143, %v4156
    %v4158 = vcombine.low %v4150, %v4157
    %v4159 = vcombine.low %v1723, %v1727
    %v4160 = vcombine.low %v1731, %v1735
    %v4161 = vcombine.low %v1739, %v1743
    %v4162 = vcombine.low %v1747, %v1751
    %v4164 = vunpack.c.l.s4 1966171168
    %v4165 = vunpack.c.0.s8 %v4164
    %v4166 = vlaneseq
    %v4167 = vshrl.u32 %v4166, 7
    %v4168 = vsub.s32 %v4165, %v4167
    %v4169 = vrot.slane %v4159, %v4168
    %v4171 = vunpack.c.l.s4 1966171168
    %v4172 = vunpack.c.0.s8 %v4171
    %v4173 = vlaneseq
    %v4174 = vshrl.u32 %v4173, 7
    %v4175 = vsub.s32 %v4172, %v4174
    %v4176 = vrot.slane %v4160, %v4175
    %v4178 = vunpack.c.l.s4 1966171168
    %v4179 = vunpack.c.0.s8 %v4178
    %v4180 = vlaneseq
    %v4181 = vshrl.u32 %v4180, 7
    %v4182 = vsub.s32 %v4179, %v4181
    %v4183 = vrot.slane %v4161, %v4182
    %v4185 = vunpack.c.l.s4 1966171168
    %v4186 = vunpack.c.0.s8 %v4185
    %v4187 = vlaneseq
    %v4188 = vshrl.u32 %v4187, 7
    %v4189 = vsub.s32 %v4186, %v4188
    %v4190 = vrot.slane %v4162, %v4189
    %v4191 = vcombine.low %v4169, %v4176
    %v4192 = vcombine.low %v4183, %v4190
    %v4194 = vunpack.c.l.s4 1966171168
    %v4195 = vunpack.c.0.s8 %v4194
    %v4196 = vlaneseq
    %v4197 = vshrl.u32 %v4196, 7
    %v4198 = vsub.s32 %v4195, %v4197
    %v4199 = vrot.slane %v4191, %v4198
    %v4201 = vunpack.c.l.s4 1966171168
    %v4202 = vunpack.c.0.s8 %v4201
    %v4203 = vlaneseq
    %v4204 = vshrl.u32 %v4203, 7
    %v4205 = vsub.s32 %v4202, %v4204
    %v4206 = vrot.slane %v4192, %v4205
    %v4207 = vcombine.low %v4199, %v4206
    %v4208 = vcombine.low %v1755, %v1759
    %v4209 = vcombine.low %v1763, %v1767
    %v4210 = vcombine.low %v1771, %v1775
    %v4211 = vcombine.low %v1779, %v1783
    %v4213 = vunpack.c.l.s4 1966171168
    %v4214 = vunpack.c.0.s8 %v4213
    %v4215 = vlaneseq
    %v4216 = vshrl.u32 %v4215, 7
    %v4217 = vsub.s32 %v4214, %v4216
    %v4218 = vrot.slane %v4208, %v4217
    %v4220 = vunpack.c.l.s4 1966171168
    %v4221 = vunpack.c.0.s8 %v4220
    %v4222 = vlaneseq
    %v4223 = vshrl.u32 %v4222, 7
    %v4224 = vsub.s32 %v4221, %v4223
    %v4225 = vrot.slane %v4209, %v4224
    %v4227 = vunpack.c.l.s4 1966171168
    %v4228 = vunpack.c.0.s8 %v4227
    %v4229 = vlaneseq
    %v4230 = vshrl.u32 %v4229, 7
    %v4231 = vsub.s32 %v4228, %v4230
    %v4232 = vrot.slane %v4210, %v4231
    %v4234 = vunpack.c.l.s4 1966171168
    %v4235 = vunpack.c.0.s8 %v4234
    %v4236 = vlaneseq
    %v4237 = vshrl.u32 %v4236, 7
    %v4238 = vsub.s32 %v4235, %v4237
    %v4239 = vrot.slane %v4211, %v4238
    %v4240 = vcombine.low %v4218, %v4225
    %v4241 = vcombine.low %v4232, %v4239
    %v4243 = vunpack.c.l.s4 1966171168
    %v4244 = vunpack.c.0.s8 %v4243
    %v4245 = vlaneseq
    %v4246 = vshrl.u32 %v4245, 7
    %v4247 = vsub.s32 %v4244, %v4246
    %v4248 = vrot.slane %v4240, %v4247
    %v4250 = vunpack.c.l.s4 1966171168
    %v4251 = vunpack.c.0.s8 %v4250
    %v4252 = vlaneseq
    %v4253 = vshrl.u32 %v4252, 7
    %v4254 = vsub.s32 %v4251, %v4253
    %v4255 = vrot.slane %v4241, %v4254
    %v4256 = vcombine.low %v4248, %v4255
    %v4257 = vcombine.low %v1787, %v1791
    %v4258 = vcombine.low %v1795, %v1799
    %v4259 = vcombine.low %v1803, %v1807
    %v4260 = vcombine.low %v1811, %v1815
    %v4262 = vunpack.c.l.s4 1966171168
    %v4263 = vunpack.c.0.s8 %v4262
    %v4264 = vlaneseq
    %v4265 = vshrl.u32 %v4264, 7
    %v4266 = vsub.s32 %v4263, %v4265
    %v4267 = vrot.slane %v4257, %v4266
    %v4269 = vunpack.c.l.s4 1966171168
    %v4270 = vunpack.c.0.s8 %v4269
    %v4271 = vlaneseq
    %v4272 = vshrl.u32 %v4271, 7
    %v4273 = vsub.s32 %v4270, %v4272
    %v4274 = vrot.slane %v4258, %v4273
    %v4276 = vunpack.c.l.s4 1966171168
    %v4277 = vunpack.c.0.s8 %v4276
    %v4278 = vlaneseq
    %v4279 = vshrl.u32 %v4278, 7
    %v4280 = vsub.s32 %v4277, %v4279
    %v4281 = vrot.slane %v4259, %v4280
    %v4283 = vunpack.c.l.s4 1966171168
    %v4284 = vunpack.c.0.s8 %v4283
    %v4285 = vlaneseq
    %v4286 = vshrl.u32 %v4285, 7
    %v4287 = vsub.s32 %v4284, %v4286
    %v4288 = vrot.slane %v4260, %v4287
    %v4289 = vcombine.low %v4267, %v4274
    %v4290 = vcombine.low %v4281, %v4288
    %v4292 = vunpack.c.l.s4 1966171168
    %v4293 = vunpack.c.0.s8 %v4292
    %v4294 = vlaneseq
    %v4295 = vshrl.u32 %v4294, 7
    %v4296 = vsub.s32 %v4293, %v4295
    %v4297 = vrot.slane %v4289, %v4296
    %v4299 = vunpack.c.l.s4 1966171168
    %v4300 = vunpack.c.0.s8 %v4299
    %v4301 = vlaneseq
    %v4302 = vshrl.u32 %v4301, 7
    %v4303 = vsub.s32 %v4300, %v4302
    %v4304 = vrot.slane %v4290, %v4303
    %v4305 = vcombine.low %v4297, %v4304
    %v4306 = vcombine.low %v1819, %v1823
    %v4307 = vcombine.low %v1827, %v1831
    %v4308 = vcombine.low %v1835, %v1839
    %v4309 = vcombine.low %v1843, %v1847
    %v4311 = vunpack.c.l.s4 1966171168
    %v4312 = vunpack.c.0.s8 %v4311
    %v4313 = vlaneseq
    %v4314 = vshrl.u32 %v4313, 7
    %v4315 = vsub.s32 %v4312, %v4314
    %v4316 = vrot.slane %v4306, %v4315
    %v4318 = vunpack.c.l.s4 1966171168
    %v4319 = vunpack.c.0.s8 %v4318
    %v4320 = vlaneseq
    %v4321 = vshrl.u32 %v4320, 7
    %v4322 = vsub.s32 %v4319, %v4321
    %v4323 = vrot.slane %v4307, %v4322
    %v4325 = vunpack.c.l.s4 1966171168
    %v4326 = vunpack.c.0.s8 %v4325
    %v4327 = vlaneseq
    %v4328 = vshrl.u32 %v4327, 7
    %v4329 = vsub.s32 %v4326, %v4328
    %v4330 = vrot.slane %v4308, %v4329
    %v4332 = vunpack.c.l.s4 1966171168
    %v4333 = vunpack.c.0.s8 %v4332
    %v4334 = vlaneseq
    %v4335 = vshrl.u32 %v4334, 7
    %v4336 = vsub.s32 %v4333, %v4335
    %v4337 = vrot.slane %v4309, %v4336
    %v4338 = vcombine.low %v4316, %v4323
    %v4339 = vcombine.low %v4330, %v4337
    %v4341 = vunpack.c.l.s4 1966171168
    %v4342 = vunpack.c.0.s8 %v4341
    %v4343 = vlaneseq
    %v4344 = vshrl.u32 %v4343, 7
    %v4345 = vsub.s32 %v4342, %v4344
    %v4346 = vrot.slane %v4338, %v4345
    %v4348 = vunpack.c.l.s4 1966171168
    %v4349 = vunpack.c.0.s8 %v4348
    %v4350 = vlaneseq
    %v4351 = vshrl.u32 %v4350, 7
    %v4352 = vsub.s32 %v4349, %v4351
    %v4353 = vrot.slane %v4339, %v4352
    %v4354 = vcombine.low %v4346, %v4353
    %v4355 = vcombine.low %v1851, %v1855
    %v4356 = vcombine.low %v1859, %v1863
    %v4357 = vcombine.low %v1867, %v1871
    %v4358 = vcombine.low %v1875, %v1879
    %v4360 = vunpack.c.l.s4 1966171168
    %v4361 = vunpack.c.0.s8 %v4360
    %v4362 = vlaneseq
    %v4363 = vshrl.u32 %v4362, 7
    %v4364 = vsub.s32 %v4361, %v4363
    %v4365 = vrot.slane %v4355, %v4364
    %v4367 = vunpack.c.l.s4 1966171168
    %v4368 = vunpack.c.0.s8 %v4367
    %v4369 = vlaneseq
    %v4370 = vshrl.u32 %v4369, 7
    %v4371 = vsub.s32 %v4368, %v4370
    %v4372 = vrot.slane %v4356, %v4371
    %v4374 = vunpack.c.l.s4 1966171168
    %v4375 = vunpack.c.0.s8 %v4374
    %v4376 = vlaneseq
    %v4377 = vshrl.u32 %v4376, 7
    %v4378 = vsub.s32 %v4375, %v4377
    %v4379 = vrot.slane %v4357, %v4378
    %v4381 = vunpack.c.l.s4 1966171168
    %v4382 = vunpack.c.0.s8 %v4381
    %v4383 = vlaneseq
    %v4384 = vshrl.u32 %v4383, 7
    %v4385 = vsub.s32 %v4382, %v4384
    %v4386 = vrot.slane %v4358, %v4385
    %v4387 = vcombine.low %v4365, %v4372
    %v4388 = vcombine.low %v4379, %v4386
    %v4390 = vunpack.c.l.s4 1966171168
    %v4391 = vunpack.c.0.s8 %v4390
    %v4392 = vlaneseq
    %v4393 = vshrl.u32 %v4392, 7
    %v4394 = vsub.s32 %v4391, %v4393
    %v4395 = vrot.slane %v4387, %v4394
    %v4397 = vunpack.c.l.s4 1966171168
    %v4398 = vunpack.c.0.s8 %v4397
    %v4399 = vlaneseq
    %v4400 = vshrl.u32 %v4399, 7
    %v4401 = vsub.s32 %v4398, %v4400
    %v4402 = vrot.slane %v4388, %v4401
    %v4403 = vcombine.low %v4395, %v4402
    %v4404 = vcombine.low %v1883, %v1887
    %v4405 = vcombine.low %v1891, %v1895
    %v4406 = vcombine.low %v1899, %v1903
    %v4407 = vcombine.low %v1907, %v1911
    %v4409 = vunpack.c.l.s4 1966171168
    %v4410 = vunpack.c.0.s8 %v4409
    %v4411 = vlaneseq
    %v4412 = vshrl.u32 %v4411, 7
    %v4413 = vsub.s32 %v4410, %v4412
    %v4414 = vrot.slane %v4404, %v4413
    %v4416 = vunpack.c.l.s4 1966171168
    %v4417 = vunpack.c.0.s8 %v4416
    %v4418 = vlaneseq
    %v4419 = vshrl.u32 %v4418, 7
    %v4420 = vsub.s32 %v4417, %v4419
    %v4421 = vrot.slane %v4405, %v4420
    %v4423 = vunpack.c.l.s4 1966171168
    %v4424 = vunpack.c.0.s8 %v4423
    %v4425 = vlaneseq
    %v4426 = vshrl.u32 %v4425, 7
    %v4427 = vsub.s32 %v4424, %v4426
    %v4428 = vrot.slane %v4406, %v4427
    %v4430 = vunpack.c.l.s4 1966171168
    %v4431 = vunpack.c.0.s8 %v4430
    %v4432 = vlaneseq
    %v4433 = vshrl.u32 %v4432, 7
    %v4434 = vsub.s32 %v4431, %v4433
    %v4435 = vrot.slane %v4407, %v4434
    %v4436 = vcombine.low %v4414, %v4421
    %v4437 = vcombine.low %v4428, %v4435
    %v4439 = vunpack.c.l.s4 1966171168
    %v4440 = vunpack.c.0.s8 %v4439
    %v4441 = vlaneseq
    %v4442 = vshrl.u32 %v4441, 7
    %v4443 = vsub.s32 %v4440, %v4442
    %v4444 = vrot.slane %v4436, %v4443
    %v4446 = vunpack.c.l.s4 1966171168
    %v4447 = vunpack.c.0.s8 %v4446
    %v4448 = vlaneseq
    %v4449 = vshrl.u32 %v4448, 7
    %v4450 = vsub.s32 %v4447, %v4449
    %v4451 = vrot.slane %v4437, %v4450
    %v4452 = vcombine.low %v4444, %v4451
    %v4453 = vcombine.low %v1915, %v1919
    %v4454 = vcombine.low %v1923, %v1927
    %v4455 = vcombine.low %v1931, %v1935
    %v4456 = vcombine.low %v1939, %v1943
    %v4458 = vunpack.c.l.s4 1966171168
    %v4459 = vunpack.c.0.s8 %v4458
    %v4460 = vlaneseq
    %v4461 = vshrl.u32 %v4460, 7
    %v4462 = vsub.s32 %v4459, %v4461
    %v4463 = vrot.slane %v4453, %v4462
    %v4465 = vunpack.c.l.s4 1966171168
    %v4466 = vunpack.c.0.s8 %v4465
    %v4467 = vlaneseq
    %v4468 = vshrl.u32 %v4467, 7
    %v4469 = vsub.s32 %v4466, %v4468
    %v4470 = vrot.slane %v4454, %v4469
    %v4472 = vunpack.c.l.s4 1966171168
    %v4473 = vunpack.c.0.s8 %v4472
    %v4474 = vlaneseq
    %v4475 = vshrl.u32 %v4474, 7
    %v4476 = vsub.s32 %v4473, %v4475
    %v4477 = vrot.slane %v4455, %v4476
    %v4479 = vunpack.c.l.s4 1966171168
    %v4480 = vunpack.c.0.s8 %v4479
    %v4481 = vlaneseq
    %v4482 = vshrl.u32 %v4481, 7
    %v4483 = vsub.s32 %v4480, %v4482
    %v4484 = vrot.slane %v4456, %v4483
    %v4485 = vcombine.low %v4463, %v4470
    %v4486 = vcombine.low %v4477, %v4484
    %v4488 = vunpack.c.l.s4 1966171168
    %v4489 = vunpack.c.0.s8 %v4488
    %v4490 = vlaneseq
    %v4491 = vshrl.u32 %v4490, 7
    %v4492 = vsub.s32 %v4489, %v4491
    %v4493 = vrot.slane %v4485, %v4492
    %v4495 = vunpack.c.l.s4 1966171168
    %v4496 = vunpack.c.0.s8 %v4495
    %v4497 = vlaneseq
    %v4498 = vshrl.u32 %v4497, 7
    %v4499 = vsub.s32 %v4496, %v4498
    %v4500 = vrot.slane %v4486, %v4499
    %v4501 = vcombine.low %v4493, %v4500
    %v4502 = vcombine.low %v1947, %v1951
    %v4503 = vcombine.low %v1955, %v1959
    %v4504 = vcombine.low %v1963, %v1967
    %v4505 = vcombine.low %v1971, %v1975
    %v4507 = vunpack.c.l.s4 1966171168
    %v4508 = vunpack.c.0.s8 %v4507
    %v4509 = vlaneseq
    %v4510 = vshrl.u32 %v4509, 7
    %v4511 = vsub.s32 %v4508, %v4510
    %v4512 = vrot.slane %v4502, %v4511
    %v4514 = vunpack.c.l.s4 1966171168
    %v4515 = vunpack.c.0.s8 %v4514
    %v4516 = vlaneseq
    %v4517 = vshrl.u32 %v4516, 7
    %v4518 = vsub.s32 %v4515, %v4517
    %v4519 = vrot.slane %v4503, %v4518
    %v4521 = vunpack.c.l.s4 1966171168
    %v4522 = vunpack.c.0.s8 %v4521
    %v4523 = vlaneseq
    %v4524 = vshrl.u32 %v4523, 7
    %v4525 = vsub.s32 %v4522, %v4524
    %v4526 = vrot.slane %v4504, %v4525
    %v4528 = vunpack.c.l.s4 1966171168
    %v4529 = vunpack.c.0.s8 %v4528
    %v4530 = vlaneseq
    %v4531 = vshrl.u32 %v4530, 7
    %v4532 = vsub.s32 %v4529, %v4531
    %v4533 = vrot.slane %v4505, %v4532
    %v4534 = vcombine.low %v4512, %v4519
    %v4535 = vcombine.low %v4526, %v4533
    %v4537 = vunpack.c.l.s4 1966171168
    %v4538 = vunpack.c.0.s8 %v4537
    %v4539 = vlaneseq
    %v4540 = vshrl.u32 %v4539, 7
    %v4541 = vsub.s32 %v4538, %v4540
    %v4542 = vrot.slane %v4534, %v4541
    %v4544 = vunpack.c.l.s4 1966171168
    %v4545 = vunpack.c.0.s8 %v4544
    %v4546 = vlaneseq
    %v4547 = vshrl.u32 %v4546, 7
    %v4548 = vsub.s32 %v4545, %v4547
    %v4549 = vrot.slane %v4535, %v4548
    %v4550 = vcombine.low %v4542, %v4549
    %v4551 = vcombine.low %v1979, %v1983
    %v4552 = vcombine.low %v1987, %v1991
    %v4553 = vcombine.low %v1995, %v1999
    %v4554 = vcombine.low %v2003, %v2007
    %v4556 = vunpack.c.l.s4 1966171168
    %v4557 = vunpack.c.0.s8 %v4556
    %v4558 = vlaneseq
    %v4559 = vshrl.u32 %v4558, 7
    %v4560 = vsub.s32 %v4557, %v4559
    %v4561 = vrot.slane %v4551, %v4560
    %v4563 = vunpack.c.l.s4 1966171168
    %v4564 = vunpack.c.0.s8 %v4563
    %v4565 = vlaneseq
    %v4566 = vshrl.u32 %v4565, 7
    %v4567 = vsub.s32 %v4564, %v4566
    %v4568 = vrot.slane %v4552, %v4567
    %v4570 = vunpack.c.l.s4 1966171168
    %v4571 = vunpack.c.0.s8 %v4570
    %v4572 = vlaneseq
    %v4573 = vshrl.u32 %v4572, 7
    %v4574 = vsub.s32 %v4571, %v4573
    %v4575 = vrot.slane %v4553, %v4574
    %v4577 = vunpack.c.l.s4 1966171168
    %v4578 = vunpack.c.0.s8 %v4577
    %v4579 = vlaneseq
    %v4580 = vshrl.u32 %v4579, 7
    %v4581 = vsub.s32 %v4578, %v4580
    %v4582 = vrot.slane %v4554, %v4581
    %v4583 = vcombine.low %v4561, %v4568
    %v4584 = vcombine.low %v4575, %v4582
    %v4586 = vunpack.c.l.s4 1966171168
    %v4587 = vunpack.c.0.s8 %v4586
    %v4588 = vlaneseq
    %v4589 = vshrl.u32 %v4588, 7
    %v4590 = vsub.s32 %v4587, %v4589
    %v4591 = vrot.slane %v4583, %v4590
    %v4593 = vunpack.c.l.s4 1966171168
    %v4594 = vunpack.c.0.s8 %v4593
    %v4595 = vlaneseq
    %v4596 = vshrl.u32 %v4595, 7
    %v4597 = vsub.s32 %v4594, %v4596
    %v4598 = vrot.slane %v4584, %v4597
    %v4599 = vcombine.low %v4591, %v4598
    %v4600 = vcombine.low %v2011, %v2015
    %v4601 = vcombine.low %v2019, %v2023
    %v4602 = vcombine.low %v2027, %v2031
    %v4603 = vcombine.low %v2035, %v2039
    %v4605 = vunpack.c.l.s4 1966171168
    %v4606 = vunpack.c.0.s8 %v4605
    %v4607 = vlaneseq
    %v4608 = vshrl.u32 %v4607, 7
    %v4609 = vsub.s32 %v4606, %v4608
    %v4610 = vrot.slane %v4600, %v4609
    %v4612 = vunpack.c.l.s4 1966171168
    %v4613 = vunpack.c.0.s8 %v4612
    %v4614 = vlaneseq
    %v4615 = vshrl.u32 %v4614, 7
    %v4616 = vsub.s32 %v4613, %v4615
    %v4617 = vrot.slane %v4601, %v4616
    %v4619 = vunpack.c.l.s4 1966171168
    %v4620 = vunpack.c.0.s8 %v4619
    %v4621 = vlaneseq
    %v4622 = vshrl.u32 %v4621, 7
    %v4623 = vsub.s32 %v4620, %v4622
    %v4624 = vrot.slane %v4602, %v4623
    %v4626 = vunpack.c.l.s4 1966171168
    %v4627 = vunpack.c.0.s8 %v4626
    %v4628 = vlaneseq
    %v4629 = vshrl.u32 %v4628, 7
    %v4630 = vsub.s32 %v4627, %v4629
    %v4631 = vrot.slane %v4603, %v4630
    %v4632 = vcombine.low %v4610, %v4617
    %v4633 = vcombine.low %v4624, %v4631
    %v4635 = vunpack.c.l.s4 1966171168
    %v4636 = vunpack.c.0.s8 %v4635
    %v4637 = vlaneseq
    %v4638 = vshrl.u32 %v4637, 7
    %v4639 = vsub.s32 %v4636, %v4638
    %v4640 = vrot.slane %v4632, %v4639
    %v4642 = vunpack.c.l.s4 1966171168
    %v4643 = vunpack.c.0.s8 %v4642
    %v4644 = vlaneseq
    %v4645 = vshrl.u32 %v4644, 7
    %v4646 = vsub.s32 %v4643, %v4645
    %v4647 = vrot.slane %v4633, %v4646
    %v4648 = vcombine.low %v4640, %v4647
    %v4649 = vcombine.low %v2043, %v2047
    %v4650 = vcombine.low %v2051, %v2055
    %v4651 = vcombine.low %v2059, %v2063
    %v4652 = vcombine.low %v2067, %v2071
    %v4654 = vunpack.c.l.s4 1966171168
    %v4655 = vunpack.c.0.s8 %v4654
    %v4656 = vlaneseq
    %v4657 = vshrl.u32 %v4656, 7
    %v4658 = vsub.s32 %v4655, %v4657
    %v4659 = vrot.slane %v4649, %v4658
    %v4661 = vunpack.c.l.s4 1966171168
    %v4662 = vunpack.c.0.s8 %v4661
    %v4663 = vlaneseq
    %v4664 = vshrl.u32 %v4663, 7
    %v4665 = vsub.s32 %v4662, %v4664
    %v4666 = vrot.slane %v4650, %v4665
    %v4668 = vunpack.c.l.s4 1966171168
    %v4669 = vunpack.c.0.s8 %v4668
    %v4670 = vlaneseq
    %v4671 = vshrl.u32 %v4670, 7
    %v4672 = vsub.s32 %v4669, %v4671
    %v4673 = vrot.slane %v4651, %v4672
    %v4675 = vunpack.c.l.s4 1966171168
    %v4676 = vunpack.c.0.s8 %v4675
    %v4677 = vlaneseq
    %v4678 = vshrl.u32 %v4677, 7
    %v4679 = vsub.s32 %v4676, %v4678
    %v4680 = vrot.slane %v4652, %v4679
    %v4681 = vcombine.low %v4659, %v4666
    %v4682 = vcombine.low %v4673, %v4680
    %v4684 = vunpack.c.l.s4 1966171168
    %v4685 = vunpack.c.0.s8 %v4684
    %v4686 = vlaneseq
    %v4687 = vshrl.u32 %v4686, 7
    %v4688 = vsub.s32 %v4685, %v4687
    %v4689 = vrot.slane %v4681, %v4688
    %v4691 = vunpack.c.l.s4 1966171168
    %v4692 = vunpack.c.0.s8 %v4691
    %v4693 = vlaneseq
    %v4694 = vshrl.u32 %v4693, 7
    %v4695 = vsub.s32 %v4692, %v4694
    %v4696 = vrot.slane %v4682, %v4695
    %v4697 = vcombine.low %v4689, %v4696
    %v4698 = vcombine.low %v2075, %v2079
    %v4699 = vcombine.low %v2083, %v2087
    %v4700 = vcombine.low %v2091, %v2095
    %v4701 = vcombine.low %v2099, %v2103
    %v4703 = vunpack.c.l.s4 1966171168
    %v4704 = vunpack.c.0.s8 %v4703
    %v4705 = vlaneseq
    %v4706 = vshrl.u32 %v4705, 7
    %v4707 = vsub.s32 %v4704, %v4706
    %v4708 = vrot.slane %v4698, %v4707
    %v4710 = vunpack.c.l.s4 1966171168
    %v4711 = vunpack.c.0.s8 %v4710
    %v4712 = vlaneseq
    %v4713 = vshrl.u32 %v4712, 7
    %v4714 = vsub.s32 %v4711, %v4713
    %v4715 = vrot.slane %v4699, %v4714
    %v4717 = vunpack.c.l.s4 1966171168
    %v4718 = vunpack.c.0.s8 %v4717
    %v4719 = vlaneseq
    %v4720 = vshrl.u32 %v4719, 7
    %v4721 = vsub.s32 %v4718, %v4720
    %v4722 = vrot.slane %v4700, %v4721
    %v4724 = vunpack.c.l.s4 1966171168
    %v4725 = vunpack.c.0.s8 %v4724
    %v4726 = vlaneseq
    %v4727 = vshrl.u32 %v4726, 7
    %v4728 = vsub.s32 %v4725, %v4727
    %v4729 = vrot.slane %v4701, %v4728
    %v4730 = vcombine.low %v4708, %v4715
    %v4731 = vcombine.low %v4722, %v4729
    %v4733 = vunpack.c.l.s4 1966171168
    %v4734 = vunpack.c.0.s8 %v4733
    %v4735 = vlaneseq
    %v4736 = vshrl.u32 %v4735, 7
    %v4737 = vsub.s32 %v4734, %v4736
    %v4738 = vrot.slane %v4730, %v4737
    %v4740 = vunpack.c.l.s4 1966171168
    %v4741 = vunpack.c.0.s8 %v4740
    %v4742 = vlaneseq
    %v4743 = vshrl.u32 %v4742, 7
    %v4744 = vsub.s32 %v4741, %v4743
    %v4745 = vrot.slane %v4731, %v4744
    %v4746 = vcombine.low %v4738, %v4745
    %v4747 = vcombine.low %v2107, %v2111
    %v4748 = vcombine.low %v2115, %v2119
    %v4749 = vcombine.low %v2123, %v2127
    %v4750 = vcombine.low %v2131, %v2135
    %v4752 = vunpack.c.l.s4 1966171168
    %v4753 = vunpack.c.0.s8 %v4752
    %v4754 = vlaneseq
    %v4755 = vshrl.u32 %v4754, 7
    %v4756 = vsub.s32 %v4753, %v4755
    %v4757 = vrot.slane %v4747, %v4756
    %v4759 = vunpack.c.l.s4 1966171168
    %v4760 = vunpack.c.0.s8 %v4759
    %v4761 = vlaneseq
    %v4762 = vshrl.u32 %v4761, 7
    %v4763 = vsub.s32 %v4760, %v4762
    %v4764 = vrot.slane %v4748, %v4763
    %v4766 = vunpack.c.l.s4 1966171168
    %v4767 = vunpack.c.0.s8 %v4766
    %v4768 = vlaneseq
    %v4769 = vshrl.u32 %v4768, 7
    %v4770 = vsub.s32 %v4767, %v4769
    %v4771 = vrot.slane %v4749, %v4770
    %v4773 = vunpack.c.l.s4 1966171168
    %v4774 = vunpack.c.0.s8 %v4773
    %v4775 = vlaneseq
    %v4776 = vshrl.u32 %v4775, 7
    %v4777 = vsub.s32 %v4774, %v4776
    %v4778 = vrot.slane %v4750, %v4777
    %v4779 = vcombine.low %v4757, %v4764
    %v4780 = vcombine.low %v4771, %v4778
    %v4782 = vunpack.c.l.s4 1966171168
    %v4783 = vunpack.c.0.s8 %v4782
    %v4784 = vlaneseq
    %v4785 = vshrl.u32 %v4784, 7
    %v4786 = vsub.s32 %v4783, %v4785
    %v4787 = vrot.slane %v4779, %v4786
    %v4789 = vunpack.c.l.s4 1966171168
    %v4790 = vunpack.c.0.s8 %v4789
    %v4791 = vlaneseq
    %v4792 = vshrl.u32 %v4791, 7
    %v4793 = vsub.s32 %v4790, %v4792
    %v4794 = vrot.slane %v4780, %v4793
    %v4795 = vcombine.low %v4787, %v4794
    %v4796 = vcombine.low %v2139, %v2143
    %v4797 = vcombine.low %v2147, %v2151
    %v4798 = vcombine.low %v2155, %v2159
    %v4799 = vcombine.low %v2163, %v2167
    %v4801 = vunpack.c.l.s4 1966171168
    %v4802 = vunpack.c.0.s8 %v4801
    %v4803 = vlaneseq
    %v4804 = vshrl.u32 %v4803, 7
    %v4805 = vsub.s32 %v4802, %v4804
    %v4806 = vrot.slane %v4796, %v4805
    %v4808 = vunpack.c.l.s4 1966171168
    %v4809 = vunpack.c.0.s8 %v4808
    %v4810 = vlaneseq
    %v4811 = vshrl.u32 %v4810, 7
    %v4812 = vsub.s32 %v4809, %v4811
    %v4813 = vrot.slane %v4797, %v4812
    %v4815 = vunpack.c.l.s4 1966171168
    %v4816 = vunpack.c.0.s8 %v4815
    %v4817 = vlaneseq
    %v4818 = vshrl.u32 %v4817, 7
    %v4819 = vsub.s32 %v4816, %v4818
    %v4820 = vrot.slane %v4798, %v4819
    %v4822 = vunpack.c.l.s4 1966171168
    %v4823 = vunpack.c.0.s8 %v4822
    %v4824 = vlaneseq
    %v4825 = vshrl.u32 %v4824, 7
    %v4826 = vsub.s32 %v4823, %v4825
    %v4827 = vrot.slane %v4799, %v4826
    %v4828 = vcombine.low %v4806, %v4813
    %v4829 = vcombine.low %v4820, %v4827
    %v4831 = vunpack.c.l.s4 1966171168
    %v4832 = vunpack.c.0.s8 %v4831
    %v4833 = vlaneseq
    %v4834 = vshrl.u32 %v4833, 7
    %v4835 = vsub.s32 %v4832, %v4834
    %v4836 = vrot.slane %v4828, %v4835
    %v4838 = vunpack.c.l.s4 1966171168
    %v4839 = vunpack.c.0.s8 %v4838
    %v4840 = vlaneseq
    %v4841 = vshrl.u32 %v4840, 7
    %v4842 = vsub.s32 %v4839, %v4841
    %v4843 = vrot.slane %v4829, %v4842
    %v4844 = vcombine.low %v4836, %v4843
    %v4845 = vcombine.low %v2171, %v2175
    %v4846 = vcombine.low %v2179, %v2183
    %v4847 = vcombine.low %v2187, %v2191
    %v4848 = vcombine.low %v2195, %v2199
    %v4850 = vunpack.c.l.s4 1966171168
    %v4851 = vunpack.c.0.s8 %v4850
    %v4852 = vlaneseq
    %v4853 = vshrl.u32 %v4852, 7
    %v4854 = vsub.s32 %v4851, %v4853
    %v4855 = vrot.slane %v4845, %v4854
    %v4857 = vunpack.c.l.s4 1966171168
    %v4858 = vunpack.c.0.s8 %v4857
    %v4859 = vlaneseq
    %v4860 = vshrl.u32 %v4859, 7
    %v4861 = vsub.s32 %v4858, %v4860
    %v4862 = vrot.slane %v4846, %v4861
    %v4864 = vunpack.c.l.s4 1966171168
    %v4865 = vunpack.c.0.s8 %v4864
    %v4866 = vlaneseq
    %v4867 = vshrl.u32 %v4866, 7
    %v4868 = vsub.s32 %v4865, %v4867
    %v4869 = vrot.slane %v4847, %v4868
    %v4871 = vunpack.c.l.s4 1966171168
    %v4872 = vunpack.c.0.s8 %v4871
    %v4873 = vlaneseq
    %v4874 = vshrl.u32 %v4873, 7
    %v4875 = vsub.s32 %v4872, %v4874
    %v4876 = vrot.slane %v4848, %v4875
    %v4877 = vcombine.low %v4855, %v4862
    %v4878 = vcombine.low %v4869, %v4876
    %v4880 = vunpack.c.l.s4 1966171168
    %v4881 = vunpack.c.0.s8 %v4880
    %v4882 = vlaneseq
    %v4883 = vshrl.u32 %v4882, 7
    %v4884 = vsub.s32 %v4881, %v4883
    %v4885 = vrot.slane %v4877, %v4884
    %v4887 = vunpack.c.l.s4 1966171168
    %v4888 = vunpack.c.0.s8 %v4887
    %v4889 = vlaneseq
    %v4890 = vshrl.u32 %v4889, 7
    %v4891 = vsub.s32 %v4888, %v4890
    %v4892 = vrot.slane %v4878, %v4891
    %v4893 = vcombine.low %v4885, %v4892
    %v4894 = vcombine.low %v2203, %v2207
    %v4895 = vcombine.low %v2211, %v2215
    %v4896 = vcombine.low %v2219, %v2223
    %v4897 = vcombine.low %v2227, %v2231
    %v4899 = vunpack.c.l.s4 1966171168
    %v4900 = vunpack.c.0.s8 %v4899
    %v4901 = vlaneseq
    %v4902 = vshrl.u32 %v4901, 7
    %v4903 = vsub.s32 %v4900, %v4902
    %v4904 = vrot.slane %v4894, %v4903
    %v4906 = vunpack.c.l.s4 1966171168
    %v4907 = vunpack.c.0.s8 %v4906
    %v4908 = vlaneseq
    %v4909 = vshrl.u32 %v4908, 7
    %v4910 = vsub.s32 %v4907, %v4909
    %v4911 = vrot.slane %v4895, %v4910
    %v4913 = vunpack.c.l.s4 1966171168
    %v4914 = vunpack.c.0.s8 %v4913
    %v4915 = vlaneseq
    %v4916 = vshrl.u32 %v4915, 7
    %v4917 = vsub.s32 %v4914, %v4916
    %v4918 = vrot.slane %v4896, %v4917
    %v4920 = vunpack.c.l.s4 1966171168
    %v4921 = vunpack.c.0.s8 %v4920
    %v4922 = vlaneseq
    %v4923 = vshrl.u32 %v4922, 7
    %v4924 = vsub.s32 %v4921, %v4923
    %v4925 = vrot.slane %v4897, %v4924
    %v4926 = vcombine.low %v4904, %v4911
    %v4927 = vcombine.low %v4918, %v4925
    %v4929 = vunpack.c.l.s4 1966171168
    %v4930 = vunpack.c.0.s8 %v4929
    %v4931 = vlaneseq
    %v4932 = vshrl.u32 %v4931, 7
    %v4933 = vsub.s32 %v4930, %v4932
    %v4934 = vrot.slane %v4926, %v4933
    %v4936 = vunpack.c.l.s4 1966171168
    %v4937 = vunpack.c.0.s8 %v4936
    %v4938 = vlaneseq
    %v4939 = vshrl.u32 %v4938, 7
    %v4940 = vsub.s32 %v4937, %v4939
    %v4941 = vrot.slane %v4927, %v4940
    %v4942 = vcombine.low %v4934, %v4941
    %v4943 = vcombine.low %v2235, %v2239
    %v4944 = vcombine.low %v2243, %v2247
    %v4945 = vcombine.low %v2251, %v2255
    %v4946 = vcombine.low %v2259, %v2263
    %v4948 = vunpack.c.l.s4 1966171168
    %v4949 = vunpack.c.0.s8 %v4948
    %v4950 = vlaneseq
    %v4951 = vshrl.u32 %v4950, 7
    %v4952 = vsub.s32 %v4949, %v4951
    %v4953 = vrot.slane %v4943, %v4952
    %v4955 = vunpack.c.l.s4 1966171168
    %v4956 = vunpack.c.0.s8 %v4955
    %v4957 = vlaneseq
    %v4958 = vshrl.u32 %v4957, 7
    %v4959 = vsub.s32 %v4956, %v4958
    %v4960 = vrot.slane %v4944, %v4959
    %v4962 = vunpack.c.l.s4 1966171168
    %v4963 = vunpack.c.0.s8 %v4962
    %v4964 = vlaneseq
    %v4965 = vshrl.u32 %v4964, 7
    %v4966 = vsub.s32 %v4963, %v4965
    %v4967 = vrot.slane %v4945, %v4966
    %v4969 = vunpack.c.l.s4 1966171168
    %v4970 = vunpack.c.0.s8 %v4969
    %v4971 = vlaneseq
    %v4972 = vshrl.u32 %v4971, 7
    %v4973 = vsub.s32 %v4970, %v4972
    %v4974 = vrot.slane %v4946, %v4973
    %v4975 = vcombine.low %v4953, %v4960
    %v4976 = vcombine.low %v4967, %v4974
    %v4978 = vunpack.c.l.s4 1966171168
    %v4979 = vunpack.c.0.s8 %v4978
    %v4980 = vlaneseq
    %v4981 = vshrl.u32 %v4980, 7
    %v4982 = vsub.s32 %v4979, %v4981
    %v4983 = vrot.slane %v4975, %v4982
    %v4985 = vunpack.c.l.s4 1966171168
    %v4986 = vunpack.c.0.s8 %v4985
    %v4987 = vlaneseq
    %v4988 = vshrl.u32 %v4987, 7
    %v4989 = vsub.s32 %v4986, %v4988
    %v4990 = vrot.slane %v4976, %v4989
    %v4991 = vcombine.low %v4983, %v4990
    %v4992 = vcombine.low %v2267, %v2271
    %v4993 = vcombine.low %v2275, %v2279
    %v4994 = vcombine.low %v2283, %v2287
    %v4995 = vcombine.low %v2291, %v2295
    %v4997 = vunpack.c.l.s4 1966171168
    %v4998 = vunpack.c.0.s8 %v4997
    %v4999 = vlaneseq
    %v5000 = vshrl.u32 %v4999, 7
    %v5001 = vsub.s32 %v4998, %v5000
    %v5002 = vrot.slane %v4992, %v5001
    %v5004 = vunpack.c.l.s4 1966171168
    %v5005 = vunpack.c.0.s8 %v5004
    %v5006 = vlaneseq
    %v5007 = vshrl.u32 %v5006, 7
    %v5008 = vsub.s32 %v5005, %v5007
    %v5009 = vrot.slane %v4993, %v5008
    %v5011 = vunpack.c.l.s4 1966171168
    %v5012 = vunpack.c.0.s8 %v5011
    %v5013 = vlaneseq
    %v5014 = vshrl.u32 %v5013, 7
    %v5015 = vsub.s32 %v5012, %v5014
    %v5016 = vrot.slane %v4994, %v5015
    %v5018 = vunpack.c.l.s4 1966171168
    %v5019 = vunpack.c.0.s8 %v5018
    %v5020 = vlaneseq
    %v5021 = vshrl.u32 %v5020, 7
    %v5022 = vsub.s32 %v5019, %v5021
    %v5023 = vrot.slane %v4995, %v5022
    %v5024 = vcombine.low %v5002, %v5009
    %v5025 = vcombine.low %v5016, %v5023
    %v5027 = vunpack.c.l.s4 1966171168
    %v5028 = vunpack.c.0.s8 %v5027
    %v5029 = vlaneseq
    %v5030 = vshrl.u32 %v5029, 7
    %v5031 = vsub.s32 %v5028, %v5030
    %v5032 = vrot.slane %v5024, %v5031
    %v5034 = vunpack.c.l.s4 1966171168
    %v5035 = vunpack.c.0.s8 %v5034
    %v5036 = vlaneseq
    %v5037 = vshrl.u32 %v5036, 7
    %v5038 = vsub.s32 %v5035, %v5037
    %v5039 = vrot.slane %v5025, %v5038
    %v5040 = vcombine.low %v5032, %v5039
    %v5041 = vcombine.low %v2299, %v2303
    %v5042 = vcombine.low %v2307, %v2311
    %v5043 = vcombine.low %v2315, %v2319
    %v5044 = vcombine.low %v2323, %v2327
    %v5046 = vunpack.c.l.s4 1966171168
    %v5047 = vunpack.c.0.s8 %v5046
    %v5048 = vlaneseq
    %v5049 = vshrl.u32 %v5048, 7
    %v5050 = vsub.s32 %v5047, %v5049
    %v5051 = vrot.slane %v5041, %v5050
    %v5053 = vunpack.c.l.s4 1966171168
    %v5054 = vunpack.c.0.s8 %v5053
    %v5055 = vlaneseq
    %v5056 = vshrl.u32 %v5055, 7
    %v5057 = vsub.s32 %v5054, %v5056
    %v5058 = vrot.slane %v5042, %v5057
    %v5060 = vunpack.c.l.s4 1966171168
    %v5061 = vunpack.c.0.s8 %v5060
    %v5062 = vlaneseq
    %v5063 = vshrl.u32 %v5062, 7
    %v5064 = vsub.s32 %v5061, %v5063
    %v5065 = vrot.slane %v5043, %v5064
    %v5067 = vunpack.c.l.s4 1966171168
    %v5068 = vunpack.c.0.s8 %v5067
    %v5069 = vlaneseq
    %v5070 = vshrl.u32 %v5069, 7
    %v5071 = vsub.s32 %v5068, %v5070
    %v5072 = vrot.slane %v5044, %v5071
    %v5073 = vcombine.low %v5051, %v5058
    %v5074 = vcombine.low %v5065, %v5072
    %v5076 = vunpack.c.l.s4 1966171168
    %v5077 = vunpack.c.0.s8 %v5076
    %v5078 = vlaneseq
    %v5079 = vshrl.u32 %v5078, 7
    %v5080 = vsub.s32 %v5077, %v5079
    %v5081 = vrot.slane %v5073, %v5080
    %v5083 = vunpack.c.l.s4 1966171168
    %v5084 = vunpack.c.0.s8 %v5083
    %v5085 = vlaneseq
    %v5086 = vshrl.u32 %v5085, 7
    %v5087 = vsub.s32 %v5084, %v5086
    %v5088 = vrot.slane %v5074, %v5087
    %v5089 = vcombine.low %v5081, %v5088
    %v5090 = vcombine.low %v2331, %v2335
    %v5091 = vcombine.low %v2339, %v2343
    %v5092 = vcombine.low %v2347, %v2351
    %v5093 = vcombine.low %v2355, %v2359
    %v5095 = vunpack.c.l.s4 1966171168
    %v5096 = vunpack.c.0.s8 %v5095
    %v5097 = vlaneseq
    %v5098 = vshrl.u32 %v5097, 7
    %v5099 = vsub.s32 %v5096, %v5098
    %v5100 = vrot.slane %v5090, %v5099
    %v5102 = vunpack.c.l.s4 1966171168
    %v5103 = vunpack.c.0.s8 %v5102
    %v5104 = vlaneseq
    %v5105 = vshrl.u32 %v5104, 7
    %v5106 = vsub.s32 %v5103, %v5105
    %v5107 = vrot.slane %v5091, %v5106
    %v5109 = vunpack.c.l.s4 1966171168
    %v5110 = vunpack.c.0.s8 %v5109
    %v5111 = vlaneseq
    %v5112 = vshrl.u32 %v5111, 7
    %v5113 = vsub.s32 %v5110, %v5112
    %v5114 = vrot.slane %v5092, %v5113
    %v5116 = vunpack.c.l.s4 1966171168
    %v5117 = vunpack.c.0.s8 %v5116
    %v5118 = vlaneseq
    %v5119 = vshrl.u32 %v5118, 7
    %v5120 = vsub.s32 %v5117, %v5119
    %v5121 = vrot.slane %v5093, %v5120
    %v5122 = vcombine.low %v5100, %v5107
    %v5123 = vcombine.low %v5114, %v5121
    %v5125 = vunpack.c.l.s4 1966171168
    %v5126 = vunpack.c.0.s8 %v5125
    %v5127 = vlaneseq
    %v5128 = vshrl.u32 %v5127, 7
    %v5129 = vsub.s32 %v5126, %v5128
    %v5130 = vrot.slane %v5122, %v5129
    %v5132 = vunpack.c.l.s4 1966171168
    %v5133 = vunpack.c.0.s8 %v5132
    %v5134 = vlaneseq
    %v5135 = vshrl.u32 %v5134, 7
    %v5136 = vsub.s32 %v5133, %v5135
    %v5137 = vrot.slane %v5123, %v5136
    %v5138 = vcombine.low %v5130, %v5137
    %v5139 = vcombine.low %v2363, %v2367
    %v5140 = vcombine.low %v2371, %v2375
    %v5141 = vcombine.low %v2379, %v2383
    %v5142 = vcombine.low %v2387, %v2391
    %v5144 = vunpack.c.l.s4 1966171168
    %v5145 = vunpack.c.0.s8 %v5144
    %v5146 = vlaneseq
    %v5147 = vshrl.u32 %v5146, 7
    %v5148 = vsub.s32 %v5145, %v5147
    %v5149 = vrot.slane %v5139, %v5148
    %v5151 = vunpack.c.l.s4 1966171168
    %v5152 = vunpack.c.0.s8 %v5151
    %v5153 = vlaneseq
    %v5154 = vshrl.u32 %v5153, 7
    %v5155 = vsub.s32 %v5152, %v5154
    %v5156 = vrot.slane %v5140, %v5155
    %v5158 = vunpack.c.l.s4 1966171168
    %v5159 = vunpack.c.0.s8 %v5158
    %v5160 = vlaneseq
    %v5161 = vshrl.u32 %v5160, 7
    %v5162 = vsub.s32 %v5159, %v5161
    %v5163 = vrot.slane %v5141, %v5162
    %v5165 = vunpack.c.l.s4 1966171168
    %v5166 = vunpack.c.0.s8 %v5165
    %v5167 = vlaneseq
    %v5168 = vshrl.u32 %v5167, 7
    %v5169 = vsub.s32 %v5166, %v5168
    %v5170 = vrot.slane %v5142, %v5169
    %v5171 = vcombine.low %v5149, %v5156
    %v5172 = vcombine.low %v5163, %v5170
    %v5174 = vunpack.c.l.s4 1966171168
    %v5175 = vunpack.c.0.s8 %v5174
    %v5176 = vlaneseq
    %v5177 = vshrl.u32 %v5176, 7
    %v5178 = vsub.s32 %v5175, %v5177
    %v5179 = vrot.slane %v5171, %v5178
    %v5181 = vunpack.c.l.s4 1966171168
    %v5182 = vunpack.c.0.s8 %v5181
    %v5183 = vlaneseq
    %v5184 = vshrl.u32 %v5183, 7
    %v5185 = vsub.s32 %v5182, %v5184
    %v5186 = vrot.slane %v5172, %v5185
    %v5187 = vcombine.low %v5179, %v5186
    %v5188 = vcombine.low %v2395, %v2399
    %v5189 = vcombine.low %v2403, %v2407
    %v5190 = vcombine.low %v2411, %v2415
    %v5191 = vcombine.low %v2419, %v2423
    %v5193 = vunpack.c.l.s4 1966171168
    %v5194 = vunpack.c.0.s8 %v5193
    %v5195 = vlaneseq
    %v5196 = vshrl.u32 %v5195, 7
    %v5197 = vsub.s32 %v5194, %v5196
    %v5198 = vrot.slane %v5188, %v5197
    %v5200 = vunpack.c.l.s4 1966171168
    %v5201 = vunpack.c.0.s8 %v5200
    %v5202 = vlaneseq
    %v5203 = vshrl.u32 %v5202, 7
    %v5204 = vsub.s32 %v5201, %v5203
    %v5205 = vrot.slane %v5189, %v5204
    %v5207 = vunpack.c.l.s4 1966171168
    %v5208 = vunpack.c.0.s8 %v5207
    %v5209 = vlaneseq
    %v5210 = vshrl.u32 %v5209, 7
    %v5211 = vsub.s32 %v5208, %v5210
    %v5212 = vrot.slane %v5190, %v5211
    %v5214 = vunpack.c.l.s4 1966171168
    %v5215 = vunpack.c.0.s8 %v5214
    %v5216 = vlaneseq
    %v5217 = vshrl.u32 %v5216, 7
    %v5218 = vsub.s32 %v5215, %v5217
    %v5219 = vrot.slane %v5191, %v5218
    %v5220 = vcombine.low %v5198, %v5205
    %v5221 = vcombine.low %v5212, %v5219
    %v5223 = vunpack.c.l.s4 1966171168
    %v5224 = vunpack.c.0.s8 %v5223
    %v5225 = vlaneseq
    %v5226 = vshrl.u32 %v5225, 7
    %v5227 = vsub.s32 %v5224, %v5226
    %v5228 = vrot.slane %v5220, %v5227
    %v5230 = vunpack.c.l.s4 1966171168
    %v5231 = vunpack.c.0.s8 %v5230
    %v5232 = vlaneseq
    %v5233 = vshrl.u32 %v5232, 7
    %v5234 = vsub.s32 %v5231, %v5233
    %v5235 = vrot.slane %v5221, %v5234
    %v5236 = vcombine.low %v5228, %v5235
    %v5237 = vcombine.low %v2427, %v2431
    %v5238 = vcombine.low %v2435, %v2439
    %v5239 = vcombine.low %v2443, %v2447
    %v5240 = vcombine.low %v2451, %v2455
    %v5242 = vunpack.c.l.s4 1966171168
    %v5243 = vunpack.c.0.s8 %v5242
    %v5244 = vlaneseq
    %v5245 = vshrl.u32 %v5244, 7
    %v5246 = vsub.s32 %v5243, %v5245
    %v5247 = vrot.slane %v5237, %v5246
    %v5249 = vunpack.c.l.s4 1966171168
    %v5250 = vunpack.c.0.s8 %v5249
    %v5251 = vlaneseq
    %v5252 = vshrl.u32 %v5251, 7
    %v5253 = vsub.s32 %v5250, %v5252
    %v5254 = vrot.slane %v5238, %v5253
    %v5256 = vunpack.c.l.s4 1966171168
    %v5257 = vunpack.c.0.s8 %v5256
    %v5258 = vlaneseq
    %v5259 = vshrl.u32 %v5258, 7
    %v5260 = vsub.s32 %v5257, %v5259
    %v5261 = vrot.slane %v5239, %v5260
    %v5263 = vunpack.c.l.s4 1966171168
    %v5264 = vunpack.c.0.s8 %v5263
    %v5265 = vlaneseq
    %v5266 = vshrl.u32 %v5265, 7
    %v5267 = vsub.s32 %v5264, %v5266
    %v5268 = vrot.slane %v5240, %v5267
    %v5269 = vcombine.low %v5247, %v5254
    %v5270 = vcombine.low %v5261, %v5268
    %v5272 = vunpack.c.l.s4 1966171168
    %v5273 = vunpack.c.0.s8 %v5272
    %v5274 = vlaneseq
    %v5275 = vshrl.u32 %v5274, 7
    %v5276 = vsub.s32 %v5273, %v5275
    %v5277 = vrot.slane %v5269, %v5276
    %v5279 = vunpack.c.l.s4 1966171168
    %v5280 = vunpack.c.0.s8 %v5279
    %v5281 = vlaneseq
    %v5282 = vshrl.u32 %v5281, 7
    %v5283 = vsub.s32 %v5280, %v5282
    %v5284 = vrot.slane %v5270, %v5283
    %v5285 = vcombine.low %v5277, %v5284
    %v5286 = vcombine.low %v2459, %v2463
    %v5287 = vcombine.low %v2467, %v2471
    %v5288 = vcombine.low %v2475, %v2479
    %v5289 = vcombine.low %v2483, %v2487
    %v5291 = vunpack.c.l.s4 1966171168
    %v5292 = vunpack.c.0.s8 %v5291
    %v5293 = vlaneseq
    %v5294 = vshrl.u32 %v5293, 7
    %v5295 = vsub.s32 %v5292, %v5294
    %v5296 = vrot.slane %v5286, %v5295
    %v5298 = vunpack.c.l.s4 1966171168
    %v5299 = vunpack.c.0.s8 %v5298
    %v5300 = vlaneseq
    %v5301 = vshrl.u32 %v5300, 7
    %v5302 = vsub.s32 %v5299, %v5301
    %v5303 = vrot.slane %v5287, %v5302
    %v5305 = vunpack.c.l.s4 1966171168
    %v5306 = vunpack.c.0.s8 %v5305
    %v5307 = vlaneseq
    %v5308 = vshrl.u32 %v5307, 7
    %v5309 = vsub.s32 %v5306, %v5308
    %v5310 = vrot.slane %v5288, %v5309
    %v5312 = vunpack.c.l.s4 1966171168
    %v5313 = vunpack.c.0.s8 %v5312
    %v5314 = vlaneseq
    %v5315 = vshrl.u32 %v5314, 7
    %v5316 = vsub.s32 %v5313, %v5315
    %v5317 = vrot.slane %v5289, %v5316
    %v5318 = vcombine.low %v5296, %v5303
    %v5319 = vcombine.low %v5310, %v5317
    %v5321 = vunpack.c.l.s4 1966171168
    %v5322 = vunpack.c.0.s8 %v5321
    %v5323 = vlaneseq
    %v5324 = vshrl.u32 %v5323, 7
    %v5325 = vsub.s32 %v5322, %v5324
    %v5326 = vrot.slane %v5318, %v5325
    %v5328 = vunpack.c.l.s4 1966171168
    %v5329 = vunpack.c.0.s8 %v5328
    %v5330 = vlaneseq
    %v5331 = vshrl.u32 %v5330, 7
    %v5332 = vsub.s32 %v5329, %v5331
    %v5333 = vrot.slane %v5319, %v5332
    %v5334 = vcombine.low %v5326, %v5333
    %v5335 = vcombine.low %v2491, %v2495
    %v5336 = vcombine.low %v2499, %v2503
    %v5337 = vcombine.low %v2507, %v2511
    %v5338 = vcombine.low %v2515, %v2519
    %v5340 = vunpack.c.l.s4 1966171168
    %v5341 = vunpack.c.0.s8 %v5340
    %v5342 = vlaneseq
    %v5343 = vshrl.u32 %v5342, 7
    %v5344 = vsub.s32 %v5341, %v5343
    %v5345 = vrot.slane %v5335, %v5344
    %v5347 = vunpack.c.l.s4 1966171168
    %v5348 = vunpack.c.0.s8 %v5347
    %v5349 = vlaneseq
    %v5350 = vshrl.u32 %v5349, 7
    %v5351 = vsub.s32 %v5348, %v5350
    %v5352 = vrot.slane %v5336, %v5351
    %v5354 = vunpack.c.l.s4 1966171168
    %v5355 = vunpack.c.0.s8 %v5354
    %v5356 = vlaneseq
    %v5357 = vshrl.u32 %v5356, 7
    %v5358 = vsub.s32 %v5355, %v5357
    %v5359 = vrot.slane %v5337, %v5358
    %v5361 = vunpack.c.l.s4 1966171168
    %v5362 = vunpack.c.0.s8 %v5361
    %v5363 = vlaneseq
    %v5364 = vshrl.u32 %v5363, 7
    %v5365 = vsub.s32 %v5362, %v5364
    %v5366 = vrot.slane %v5338, %v5365
    %v5367 = vcombine.low %v5345, %v5352
    %v5368 = vcombine.low %v5359, %v5366
    %v5370 = vunpack.c.l.s4 1966171168
    %v5371 = vunpack.c.0.s8 %v5370
    %v5372 = vlaneseq
    %v5373 = vshrl.u32 %v5372, 7
    %v5374 = vsub.s32 %v5371, %v5373
    %v5375 = vrot.slane %v5367, %v5374
    %v5377 = vunpack.c.l.s4 1966171168
    %v5378 = vunpack.c.0.s8 %v5377
    %v5379 = vlaneseq
    %v5380 = vshrl.u32 %v5379, 7
    %v5381 = vsub.s32 %v5378, %v5380
    %v5382 = vrot.slane %v5368, %v5381
    %v5383 = vcombine.low %v5375, %v5382
    %v5384 = vcombine.low %v2523, %v2527
    %v5385 = vcombine.low %v2531, %v2535
    %v5386 = vcombine.low %v2539, %v2543
    %v5387 = vcombine.low %v2547, %v2551
    %v5389 = vunpack.c.l.s4 1966171168
    %v5390 = vunpack.c.0.s8 %v5389
    %v5391 = vlaneseq
    %v5392 = vshrl.u32 %v5391, 7
    %v5393 = vsub.s32 %v5390, %v5392
    %v5394 = vrot.slane %v5384, %v5393
    %v5396 = vunpack.c.l.s4 1966171168
    %v5397 = vunpack.c.0.s8 %v5396
    %v5398 = vlaneseq
    %v5399 = vshrl.u32 %v5398, 7
    %v5400 = vsub.s32 %v5397, %v5399
    %v5401 = vrot.slane %v5385, %v5400
    %v5403 = vunpack.c.l.s4 1966171168
    %v5404 = vunpack.c.0.s8 %v5403
    %v5405 = vlaneseq
    %v5406 = vshrl.u32 %v5405, 7
    %v5407 = vsub.s32 %v5404, %v5406
    %v5408 = vrot.slane %v5386, %v5407
    %v5410 = vunpack.c.l.s4 1966171168
    %v5411 = vunpack.c.0.s8 %v5410
    %v5412 = vlaneseq
    %v5413 = vshrl.u32 %v5412, 7
    %v5414 = vsub.s32 %v5411, %v5413
    %v5415 = vrot.slane %v5387, %v5414
    %v5416 = vcombine.low %v5394, %v5401
    %v5417 = vcombine.low %v5408, %v5415
    %v5419 = vunpack.c.l.s4 1966171168
    %v5420 = vunpack.c.0.s8 %v5419
    %v5421 = vlaneseq
    %v5422 = vshrl.u32 %v5421, 7
    %v5423 = vsub.s32 %v5420, %v5422
    %v5424 = vrot.slane %v5416, %v5423
    %v5426 = vunpack.c.l.s4 1966171168
    %v5427 = vunpack.c.0.s8 %v5426
    %v5428 = vlaneseq
    %v5429 = vshrl.u32 %v5428, 7
    %v5430 = vsub.s32 %v5427, %v5429
    %v5431 = vrot.slane %v5417, %v5430
    %v5432 = vcombine.low %v5424, %v5431
    %v5433 = vcombine.low %v2555, %v2559
    %v5434 = vcombine.low %v2563, %v2567
    %v5435 = vcombine.low %v2571, %v2575
    %v5436 = vcombine.low %v2579, %v2583
    %v5438 = vunpack.c.l.s4 1966171168
    %v5439 = vunpack.c.0.s8 %v5438
    %v5440 = vlaneseq
    %v5441 = vshrl.u32 %v5440, 7
    %v5442 = vsub.s32 %v5439, %v5441
    %v5443 = vrot.slane %v5433, %v5442
    %v5445 = vunpack.c.l.s4 1966171168
    %v5446 = vunpack.c.0.s8 %v5445
    %v5447 = vlaneseq
    %v5448 = vshrl.u32 %v5447, 7
    %v5449 = vsub.s32 %v5446, %v5448
    %v5450 = vrot.slane %v5434, %v5449
    %v5452 = vunpack.c.l.s4 1966171168
    %v5453 = vunpack.c.0.s8 %v5452
    %v5454 = vlaneseq
    %v5455 = vshrl.u32 %v5454, 7
    %v5456 = vsub.s32 %v5453, %v5455
    %v5457 = vrot.slane %v5435, %v5456
    %v5459 = vunpack.c.l.s4 1966171168
    %v5460 = vunpack.c.0.s8 %v5459
    %v5461 = vlaneseq
    %v5462 = vshrl.u32 %v5461, 7
    %v5463 = vsub.s32 %v5460, %v5462
    %v5464 = vrot.slane %v5436, %v5463
    %v5465 = vcombine.low %v5443, %v5450
    %v5466 = vcombine.low %v5457, %v5464
    %v5468 = vunpack.c.l.s4 1966171168
    %v5469 = vunpack.c.0.s8 %v5468
    %v5470 = vlaneseq
    %v5471 = vshrl.u32 %v5470, 7
    %v5472 = vsub.s32 %v5469, %v5471
    %v5473 = vrot.slane %v5465, %v5472
    %v5475 = vunpack.c.l.s4 1966171168
    %v5476 = vunpack.c.0.s8 %v5475
    %v5477 = vlaneseq
    %v5478 = vshrl.u32 %v5477, 7
    %v5479 = vsub.s32 %v5476, %v5478
    %v5480 = vrot.slane %v5466, %v5479
    %v5481 = vcombine.low %v5473, %v5480
    %v5482 = vcombine.low %v2587, %v2591
    %v5483 = vcombine.low %v2595, %v2599
    %v5484 = vcombine.low %v2603, %v2607
    %v5485 = vcombine.low %v2611, %v2615
    %v5487 = vunpack.c.l.s4 1966171168
    %v5488 = vunpack.c.0.s8 %v5487
    %v5489 = vlaneseq
    %v5490 = vshrl.u32 %v5489, 7
    %v5491 = vsub.s32 %v5488, %v5490
    %v5492 = vrot.slane %v5482, %v5491
    %v5494 = vunpack.c.l.s4 1966171168
    %v5495 = vunpack.c.0.s8 %v5494
    %v5496 = vlaneseq
    %v5497 = vshrl.u32 %v5496, 7
    %v5498 = vsub.s32 %v5495, %v5497
    %v5499 = vrot.slane %v5483, %v5498
    %v5501 = vunpack.c.l.s4 1966171168
    %v5502 = vunpack.c.0.s8 %v5501
    %v5503 = vlaneseq
    %v5504 = vshrl.u32 %v5503, 7
    %v5505 = vsub.s32 %v5502, %v5504
    %v5506 = vrot.slane %v5484, %v5505
    %v5508 = vunpack.c.l.s4 1966171168
    %v5509 = vunpack.c.0.s8 %v5508
    %v5510 = vlaneseq
    %v5511 = vshrl.u32 %v5510, 7
    %v5512 = vsub.s32 %v5509, %v5511
    %v5513 = vrot.slane %v5485, %v5512
    %v5514 = vcombine.low %v5492, %v5499
    %v5515 = vcombine.low %v5506, %v5513
    %v5517 = vunpack.c.l.s4 1966171168
    %v5518 = vunpack.c.0.s8 %v5517
    %v5519 = vlaneseq
    %v5520 = vshrl.u32 %v5519, 7
    %v5521 = vsub.s32 %v5518, %v5520
    %v5522 = vrot.slane %v5514, %v5521
    %v5524 = vunpack.c.l.s4 1966171168
    %v5525 = vunpack.c.0.s8 %v5524
    %v5526 = vlaneseq
    %v5527 = vshrl.u32 %v5526, 7
    %v5528 = vsub.s32 %v5525, %v5527
    %v5529 = vrot.slane %v5515, %v5528
    %v5530 = vcombine.low %v5522, %v5529
    %v5531 = vcombine.low %v2619, %v2623
    %v5532 = vcombine.low %v2627, %v2631
    %v5533 = vcombine.low %v2635, %v2639
    %v5534 = vcombine.low %v2643, %v2647
    %v5536 = vunpack.c.l.s4 1966171168
    %v5537 = vunpack.c.0.s8 %v5536
    %v5538 = vlaneseq
    %v5539 = vshrl.u32 %v5538, 7
    %v5540 = vsub.s32 %v5537, %v5539
    %v5541 = vrot.slane %v5531, %v5540
    %v5543 = vunpack.c.l.s4 1966171168
    %v5544 = vunpack.c.0.s8 %v5543
    %v5545 = vlaneseq
    %v5546 = vshrl.u32 %v5545, 7
    %v5547 = vsub.s32 %v5544, %v5546
    %v5548 = vrot.slane %v5532, %v5547
    %v5550 = vunpack.c.l.s4 1966171168
    %v5551 = vunpack.c.0.s8 %v5550
    %v5552 = vlaneseq
    %v5553 = vshrl.u32 %v5552, 7
    %v5554 = vsub.s32 %v5551, %v5553
    %v5555 = vrot.slane %v5533, %v5554
    %v5557 = vunpack.c.l.s4 1966171168
    %v5558 = vunpack.c.0.s8 %v5557
    %v5559 = vlaneseq
    %v5560 = vshrl.u32 %v5559, 7
    %v5561 = vsub.s32 %v5558, %v5560
    %v5562 = vrot.slane %v5534, %v5561
    %v5563 = vcombine.low %v5541, %v5548
    %v5564 = vcombine.low %v5555, %v5562
    %v5566 = vunpack.c.l.s4 1966171168
    %v5567 = vunpack.c.0.s8 %v5566
    %v5568 = vlaneseq
    %v5569 = vshrl.u32 %v5568, 7
    %v5570 = vsub.s32 %v5567, %v5569
    %v5571 = vrot.slane %v5563, %v5570
    %v5573 = vunpack.c.l.s4 1966171168
    %v5574 = vunpack.c.0.s8 %v5573
    %v5575 = vlaneseq
    %v5576 = vshrl.u32 %v5575, 7
    %v5577 = vsub.s32 %v5574, %v5576
    %v5578 = vrot.slane %v5564, %v5577
    %v5579 = vcombine.low %v5571, %v5578
    %v5580 = vcombine.low %v2651, %v2655
    %v5581 = vcombine.low %v2659, %v2663
    %v5582 = vcombine.low %v2667, %v2671
    %v5583 = vcombine.low %v2675, %v2679
    %v5585 = vunpack.c.l.s4 1966171168
    %v5586 = vunpack.c.0.s8 %v5585
    %v5587 = vlaneseq
    %v5588 = vshrl.u32 %v5587, 7
    %v5589 = vsub.s32 %v5586, %v5588
    %v5590 = vrot.slane %v5580, %v5589
    %v5592 = vunpack.c.l.s4 1966171168
    %v5593 = vunpack.c.0.s8 %v5592
    %v5594 = vlaneseq
    %v5595 = vshrl.u32 %v5594, 7
    %v5596 = vsub.s32 %v5593, %v5595
    %v5597 = vrot.slane %v5581, %v5596
    %v5599 = vunpack.c.l.s4 1966171168
    %v5600 = vunpack.c.0.s8 %v5599
    %v5601 = vlaneseq
    %v5602 = vshrl.u32 %v5601, 7
    %v5603 = vsub.s32 %v5600, %v5602
    %v5604 = vrot.slane %v5582, %v5603
    %v5606 = vunpack.c.l.s4 1966171168
    %v5607 = vunpack.c.0.s8 %v5606
    %v5608 = vlaneseq
    %v5609 = vshrl.u32 %v5608, 7
    %v5610 = vsub.s32 %v5607, %v5609
    %v5611 = vrot.slane %v5583, %v5610
    %v5612 = vcombine.low %v5590, %v5597
    %v5613 = vcombine.low %v5604, %v5611
    %v5615 = vunpack.c.l.s4 1966171168
    %v5616 = vunpack.c.0.s8 %v5615
    %v5617 = vlaneseq
    %v5618 = vshrl.u32 %v5617, 7
    %v5619 = vsub.s32 %v5616, %v5618
    %v5620 = vrot.slane %v5612, %v5619
    %v5622 = vunpack.c.l.s4 1966171168
    %v5623 = vunpack.c.0.s8 %v5622
    %v5624 = vlaneseq
    %v5625 = vshrl.u32 %v5624, 7
    %v5626 = vsub.s32 %v5623, %v5625
    %v5627 = vrot.slane %v5613, %v5626
    %v5628 = vcombine.low %v5620, %v5627
    %v5629 = vcombine.low %v2683, %v2687
    %v5630 = vcombine.low %v2691, %v2695
    %v5631 = vcombine.low %v2699, %v2703
    %v5632 = vcombine.low %v2707, %v2711
    %v5634 = vunpack.c.l.s4 1966171168
    %v5635 = vunpack.c.0.s8 %v5634
    %v5636 = vlaneseq
    %v5637 = vshrl.u32 %v5636, 7
    %v5638 = vsub.s32 %v5635, %v5637
    %v5639 = vrot.slane %v5629, %v5638
    %v5641 = vunpack.c.l.s4 1966171168
    %v5642 = vunpack.c.0.s8 %v5641
    %v5643 = vlaneseq
    %v5644 = vshrl.u32 %v5643, 7
    %v5645 = vsub.s32 %v5642, %v5644
    %v5646 = vrot.slane %v5630, %v5645
    %v5648 = vunpack.c.l.s4 1966171168
    %v5649 = vunpack.c.0.s8 %v5648
    %v5650 = vlaneseq
    %v5651 = vshrl.u32 %v5650, 7
    %v5652 = vsub.s32 %v5649, %v5651
    %v5653 = vrot.slane %v5631, %v5652
    %v5655 = vunpack.c.l.s4 1966171168
    %v5656 = vunpack.c.0.s8 %v5655
    %v5657 = vlaneseq
    %v5658 = vshrl.u32 %v5657, 7
    %v5659 = vsub.s32 %v5656, %v5658
    %v5660 = vrot.slane %v5632, %v5659
    %v5661 = vcombine.low %v5639, %v5646
    %v5662 = vcombine.low %v5653, %v5660
    %v5664 = vunpack.c.l.s4 1966171168
    %v5665 = vunpack.c.0.s8 %v5664
    %v5666 = vlaneseq
    %v5667 = vshrl.u32 %v5666, 7
    %v5668 = vsub.s32 %v5665, %v5667
    %v5669 = vrot.slane %v5661, %v5668
    %v5671 = vunpack.c.l.s4 1966171168
    %v5672 = vunpack.c.0.s8 %v5671
    %v5673 = vlaneseq
    %v5674 = vshrl.u32 %v5673, 7
    %v5675 = vsub.s32 %v5672, %v5674
    %v5676 = vrot.slane %v5662, %v5675
    %v5677 = vcombine.low %v5669, %v5676
    %v5678 = vcombine.low %v2715, %v2719
    %v5679 = vcombine.low %v2723, %v2727
    %v5680 = vcombine.low %v2731, %v2735
    %v5681 = vcombine.low %v2739, %v2743
    %v5683 = vunpack.c.l.s4 1966171168
    %v5684 = vunpack.c.0.s8 %v5683
    %v5685 = vlaneseq
    %v5686 = vshrl.u32 %v5685, 7
    %v5687 = vsub.s32 %v5684, %v5686
    %v5688 = vrot.slane %v5678, %v5687
    %v5690 = vunpack.c.l.s4 1966171168
    %v5691 = vunpack.c.0.s8 %v5690
    %v5692 = vlaneseq
    %v5693 = vshrl.u32 %v5692, 7
    %v5694 = vsub.s32 %v5691, %v5693
    %v5695 = vrot.slane %v5679, %v5694
    %v5697 = vunpack.c.l.s4 1966171168
    %v5698 = vunpack.c.0.s8 %v5697
    %v5699 = vlaneseq
    %v5700 = vshrl.u32 %v5699, 7
    %v5701 = vsub.s32 %v5698, %v5700
    %v5702 = vrot.slane %v5680, %v5701
    %v5704 = vunpack.c.l.s4 1966171168
    %v5705 = vunpack.c.0.s8 %v5704
    %v5706 = vlaneseq
    %v5707 = vshrl.u32 %v5706, 7
    %v5708 = vsub.s32 %v5705, %v5707
    %v5709 = vrot.slane %v5681, %v5708
    %v5710 = vcombine.low %v5688, %v5695
    %v5711 = vcombine.low %v5702, %v5709
    %v5713 = vunpack.c.l.s4 1966171168
    %v5714 = vunpack.c.0.s8 %v5713
    %v5715 = vlaneseq
    %v5716 = vshrl.u32 %v5715, 7
    %v5717 = vsub.s32 %v5714, %v5716
    %v5718 = vrot.slane %v5710, %v5717
    %v5720 = vunpack.c.l.s4 1966171168
    %v5721 = vunpack.c.0.s8 %v5720
    %v5722 = vlaneseq
    %v5723 = vshrl.u32 %v5722, 7
    %v5724 = vsub.s32 %v5721, %v5723
    %v5725 = vrot.slane %v5711, %v5724
    %v5726 = vcombine.low %v5718, %v5725
    %v5727 = vcombine.low %v2747, %v2751
    %v5728 = vcombine.low %v2755, %v2759
    %v5729 = vcombine.low %v2763, %v2767
    %v5730 = vcombine.low %v2771, %v2775
    %v5732 = vunpack.c.l.s4 1966171168
    %v5733 = vunpack.c.0.s8 %v5732
    %v5734 = vlaneseq
    %v5735 = vshrl.u32 %v5734, 7
    %v5736 = vsub.s32 %v5733, %v5735
    %v5737 = vrot.slane %v5727, %v5736
    %v5739 = vunpack.c.l.s4 1966171168
    %v5740 = vunpack.c.0.s8 %v5739
    %v5741 = vlaneseq
    %v5742 = vshrl.u32 %v5741, 7
    %v5743 = vsub.s32 %v5740, %v5742
    %v5744 = vrot.slane %v5728, %v5743
    %v5746 = vunpack.c.l.s4 1966171168
    %v5747 = vunpack.c.0.s8 %v5746
    %v5748 = vlaneseq
    %v5749 = vshrl.u32 %v5748, 7
    %v5750 = vsub.s32 %v5747, %v5749
    %v5751 = vrot.slane %v5729, %v5750
    %v5753 = vunpack.c.l.s4 1966171168
    %v5754 = vunpack.c.0.s8 %v5753
    %v5755 = vlaneseq
    %v5756 = vshrl.u32 %v5755, 7
    %v5757 = vsub.s32 %v5754, %v5756
    %v5758 = vrot.slane %v5730, %v5757
    %v5759 = vcombine.low %v5737, %v5744
    %v5760 = vcombine.low %v5751, %v5758
    %v5762 = vunpack.c.l.s4 1966171168
    %v5763 = vunpack.c.0.s8 %v5762
    %v5764 = vlaneseq
    %v5765 = vshrl.u32 %v5764, 7
    %v5766 = vsub.s32 %v5763, %v5765
    %v5767 = vrot.slane %v5759, %v5766
    %v5769 = vunpack.c.l.s4 1966171168
    %v5770 = vunpack.c.0.s8 %v5769
    %v5771 = vlaneseq
    %v5772 = vshrl.u32 %v5771, 7
    %v5773 = vsub.s32 %v5770, %v5772
    %v5774 = vrot.slane %v5760, %v5773
    %v5775 = vcombine.low %v5767, %v5774
    %v5776 = vcombine.low %v2779, %v2783
    %v5777 = vcombine.low %v2787, %v2791
    %v5778 = vcombine.low %v2795, %v2799
    %v5779 = vcombine.low %v2803, %v2807
    %v5781 = vunpack.c.l.s4 1966171168
    %v5782 = vunpack.c.0.s8 %v5781
    %v5783 = vlaneseq
    %v5784 = vshrl.u32 %v5783, 7
    %v5785 = vsub.s32 %v5782, %v5784
    %v5786 = vrot.slane %v5776, %v5785
    %v5788 = vunpack.c.l.s4 1966171168
    %v5789 = vunpack.c.0.s8 %v5788
    %v5790 = vlaneseq
    %v5791 = vshrl.u32 %v5790, 7
    %v5792 = vsub.s32 %v5789, %v5791
    %v5793 = vrot.slane %v5777, %v5792
    %v5795 = vunpack.c.l.s4 1966171168
    %v5796 = vunpack.c.0.s8 %v5795
    %v5797 = vlaneseq
    %v5798 = vshrl.u32 %v5797, 7
    %v5799 = vsub.s32 %v5796, %v5798
    %v5800 = vrot.slane %v5778, %v5799
    %v5802 = vunpack.c.l.s4 1966171168
    %v5803 = vunpack.c.0.s8 %v5802
    %v5804 = vlaneseq
    %v5805 = vshrl.u32 %v5804, 7
    %v5806 = vsub.s32 %v5803, %v5805
    %v5807 = vrot.slane %v5779, %v5806
    %v5808 = vcombine.low %v5786, %v5793
    %v5809 = vcombine.low %v5800, %v5807
    %v5811 = vunpack.c.l.s4 1966171168
    %v5812 = vunpack.c.0.s8 %v5811
    %v5813 = vlaneseq
    %v5814 = vshrl.u32 %v5813, 7
    %v5815 = vsub.s32 %v5812, %v5814
    %v5816 = vrot.slane %v5808, %v5815
    %v5818 = vunpack.c.l.s4 1966171168
    %v5819 = vunpack.c.0.s8 %v5818
    %v5820 = vlaneseq
    %v5821 = vshrl.u32 %v5820, 7
    %v5822 = vsub.s32 %v5819, %v5821
    %v5823 = vrot.slane %v5809, %v5822
    %v5824 = vcombine.low %v5816, %v5823
    %v5825 = vcombine.low %v2811, %v2815
    %v5826 = vcombine.low %v2819, %v2823
    %v5827 = vcombine.low %v2827, %v2831
    %v5828 = vcombine.low %v2835, %v2839
    %v5830 = vunpack.c.l.s4 1966171168
    %v5831 = vunpack.c.0.s8 %v5830
    %v5832 = vlaneseq
    %v5833 = vshrl.u32 %v5832, 7
    %v5834 = vsub.s32 %v5831, %v5833
    %v5835 = vrot.slane %v5825, %v5834
    %v5837 = vunpack.c.l.s4 1966171168
    %v5838 = vunpack.c.0.s8 %v5837
    %v5839 = vlaneseq
    %v5840 = vshrl.u32 %v5839, 7
    %v5841 = vsub.s32 %v5838, %v5840
    %v5842 = vrot.slane %v5826, %v5841
    %v5844 = vunpack.c.l.s4 1966171168
    %v5845 = vunpack.c.0.s8 %v5844
    %v5846 = vlaneseq
    %v5847 = vshrl.u32 %v5846, 7
    %v5848 = vsub.s32 %v5845, %v5847
    %v5849 = vrot.slane %v5827, %v5848
    %v5851 = vunpack.c.l.s4 1966171168
    %v5852 = vunpack.c.0.s8 %v5851
    %v5853 = vlaneseq
    %v5854 = vshrl.u32 %v5853, 7
    %v5855 = vsub.s32 %v5852, %v5854
    %v5856 = vrot.slane %v5828, %v5855
    %v5857 = vcombine.low %v5835, %v5842
    %v5858 = vcombine.low %v5849, %v5856
    %v5860 = vunpack.c.l.s4 1966171168
    %v5861 = vunpack.c.0.s8 %v5860
    %v5862 = vlaneseq
    %v5863 = vshrl.u32 %v5862, 7
    %v5864 = vsub.s32 %v5861, %v5863
    %v5865 = vrot.slane %v5857, %v5864
    %v5867 = vunpack.c.l.s4 1966171168
    %v5868 = vunpack.c.0.s8 %v5867
    %v5869 = vlaneseq
    %v5870 = vshrl.u32 %v5869, 7
    %v5871 = vsub.s32 %v5868, %v5870
    %v5872 = vrot.slane %v5858, %v5871
    %v5873 = vcombine.low %v5865, %v5872
    %v5874 = vcombine.low %v2843, %v2847
    %v5875 = vcombine.low %v2851, %v2855
    %v5876 = vcombine.low %v2859, %v2863
    %v5877 = vcombine.low %v2867, %v2871
    %v5879 = vunpack.c.l.s4 1966171168
    %v5880 = vunpack.c.0.s8 %v5879
    %v5881 = vlaneseq
    %v5882 = vshrl.u32 %v5881, 7
    %v5883 = vsub.s32 %v5880, %v5882
    %v5884 = vrot.slane %v5874, %v5883
    %v5886 = vunpack.c.l.s4 1966171168
    %v5887 = vunpack.c.0.s8 %v5886
    %v5888 = vlaneseq
    %v5889 = vshrl.u32 %v5888, 7
    %v5890 = vsub.s32 %v5887, %v5889
    %v5891 = vrot.slane %v5875, %v5890
    %v5893 = vunpack.c.l.s4 1966171168
    %v5894 = vunpack.c.0.s8 %v5893
    %v5895 = vlaneseq
    %v5896 = vshrl.u32 %v5895, 7
    %v5897 = vsub.s32 %v5894, %v5896
    %v5898 = vrot.slane %v5876, %v5897
    %v5900 = vunpack.c.l.s4 1966171168
    %v5901 = vunpack.c.0.s8 %v5900
    %v5902 = vlaneseq
    %v5903 = vshrl.u32 %v5902, 7
    %v5904 = vsub.s32 %v5901, %v5903
    %v5905 = vrot.slane %v5877, %v5904
    %v5906 = vcombine.low %v5884, %v5891
    %v5907 = vcombine.low %v5898, %v5905
    %v5909 = vunpack.c.l.s4 1966171168
    %v5910 = vunpack.c.0.s8 %v5909
    %v5911 = vlaneseq
    %v5912 = vshrl.u32 %v5911, 7
    %v5913 = vsub.s32 %v5910, %v5912
    %v5914 = vrot.slane %v5906, %v5913
    %v5916 = vunpack.c.l.s4 1966171168
    %v5917 = vunpack.c.0.s8 %v5916
    %v5918 = vlaneseq
    %v5919 = vshrl.u32 %v5918, 7
    %v5920 = vsub.s32 %v5917, %v5919
    %v5921 = vrot.slane %v5907, %v5920
    %v5922 = vcombine.low %v5914, %v5921
    %v5923 = vcombine.low %v2875, %v2879
    %v5924 = vcombine.low %v2883, %v2887
    %v5925 = vcombine.low %v2891, %v2895
    %v5926 = vcombine.low %v2899, %v2903
    %v5928 = vunpack.c.l.s4 1966171168
    %v5929 = vunpack.c.0.s8 %v5928
    %v5930 = vlaneseq
    %v5931 = vshrl.u32 %v5930, 7
    %v5932 = vsub.s32 %v5929, %v5931
    %v5933 = vrot.slane %v5923, %v5932
    %v5935 = vunpack.c.l.s4 1966171168
    %v5936 = vunpack.c.0.s8 %v5935
    %v5937 = vlaneseq
    %v5938 = vshrl.u32 %v5937, 7
    %v5939 = vsub.s32 %v5936, %v5938
    %v5940 = vrot.slane %v5924, %v5939
    %v5942 = vunpack.c.l.s4 1966171168
    %v5943 = vunpack.c.0.s8 %v5942
    %v5944 = vlaneseq
    %v5945 = vshrl.u32 %v5944, 7
    %v5946 = vsub.s32 %v5943, %v5945
    %v5947 = vrot.slane %v5925, %v5946
    %v5949 = vunpack.c.l.s4 1966171168
    %v5950 = vunpack.c.0.s8 %v5949
    %v5951 = vlaneseq
    %v5952 = vshrl.u32 %v5951, 7
    %v5953 = vsub.s32 %v5950, %v5952
    %v5954 = vrot.slane %v5926, %v5953
    %v5955 = vcombine.low %v5933, %v5940
    %v5956 = vcombine.low %v5947, %v5954
    %v5958 = vunpack.c.l.s4 1966171168
    %v5959 = vunpack.c.0.s8 %v5958
    %v5960 = vlaneseq
    %v5961 = vshrl.u32 %v5960, 7
    %v5962 = vsub.s32 %v5959, %v5961
    %v5963 = vrot.slane %v5955, %v5962
    %v5965 = vunpack.c.l.s4 1966171168
    %v5966 = vunpack.c.0.s8 %v5965
    %v5967 = vlaneseq
    %v5968 = vshrl.u32 %v5967, 7
    %v5969 = vsub.s32 %v5966, %v5968
    %v5970 = vrot.slane %v5956, %v5969
    %v5971 = vcombine.low %v5963, %v5970
    %v5972 = vcombine.low %v2907, %v2911
    %v5973 = vcombine.low %v2915, %v2919
    %v5974 = vcombine.low %v2923, %v2927
    %v5975 = vcombine.low %v2931, %v2935
    %v5977 = vunpack.c.l.s4 1966171168
    %v5978 = vunpack.c.0.s8 %v5977
    %v5979 = vlaneseq
    %v5980 = vshrl.u32 %v5979, 7
    %v5981 = vsub.s32 %v5978, %v5980
    %v5982 = vrot.slane %v5972, %v5981
    %v5984 = vunpack.c.l.s4 1966171168
    %v5985 = vunpack.c.0.s8 %v5984
    %v5986 = vlaneseq
    %v5987 = vshrl.u32 %v5986, 7
    %v5988 = vsub.s32 %v5985, %v5987
    %v5989 = vrot.slane %v5973, %v5988
    %v5991 = vunpack.c.l.s4 1966171168
    %v5992 = vunpack.c.0.s8 %v5991
    %v5993 = vlaneseq
    %v5994 = vshrl.u32 %v5993, 7
    %v5995 = vsub.s32 %v5992, %v5994
    %v5996 = vrot.slane %v5974, %v5995
    %v5998 = vunpack.c.l.s4 1966171168
    %v5999 = vunpack.c.0.s8 %v5998
    %v6000 = vlaneseq
    %v6001 = vshrl.u32 %v6000, 7
    %v6002 = vsub.s32 %v5999, %v6001
    %v6003 = vrot.slane %v5975, %v6002
    %v6004 = vcombine.low %v5982, %v5989
    %v6005 = vcombine.low %v5996, %v6003
    %v6007 = vunpack.c.l.s4 1966171168
    %v6008 = vunpack.c.0.s8 %v6007
    %v6009 = vlaneseq
    %v6010 = vshrl.u32 %v6009, 7
    %v6011 = vsub.s32 %v6008, %v6010
    %v6012 = vrot.slane %v6004, %v6011
    %v6014 = vunpack.c.l.s4 1966171168
    %v6015 = vunpack.c.0.s8 %v6014
    %v6016 = vlaneseq
    %v6017 = vshrl.u32 %v6016, 7
    %v6018 = vsub.s32 %v6015, %v6017
    %v6019 = vrot.slane %v6005, %v6018
    %v6020 = vcombine.low %v6012, %v6019
    %v6021 = vcombine.low %v2939, %v2943
    %v6022 = vcombine.low %v2947, %v2951
    %v6023 = vcombine.low %v2955, %v2959
    %v6024 = vcombine.low %v2963, %v2967
    %v6026 = vunpack.c.l.s4 1966171168
    %v6027 = vunpack.c.0.s8 %v6026
    %v6028 = vlaneseq
    %v6029 = vshrl.u32 %v6028, 7
    %v6030 = vsub.s32 %v6027, %v6029
    %v6031 = vrot.slane %v6021, %v6030
    %v6033 = vunpack.c.l.s4 1966171168
    %v6034 = vunpack.c.0.s8 %v6033
    %v6035 = vlaneseq
    %v6036 = vshrl.u32 %v6035, 7
    %v6037 = vsub.s32 %v6034, %v6036
    %v6038 = vrot.slane %v6022, %v6037
    %v6040 = vunpack.c.l.s4 1966171168
    %v6041 = vunpack.c.0.s8 %v6040
    %v6042 = vlaneseq
    %v6043 = vshrl.u32 %v6042, 7
    %v6044 = vsub.s32 %v6041, %v6043
    %v6045 = vrot.slane %v6023, %v6044
    %v6047 = vunpack.c.l.s4 1966171168
    %v6048 = vunpack.c.0.s8 %v6047
    %v6049 = vlaneseq
    %v6050 = vshrl.u32 %v6049, 7
    %v6051 = vsub.s32 %v6048, %v6050
    %v6052 = vrot.slane %v6024, %v6051
    %v6053 = vcombine.low %v6031, %v6038
    %v6054 = vcombine.low %v6045, %v6052
    %v6056 = vunpack.c.l.s4 1966171168
    %v6057 = vunpack.c.0.s8 %v6056
    %v6058 = vlaneseq
    %v6059 = vshrl.u32 %v6058, 7
    %v6060 = vsub.s32 %v6057, %v6059
    %v6061 = vrot.slane %v6053, %v6060
    %v6063 = vunpack.c.l.s4 1966171168
    %v6064 = vunpack.c.0.s8 %v6063
    %v6065 = vlaneseq
    %v6066 = vshrl.u32 %v6065, 7
    %v6067 = vsub.s32 %v6064, %v6066
    %v6068 = vrot.slane %v6054, %v6067
    %v6069 = vcombine.low %v6061, %v6068
    %v6070 = vcombine.low %v2971, %v2975
    %v6071 = vcombine.low %v2979, %v2983
    %v6072 = vcombine.low %v2987, %v2991
    %v6073 = vcombine.low %v2995, %v2999
    %v6075 = vunpack.c.l.s4 1966171168
    %v6076 = vunpack.c.0.s8 %v6075
    %v6077 = vlaneseq
    %v6078 = vshrl.u32 %v6077, 7
    %v6079 = vsub.s32 %v6076, %v6078
    %v6080 = vrot.slane %v6070, %v6079
    %v6082 = vunpack.c.l.s4 1966171168
    %v6083 = vunpack.c.0.s8 %v6082
    %v6084 = vlaneseq
    %v6085 = vshrl.u32 %v6084, 7
    %v6086 = vsub.s32 %v6083, %v6085
    %v6087 = vrot.slane %v6071, %v6086
    %v6089 = vunpack.c.l.s4 1966171168
    %v6090 = vunpack.c.0.s8 %v6089
    %v6091 = vlaneseq
    %v6092 = vshrl.u32 %v6091, 7
    %v6093 = vsub.s32 %v6090, %v6092
    %v6094 = vrot.slane %v6072, %v6093
    %v6096 = vunpack.c.l.s4 1966171168
    %v6097 = vunpack.c.0.s8 %v6096
    %v6098 = vlaneseq
    %v6099 = vshrl.u32 %v6098, 7
    %v6100 = vsub.s32 %v6097, %v6099
    %v6101 = vrot.slane %v6073, %v6100
    %v6102 = vcombine.low %v6080, %v6087
    %v6103 = vcombine.low %v6094, %v6101
    %v6105 = vunpack.c.l.s4 1966171168
    %v6106 = vunpack.c.0.s8 %v6105
    %v6107 = vlaneseq
    %v6108 = vshrl.u32 %v6107, 7
    %v6109 = vsub.s32 %v6106, %v6108
    %v6110 = vrot.slane %v6102, %v6109
    %v6112 = vunpack.c.l.s4 1966171168
    %v6113 = vunpack.c.0.s8 %v6112
    %v6114 = vlaneseq
    %v6115 = vshrl.u32 %v6114, 7
    %v6116 = vsub.s32 %v6113, %v6115
    %v6117 = vrot.slane %v6103, %v6116
    %v6118 = vcombine.low %v6110, %v6117
    %v6119 = vcombine.low %v3003, %v3007
    %v6120 = vcombine.low %v3011, %v3015
    %v6121 = vcombine.low %v3019, %v3023
    %v6122 = vcombine.low %v3027, %v3031
    %v6124 = vunpack.c.l.s4 1966171168
    %v6125 = vunpack.c.0.s8 %v6124
    %v6126 = vlaneseq
    %v6127 = vshrl.u32 %v6126, 7
    %v6128 = vsub.s32 %v6125, %v6127
    %v6129 = vrot.slane %v6119, %v6128
    %v6131 = vunpack.c.l.s4 1966171168
    %v6132 = vunpack.c.0.s8 %v6131
    %v6133 = vlaneseq
    %v6134 = vshrl.u32 %v6133, 7
    %v6135 = vsub.s32 %v6132, %v6134
    %v6136 = vrot.slane %v6120, %v6135
    %v6138 = vunpack.c.l.s4 1966171168
    %v6139 = vunpack.c.0.s8 %v6138
    %v6140 = vlaneseq
    %v6141 = vshrl.u32 %v6140, 7
    %v6142 = vsub.s32 %v6139, %v6141
    %v6143 = vrot.slane %v6121, %v6142
    %v6145 = vunpack.c.l.s4 1966171168
    %v6146 = vunpack.c.0.s8 %v6145
    %v6147 = vlaneseq
    %v6148 = vshrl.u32 %v6147, 7
    %v6149 = vsub.s32 %v6146, %v6148
    %v6150 = vrot.slane %v6122, %v6149
    %v6151 = vcombine.low %v6129, %v6136
    %v6152 = vcombine.low %v6143, %v6150
    %v6154 = vunpack.c.l.s4 1966171168
    %v6155 = vunpack.c.0.s8 %v6154
    %v6156 = vlaneseq
    %v6157 = vshrl.u32 %v6156, 7
    %v6158 = vsub.s32 %v6155, %v6157
    %v6159 = vrot.slane %v6151, %v6158
    %v6161 = vunpack.c.l.s4 1966171168
    %v6162 = vunpack.c.0.s8 %v6161
    %v6163 = vlaneseq
    %v6164 = vshrl.u32 %v6163, 7
    %v6165 = vsub.s32 %v6162, %v6164
    %v6166 = vrot.slane %v6152, %v6165
    %v6167 = vcombine.low %v6159, %v6166
    %6168 = vset.pattern.permute.xlu0 0
    %6169 = vperm.xlu0 %6168, %v3080
    %v6170 = vpop.permute.xlu0 %6169
    %6171 = vset.pattern.permute.xlu0 0
    %6172 = vperm.xlu0 %6171, %v3129
    %v6173 = vpop.permute.xlu0 %6172
    %6174 = vset.pattern.permute.xlu0 0
    %6175 = vperm.xlu0 %6174, %v3178
    %v6176 = vpop.permute.xlu0 %6175
    %6177 = vset.pattern.permute.xlu0 0
    %6178 = vperm.xlu0 %6177, %v3227
    %v6179 = vpop.permute.xlu0 %6178
    %6180 = vset.pattern.permute.xlu0 0
    %6181 = vperm.xlu0 %6180, %v3276
    %v6182 = vpop.permute.xlu0 %6181
    %6183 = vset.pattern.permute.xlu0 0
    %6184 = vperm.xlu0 %6183, %v3325
    %v6185 = vpop.permute.xlu0 %6184
    %6186 = vset.pattern.permute.xlu0 0
    %6187 = vperm.xlu0 %6186, %v3374
    %v6188 = vpop.permute.xlu0 %6187
    %6189 = vset.pattern.permute.xlu0 0
    %6190 = vperm.xlu0 %6189, %v3423
    %v6191 = vpop.permute.xlu0 %6190
    %6192 = vset.pattern.permute.xlu0 0
    %6193 = vperm.xlu0 %6192, %v3472
    %v6194 = vpop.permute.xlu0 %6193
    %6195 = vset.pattern.permute.xlu0 0
    %6196 = vperm.xlu0 %6195, %v3521
    %v6197 = vpop.permute.xlu0 %6196
    %6198 = vset.pattern.permute.xlu0 0
    %6199 = vperm.xlu0 %6198, %v3570
    %v6200 = vpop.permute.xlu0 %6199
    %6201 = vset.pattern.permute.xlu0 0
    %6202 = vperm.xlu0 %6201, %v3619
    %v6203 = vpop.permute.xlu0 %6202
    %6204 = vset.pattern.permute.xlu0 0
    %6205 = vperm.xlu0 %6204, %v3668
    %v6206 = vpop.permute.xlu0 %6205
    %6207 = vset.pattern.permute.xlu0 0
    %6208 = vperm.xlu0 %6207, %v3717
    %v6209 = vpop.permute.xlu0 %6208
    %6210 = vset.pattern.permute.xlu0 0
    %6211 = vperm.xlu0 %6210, %v3766
    %v6212 = vpop.permute.xlu0 %6211
    %6213 = vset.pattern.permute.xlu0 0
    %6214 = vperm.xlu0 %6213, %v3815
    %v6215 = vpop.permute.xlu0 %6214
    %6216 = vset.pattern.permute.xlu0 0
    %6217 = vperm.xlu0 %6216, %v3864
    %v6218 = vpop.permute.xlu0 %6217
    %6219 = vset.pattern.permute.xlu0 0
    %6220 = vperm.xlu0 %6219, %v3913
    %v6221 = vpop.permute.xlu0 %6220
    %6222 = vset.pattern.permute.xlu0 0
    %6223 = vperm.xlu0 %6222, %v3962
    %v6224 = vpop.permute.xlu0 %6223
    %6225 = vset.pattern.permute.xlu0 0
    %6226 = vperm.xlu0 %6225, %v4011
    %v6227 = vpop.permute.xlu0 %6226
    %6228 = vset.pattern.permute.xlu0 0
    %6229 = vperm.xlu0 %6228, %v4060
    %v6230 = vpop.permute.xlu0 %6229
    %6231 = vset.pattern.permute.xlu0 0
    %6232 = vperm.xlu0 %6231, %v4109
    %v6233 = vpop.permute.xlu0 %6232
    %6234 = vset.pattern.permute.xlu0 0
    %6235 = vperm.xlu0 %6234, %v4158
    %v6236 = vpop.permute.xlu0 %6235
    %6237 = vset.pattern.permute.xlu0 0
    %6238 = vperm.xlu0 %6237, %v4207
    %v6239 = vpop.permute.xlu0 %6238
    %6240 = vset.pattern.permute.xlu0 0
    %6241 = vperm.xlu0 %6240, %v4256
    %v6242 = vpop.permute.xlu0 %6241
    %6243 = vset.pattern.permute.xlu0 0
    %6244 = vperm.xlu0 %6243, %v4305
    %v6245 = vpop.permute.xlu0 %6244
    %6246 = vset.pattern.permute.xlu0 0
    %6247 = vperm.xlu0 %6246, %v4354
    %v6248 = vpop.permute.xlu0 %6247
    %6249 = vset.pattern.permute.xlu0 0
    %6250 = vperm.xlu0 %6249, %v4403
    %v6251 = vpop.permute.xlu0 %6250
    %6252 = vset.pattern.permute.xlu0 0
    %6253 = vperm.xlu0 %6252, %v4452
    %v6254 = vpop.permute.xlu0 %6253
    %6255 = vset.pattern.permute.xlu0 0
    %6256 = vperm.xlu0 %6255, %v4501
    %v6257 = vpop.permute.xlu0 %6256
    %6258 = vset.pattern.permute.xlu0 0
    %6259 = vperm.xlu0 %6258, %v4550
    %v6260 = vpop.permute.xlu0 %6259
    %6261 = vset.pattern.permute.xlu0 0
    %6262 = vperm.xlu0 %6261, %v4599
    %v6263 = vpop.permute.xlu0 %6262
    %6264 = vset.pattern.permute.xlu0 0
    %6265 = vperm.xlu0 %6264, %v4648
    %v6266 = vpop.permute.xlu0 %6265
    %6267 = vset.pattern.permute.xlu0 0
    %6268 = vperm.xlu0 %6267, %v4697
    %v6269 = vpop.permute.xlu0 %6268
    %6270 = vset.pattern.permute.xlu0 0
    %6271 = vperm.xlu0 %6270, %v4746
    %v6272 = vpop.permute.xlu0 %6271
    %6273 = vset.pattern.permute.xlu0 0
    %6274 = vperm.xlu0 %6273, %v4795
    %v6275 = vpop.permute.xlu0 %6274
    %6276 = vset.pattern.permute.xlu0 0
    %6277 = vperm.xlu0 %6276, %v4844
    %v6278 = vpop.permute.xlu0 %6277
    %6279 = vset.pattern.permute.xlu0 0
    %6280 = vperm.xlu0 %6279, %v4893
    %v6281 = vpop.permute.xlu0 %6280
    %6282 = vset.pattern.permute.xlu0 0
    %6283 = vperm.xlu0 %6282, %v4942
    %v6284 = vpop.permute.xlu0 %6283
    %6285 = vset.pattern.permute.xlu0 0
    %6286 = vperm.xlu0 %6285, %v4991
    %v6287 = vpop.permute.xlu0 %6286
    %6288 = vset.pattern.permute.xlu0 0
    %6289 = vperm.xlu0 %6288, %v5040
    %v6290 = vpop.permute.xlu0 %6289
    %6291 = vset.pattern.permute.xlu0 0
    %6292 = vperm.xlu0 %6291, %v5089
    %v6293 = vpop.permute.xlu0 %6292
    %6294 = vset.pattern.permute.xlu0 0
    %6295 = vperm.xlu0 %6294, %v5138
    %v6296 = vpop.permute.xlu0 %6295
    %6297 = vset.pattern.permute.xlu0 0
    %6298 = vperm.xlu0 %6297, %v5187
    %v6299 = vpop.permute.xlu0 %6298
    %6300 = vset.pattern.permute.xlu0 0
    %6301 = vperm.xlu0 %6300, %v5236
    %v6302 = vpop.permute.xlu0 %6301
    %6303 = vset.pattern.permute.xlu0 0
    %6304 = vperm.xlu0 %6303, %v5285
    %v6305 = vpop.permute.xlu0 %6304
    %6306 = vset.pattern.permute.xlu0 0
    %6307 = vperm.xlu0 %6306, %v5334
    %v6308 = vpop.permute.xlu0 %6307
    %6309 = vset.pattern.permute.xlu0 0
    %6310 = vperm.xlu0 %6309, %v5383
    %v6311 = vpop.permute.xlu0 %6310
    %6312 = vset.pattern.permute.xlu0 0
    %6313 = vperm.xlu0 %6312, %v5432
    %v6314 = vpop.permute.xlu0 %6313
    %6315 = vset.pattern.permute.xlu0 0
    %6316 = vperm.xlu0 %6315, %v5481
    %v6317 = vpop.permute.xlu0 %6316
    %6318 = vset.pattern.permute.xlu0 0
    %6319 = vperm.xlu0 %6318, %v5530
    %v6320 = vpop.permute.xlu0 %6319
    %6321 = vset.pattern.permute.xlu0 0
    %6322 = vperm.xlu0 %6321, %v5579
    %v6323 = vpop.permute.xlu0 %6322
    %6324 = vset.pattern.permute.xlu0 0
    %6325 = vperm.xlu0 %6324, %v5628
    %v6326 = vpop.permute.xlu0 %6325
    %6327 = vset.pattern.permute.xlu0 0
    %6328 = vperm.xlu0 %6327, %v5677
    %v6329 = vpop.permute.xlu0 %6328
    %6330 = vset.pattern.permute.xlu0 0
    %6331 = vperm.xlu0 %6330, %v5726
    %v6332 = vpop.permute.xlu0 %6331
    %6333 = vset.pattern.permute.xlu0 0
    %6334 = vperm.xlu0 %6333, %v5775
    %v6335 = vpop.permute.xlu0 %6334
    %6336 = vset.pattern.permute.xlu0 0
    %6337 = vperm.xlu0 %6336, %v5824
    %v6338 = vpop.permute.xlu0 %6337
    %6339 = vset.pattern.permute.xlu0 0
    %6340 = vperm.xlu0 %6339, %v5873
    %v6341 = vpop.permute.xlu0 %6340
    %6342 = vset.pattern.permute.xlu0 0
    %6343 = vperm.xlu0 %6342, %v5922
    %v6344 = vpop.permute.xlu0 %6343
    %6345 = vset.pattern.permute.xlu0 0
    %6346 = vperm.xlu0 %6345, %v5971
    %v6347 = vpop.permute.xlu0 %6346
    %6348 = vset.pattern.permute.xlu0 0
    %6349 = vperm.xlu0 %6348, %v6020
    %v6350 = vpop.permute.xlu0 %6349
    %6351 = vset.pattern.permute.xlu0 0
    %6352 = vperm.xlu0 %6351, %v6069
    %v6353 = vpop.permute.xlu0 %6352
    %6354 = vset.pattern.permute.xlu0 0
    %6355 = vperm.xlu0 %6354, %v6118
    %v6356 = vpop.permute.xlu0 %6355
    %6357 = vset.pattern.permute.xlu0 0
    %6358 = vperm.xlu0 %6357, %v6167
    %v6359 = vpop.permute.xlu0 %6358
    %v6360 = vlaneseq
    %v6361 = vand.u32 %v6360, 127
    %v6362 = vlaneseq
    %v6363 = vshrl.u32 %v6362, 7
    %v6364 = vsub.s32 %v6361, %v6363
    %v6365 = vrot.slane %v6170, %v6364
    %v6366 = vadd.s32 %v6361, 4294967288
    %v6367 = vlaneseq
    %v6368 = vshrl.u32 %v6367, 7
    %v6369 = vsub.s32 %v6366, %v6368
    %v6370 = vrot.slane %v6173, %v6369
    %vm6371 = vcmask 130112
    %v6372 = vsel %vm6371, %v6370, %v6365
    %v6373 = vadd.s32 %v6361, 4294967280
    %v6374 = vlaneseq
    %v6375 = vshrl.u32 %v6374, 7
    %v6376 = vsub.s32 %v6373, %v6375
    %v6377 = vrot.slane %v6176, %v6376
    %vm6378 = vcmask 195712
    %v6379 = vsel %vm6378, %v6377, %v6372
    %v6380 = vadd.s32 %v6361, 4294967272
    %v6381 = vlaneseq
    %v6382 = vshrl.u32 %v6381, 7
    %v6383 = vsub.s32 %v6380, %v6382
    %v6384 = vrot.slane %v6179, %v6383
    %vm6385 = vcmask 261312
    %v6386 = vsel %vm6385, %v6384, %v6379
    %v6387 = vadd.s32 %v6361, 4294967264
    %v6388 = vlaneseq
    %v6389 = vshrl.u32 %v6388, 7
    %v6390 = vsub.s32 %v6387, %v6389
    %v6391 = vrot.slane %v6182, %v6390
    %vm6392 = vcmask 326912
    %v6393 = vsel %vm6392, %v6391, %v6386
    %v6394 = vadd.s32 %v6361, 4294967256
    %v6395 = vlaneseq
    %v6396 = vshrl.u32 %v6395, 7
    %v6397 = vsub.s32 %v6394, %v6396
    %v6398 = vrot.slane %v6185, %v6397
    %vm6399 = vcmask 392512
    %v6400 = vsel %vm6399, %v6398, %v6393
    %v6401 = vadd.s32 %v6361, 4294967248
    %v6402 = vlaneseq
    %v6403 = vshrl.u32 %v6402, 7
    %v6404 = vsub.s32 %v6401, %v6403
    %v6405 = vrot.slane %v6188, %v6404
    %vm6406 = vcmask 458112
    %v6407 = vsel %vm6406, %v6405, %v6400
    %v6408 = vadd.s32 %v6361, 4294967240
    %v6409 = vlaneseq
    %v6410 = vshrl.u32 %v6409, 7
    %v6411 = vsub.s32 %v6408, %v6410
    %v6412 = vrot.slane %v6191, %v6411
    %vm6413 = vcmask 523712
    %v6414 = vsel %vm6413, %v6412, %v6407
    %v6415 = vadd.s32 %v6361, 4294967232
    %v6416 = vlaneseq
    %v6417 = vshrl.u32 %v6416, 7
    %v6418 = vsub.s32 %v6415, %v6417
    %v6419 = vrot.slane %v6194, %v6418
    %vm6420 = vcmask 589312
    %v6421 = vsel %vm6420, %v6419, %v6414
    %v6422 = vadd.s32 %v6361, 4294967224
    %v6423 = vlaneseq
    %v6424 = vshrl.u32 %v6423, 7
    %v6425 = vsub.s32 %v6422, %v6424
    %v6426 = vrot.slane %v6197, %v6425
    %vm6427 = vcmask 654912
    %v6428 = vsel %vm6427, %v6426, %v6421
    %v6429 = vadd.s32 %v6361, 4294967216
    %v6430 = vlaneseq
    %v6431 = vshrl.u32 %v6430, 7
    %v6432 = vsub.s32 %v6429, %v6431
    %v6433 = vrot.slane %v6200, %v6432
    %vm6434 = vcmask 720512
    %v6435 = vsel %vm6434, %v6433, %v6428
    %v6436 = vadd.s32 %v6361, 4294967208
    %v6437 = vlaneseq
    %v6438 = vshrl.u32 %v6437, 7
    %v6439 = vsub.s32 %v6436, %v6438
    %v6440 = vrot.slane %v6203, %v6439
    %vm6441 = vcmask 786112
    %v6442 = vsel %vm6441, %v6440, %v6435
    %v6443 = vadd.s32 %v6361, 4294967200
    %v6444 = vlaneseq
    %v6445 = vshrl.u32 %v6444, 7
    %v6446 = vsub.s32 %v6443, %v6445
    %v6447 = vrot.slane %v6206, %v6446
    %vm6448 = vcmask 851712
    %v6449 = vsel %vm6448, %v6447, %v6442
    %v6450 = vadd.s32 %v6361, 4294967192
    %v6451 = vlaneseq
    %v6452 = vshrl.u32 %v6451, 7
    %v6453 = vsub.s32 %v6450, %v6452
    %v6454 = vrot.slane %v6209, %v6453
    %vm6455 = vcmask 917312
    %v6456 = vsel %vm6455, %v6454, %v6449
    %v6457 = vadd.s32 %v6361, 4294967184
    %v6458 = vlaneseq
    %v6459 = vshrl.u32 %v6458, 7
    %v6460 = vsub.s32 %v6457, %v6459
    %v6461 = vrot.slane %v6212, %v6460
    %vm6462 = vcmask 982912
    %v6463 = vsel %vm6462, %v6461, %v6456
    %v6464 = vadd.s32 %v6361, 4294967176
    %v6465 = vlaneseq
    %v6466 = vshrl.u32 %v6465, 7
    %v6467 = vsub.s32 %v6464, %v6466
    %v6468 = vrot.slane %v6215, %v6467
    %vm6469 = vcmask 1048512
    %v6470 = vsel %vm6469, %v6468, %v6463
    %v6471 = vlaneseq
    %v6472 = vshrl.u32 %v6471, 7
    %v6473 = vsub.s32 %v6361, %v6472
    %v6474 = vrot.slane %v6218, %v6473
    %v6475 = vlaneseq
    %v6476 = vshrl.u32 %v6475, 7
    %v6477 = vsub.s32 %v6366, %v6476
    %v6478 = vrot.slane %v6221, %v6477
    %v6479 = vsel %vm6371, %v6478, %v6474
    %v6480 = vlaneseq
    %v6481 = vshrl.u32 %v6480, 7
    %v6482 = vsub.s32 %v6373, %v6481
    %v6483 = vrot.slane %v6224, %v6482
    %v6484 = vsel %vm6378, %v6483, %v6479
    %v6485 = vlaneseq
    %v6486 = vshrl.u32 %v6485, 7
    %v6487 = vsub.s32 %v6380, %v6486
    %v6488 = vrot.slane %v6227, %v6487
    %v6489 = vsel %vm6385, %v6488, %v6484
    %v6490 = vlaneseq
    %v6491 = vshrl.u32 %v6490, 7
    %v6492 = vsub.s32 %v6387, %v6491
    %v6493 = vrot.slane %v6230, %v6492
    %v6494 = vsel %vm6392, %v6493, %v6489
    %v6495 = vlaneseq
    %v6496 = vshrl.u32 %v6495, 7
    %v6497 = vsub.s32 %v6394, %v6496
    %v6498 = vrot.slane %v6233, %v6497
    %v6499 = vsel %vm6399, %v6498, %v6494
    %v6500 = vlaneseq
    %v6501 = vshrl.u32 %v6500, 7
    %v6502 = vsub.s32 %v6401, %v6501
    %v6503 = vrot.slane %v6236, %v6502
    %v6504 = vsel %vm6406, %v6503, %v6499
    %v6505 = vlaneseq
    %v6506 = vshrl.u32 %v6505, 7
    %v6507 = vsub.s32 %v6408, %v6506
    %v6508 = vrot.slane %v6239, %v6507
    %v6509 = vsel %vm6413, %v6508, %v6504
    %v6510 = vlaneseq
    %v6511 = vshrl.u32 %v6510, 7
    %v6512 = vsub.s32 %v6415, %v6511
    %v6513 = vrot.slane %v6242, %v6512
    %v6514 = vsel %vm6420, %v6513, %v6509
    %v6515 = vlaneseq
    %v6516 = vshrl.u32 %v6515, 7
    %v6517 = vsub.s32 %v6422, %v6516
    %v6518 = vrot.slane %v6245, %v6517
    %v6519 = vsel %vm6427, %v6518, %v6514
    %v6520 = vlaneseq
    %v6521 = vshrl.u32 %v6520, 7
    %v6522 = vsub.s32 %v6429, %v6521
    %v6523 = vrot.slane %v6248, %v6522
    %v6524 = vsel %vm6434, %v6523, %v6519
    %v6525 = vlaneseq
    %v6526 = vshrl.u32 %v6525, 7
    %v6527 = vsub.s32 %v6436, %v6526
    %v6528 = vrot.slane %v6251, %v6527
    %v6529 = vsel %vm6441, %v6528, %v6524
    %v6530 = vlaneseq
    %v6531 = vshrl.u32 %v6530, 7
    %v6532 = vsub.s32 %v6443, %v6531
    %v6533 = vrot.slane %v6254, %v6532
    %v6534 = vsel %vm6448, %v6533, %v6529
    %v6535 = vlaneseq
    %v6536 = vshrl.u32 %v6535, 7
    %v6537 = vsub.s32 %v6450, %v6536
    %v6538 = vrot.slane %v6257, %v6537
    %v6539 = vsel %vm6455, %v6538, %v6534
    %v6540 = vlaneseq
    %v6541 = vshrl.u32 %v6540, 7
    %v6542 = vsub.s32 %v6457, %v6541
    %v6543 = vrot.slane %v6260, %v6542
    %v6544 = vsel %vm6462, %v6543, %v6539
    %v6545 = vlaneseq
    %v6546 = vshrl.u32 %v6545, 7
    %v6547 = vsub.s32 %v6464, %v6546
    %v6548 = vrot.slane %v6263, %v6547
    %v6549 = vsel %vm6469, %v6548, %v6544
    %v6550 = vlaneseq
    %v6551 = vshrl.u32 %v6550, 7
    %v6552 = vsub.s32 %v6361, %v6551
    %v6553 = vrot.slane %v6266, %v6552
    %v6554 = vlaneseq
    %v6555 = vshrl.u32 %v6554, 7
    %v6556 = vsub.s32 %v6366, %v6555
    %v6557 = vrot.slane %v6269, %v6556
    %v6558 = vsel %vm6371, %v6557, %v6553
    %v6559 = vlaneseq
    %v6560 = vshrl.u32 %v6559, 7
    %v6561 = vsub.s32 %v6373, %v6560
    %v6562 = vrot.slane %v6272, %v6561
    %v6563 = vsel %vm6378, %v6562, %v6558
    %v6564 = vlaneseq
    %v6565 = vshrl.u32 %v6564, 7
    %v6566 = vsub.s32 %v6380, %v6565
    %v6567 = vrot.slane %v6275, %v6566
    %v6568 = vsel %vm6385, %v6567, %v6563
    %v6569 = vlaneseq
    %v6570 = vshrl.u32 %v6569, 7
    %v6571 = vsub.s32 %v6387, %v6570
    %v6572 = vrot.slane %v6278, %v6571
    %v6573 = vsel %vm6392, %v6572, %v6568
    %v6574 = vlaneseq
    %v6575 = vshrl.u32 %v6574, 7
    %v6576 = vsub.s32 %v6394, %v6575
    %v6577 = vrot.slane %v6281, %v6576
    %v6578 = vsel %vm6399, %v6577, %v6573
    %v6579 = vlaneseq
    %v6580 = vshrl.u32 %v6579, 7
    %v6581 = vsub.s32 %v6401, %v6580
    %v6582 = vrot.slane %v6284, %v6581
    %v6583 = vsel %vm6406, %v6582, %v6578
    %v6584 = vlaneseq
    %v6585 = vshrl.u32 %v6584, 7
    %v6586 = vsub.s32 %v6408, %v6585
    %v6587 = vrot.slane %v6287, %v6586
    %v6588 = vsel %vm6413, %v6587, %v6583
    %v6589 = vlaneseq
    %v6590 = vshrl.u32 %v6589, 7
    %v6591 = vsub.s32 %v6415, %v6590
    %v6592 = vrot.slane %v6290, %v6591
    %v6593 = vsel %vm6420, %v6592, %v6588
    %v6594 = vlaneseq
    %v6595 = vshrl.u32 %v6594, 7
    %v6596 = vsub.s32 %v6422, %v6595
    %v6597 = vrot.slane %v6293, %v6596
    %v6598 = vsel %vm6427, %v6597, %v6593
    %v6599 = vlaneseq
    %v6600 = vshrl.u32 %v6599, 7
    %v6601 = vsub.s32 %v6429, %v6600
    %v6602 = vrot.slane %v6296, %v6601
    %v6603 = vsel %vm6434, %v6602, %v6598
    %v6604 = vlaneseq
    %v6605 = vshrl.u32 %v6604, 7
    %v6606 = vsub.s32 %v6436, %v6605
    %v6607 = vrot.slane %v6299, %v6606
    %v6608 = vsel %vm6441, %v6607, %v6603
    %v6609 = vlaneseq
    %v6610 = vshrl.u32 %v6609, 7
    %v6611 = vsub.s32 %v6443, %v6610
    %v6612 = vrot.slane %v6302, %v6611
    %v6613 = vsel %vm6448, %v6612, %v6608
    %v6614 = vlaneseq
    %v6615 = vshrl.u32 %v6614, 7
    %v6616 = vsub.s32 %v6450, %v6615
    %v6617 = vrot.slane %v6305, %v6616
    %v6618 = vsel %vm6455, %v6617, %v6613
    %v6619 = vlaneseq
    %v6620 = vshrl.u32 %v6619, 7
    %v6621 = vsub.s32 %v6457, %v6620
    %v6622 = vrot.slane %v6308, %v6621
    %v6623 = vsel %vm6462, %v6622, %v6618
    %v6624 = vlaneseq
    %v6625 = vshrl.u32 %v6624, 7
    %v6626 = vsub.s32 %v6464, %v6625
    %v6627 = vrot.slane %v6311, %v6626
    %v6628 = vsel %vm6469, %v6627, %v6623
    %v6629 = vlaneseq
    %v6630 = vshrl.u32 %v6629, 7
    %v6631 = vsub.s32 %v6361, %v6630
    %v6632 = vrot.slane %v6314, %v6631
    %v6633 = vlaneseq
    %v6634 = vshrl.u32 %v6633, 7
    %v6635 = vsub.s32 %v6366, %v6634
    %v6636 = vrot.slane %v6317, %v6635
    %v6637 = vsel %vm6371, %v6636, %v6632
    %v6638 = vlaneseq
    %v6639 = vshrl.u32 %v6638, 7
    %v6640 = vsub.s32 %v6373, %v6639
    %v6641 = vrot.slane %v6320, %v6640
    %v6642 = vsel %vm6378, %v6641, %v6637
    %v6643 = vlaneseq
    %v6644 = vshrl.u32 %v6643, 7
    %v6645 = vsub.s32 %v6380, %v6644
    %v6646 = vrot.slane %v6323, %v6645
    %v6647 = vsel %vm6385, %v6646, %v6642
    %v6648 = vlaneseq
    %v6649 = vshrl.u32 %v6648, 7
    %v6650 = vsub.s32 %v6387, %v6649
    %v6651 = vrot.slane %v6326, %v6650
    %v6652 = vsel %vm6392, %v6651, %v6647
    %v6653 = vlaneseq
    %v6654 = vshrl.u32 %v6653, 7
    %v6655 = vsub.s32 %v6394, %v6654
    %v6656 = vrot.slane %v6329, %v6655
    %v6657 = vsel %vm6399, %v6656, %v6652
    %v6658 = vlaneseq
    %v6659 = vshrl.u32 %v6658, 7
    %v6660 = vsub.s32 %v6401, %v6659
    %v6661 = vrot.slane %v6332, %v6660
    %v6662 = vsel %vm6406, %v6661, %v6657
    %v6663 = vlaneseq
    %v6664 = vshrl.u32 %v6663, 7
    %v6665 = vsub.s32 %v6408, %v6664
    %v6666 = vrot.slane %v6335, %v6665
    %v6667 = vsel %vm6413, %v6666, %v6662
    %v6668 = vlaneseq
    %v6669 = vshrl.u32 %v6668, 7
    %v6670 = vsub.s32 %v6415, %v6669
    %v6671 = vrot.slane %v6338, %v6670
    %v6672 = vsel %vm6420, %v6671, %v6667
    %v6673 = vlaneseq
    %v6674 = vshrl.u32 %v6673, 7
    %v6675 = vsub.s32 %v6422, %v6674
    %v6676 = vrot.slane %v6341, %v6675
    %v6677 = vsel %vm6427, %v6676, %v6672
    %v6678 = vlaneseq
    %v6679 = vshrl.u32 %v6678, 7
    %v6680 = vsub.s32 %v6429, %v6679
    %v6681 = vrot.slane %v6344, %v6680
    %v6682 = vsel %vm6434, %v6681, %v6677
    %v6683 = vlaneseq
    %v6684 = vshrl.u32 %v6683, 7
    %v6685 = vsub.s32 %v6436, %v6684
    %v6686 = vrot.slane %v6347, %v6685
    %v6687 = vsel %vm6441, %v6686, %v6682
    %v6688 = vlaneseq
    %v6689 = vshrl.u32 %v6688, 7
    %v6690 = vsub.s32 %v6443, %v6689
    %v6691 = vrot.slane %v6350, %v6690
    %v6692 = vsel %vm6448, %v6691, %v6687
    %v6693 = vlaneseq
    %v6694 = vshrl.u32 %v6693, 7
    %v6695 = vsub.s32 %v6450, %v6694
    %v6696 = vrot.slane %v6353, %v6695
    %v6697 = vsel %vm6455, %v6696, %v6692
    %v6698 = vlaneseq
    %v6699 = vshrl.u32 %v6698, 7
    %v6700 = vsub.s32 %v6457, %v6699
    %v6701 = vrot.slane %v6356, %v6700
    %v6702 = vsel %vm6462, %v6701, %v6697
    %v6703 = vlaneseq
    %v6704 = vshrl.u32 %v6703, 7
    %v6705 = vsub.s32 %v6464, %v6704
    %v6706 = vrot.slane %v6359, %v6705
    %v6707 = vsel %vm6469, %v6706, %v6702
    %v6708 = vcombine.low %v6470, %v6549
    %v6709 = vcombine.low %v6628, %v6707
    %v6711 = vunpack.c.l.s4 1966171168
    %v6712 = vunpack.c.0.s8 %v6711
    %v6713 = vlaneseq
    %v6714 = vshrl.u32 %v6713, 7
    %v6715 = vsub.s32 %v6712, %v6714
    %v6716 = vrot.slane %v6708, %v6715
    %v6718 = vunpack.c.l.s4 1966171168
    %v6719 = vunpack.c.0.s8 %v6718
    %v6720 = vlaneseq
    %v6721 = vshrl.u32 %v6720, 7
    %v6722 = vsub.s32 %v6719, %v6721
    %v6723 = vrot.slane %v6709, %v6722
    %v6724 = vcombine.low %v6716, %v6723
    %v6726 = vunpack.c.l.s4 1966171168
    %v6727 = vunpack.c.0.s8 %v6726
    %v6728 = vlaneseq
    %v6729 = vshrl.u32 %v6728, 7
    %v6730 = vsub.s32 %v6727, %v6729
    %v6731 = vrot.slane %v6724, %v6730
    %s6733 = smul.u32 0, 4
    %s6734 = scalar_lea.vmem [#allocation2], %s6733
    %6735 = vst.msk [vmem:[%s6734] sm:$0xf] %vm598, %v6731
    // Predicated region
    $region14: #{tpu_custom_call.1} parent=1 // pred_check
      %p6736 = pneg %p23
    $region15: #{tpu_custom_call.1} parent=1 // pred_check_branch
      %6738 = sbr.rel (%p6736) target = $region17
    $region16: #{tpu_custom_call.1} parent=1 // pred_region
      %v6739 = vld [vmem:[#allocation2] sm:$0xf]
      %v6740 = vld [vmem:[#allocation3] sm:$0xf]
      %v6741 = vsub.f32 %v6739, %v6740
      %v6742 = vand.u32 2147483647, %v6741
      %v6744 = vlaneseq
      %v6745 = vshrl.u32 %v6744, 7
      %v6746 = vsub.s32 0, %v6745
      %v6747 = vrot.slane %v6742, %v6746
      %v6748 = vlaneseq
      %v6749 = vshrl.u32 %v6748, 7
      %v6750 = vsub.s32 1, %v6749
      %v6751 = vrot.slane %v6742, %v6750
      %v6752 = vlaneseq
      %v6753 = vshrl.u32 %v6752, 7
      %v6754 = vsub.s32 2, %v6753
      %v6755 = vrot.slane %v6742, %v6754
      %v6756 = vlaneseq
      %v6757 = vshrl.u32 %v6756, 7
      %v6758 = vsub.s32 3, %v6757
      %v6759 = vrot.slane %v6742, %v6758
      %vm6764 = vcmask 1040384
      %v6765 = vsel %vm6764, %v6747, 0.0
      %v6766 = vsel %vm6764, %v6751, 0.0
      %v6767 = vadd.f32 %v6765, %v6766
      %v6768 = vsel %vm6764, %v6755, 0.0
      %v6769 = vadd.f32 %v6767, %v6768
      %v6770 = vsel %vm6764, %v6759, 0.0
      %v6771 = vadd.f32 %v6769, %v6770
      %6772 = vadd.xlane.f32.xlu0 %v6771
      %v6773 = vpop.xlane.xlu0 %6772
      %v6774 = vrot.slane %v6773, 4
      %v6775 = vadd.f32 %v6773, %v6774
      %v6776 = vrot.slane %v6775, 2
      %v6777 = vadd.f32 %v6775, %v6776
      %v6778 = vrot.slane %v6777, 1
      %v6779 = vadd.f32 %v6777, %v6778
      %s6780 = vtos %v6779
      %s6781 = scalar_lea.smem [#allocation7], 0
      %6782 = sst [smem:[%s6781]] %s6780
    $region17: #{tpu_custom_call.1} parent=1 // pred_fallthru
      _
    // Predicated region
    $region18: #{tpu_custom_call.1} parent=1 // pred_check
      _
    $region19: #{tpu_custom_call.1} parent=1 // pred_check_branch
      %6784 = sbr.rel (0) target = $region21
    $region20: #{tpu_custom_call.1} parent=1 // pred_region
      %s6786 = ssub.s32 16, 16
      %6787 = vsyncadd [#allocation6], %s6786
      %6790 = dma.smem_to_hbm [#allocation7], 16, %s1, [#allocation6]
    $region21: #{tpu_custom_call.1} parent=1 // pred_fallthru
      _
    // Predicated region
    $region22: #{tpu_custom_call.1} parent=1 // pred_check
      _
    $region23: #{tpu_custom_call.1} parent=1 // pred_check_branch
      %6792 = sbr.rel (0) target = $region25
    $region24: #{tpu_custom_call.1} parent=1 // pred_region
      %6793 = dma.done [#allocation6], 16
    $region25: #{tpu_custom_call.1} parent=1 // pred_fallthru
      _
    %6794 = sfence
    %6795 = vsyncpa [#allocation5], 1
    %6796 = vsyncpa [#allocation6], 1

</llo_original>
